<compile_context>
chip_gen: v7x
topology: tpu7x:2x2x1
jax: 0.10.0
libtpu: 0.0.40
codegen_flags: <defaults>
</compile_context>

<pallas_src>
import math
import functools

import numpy as np
import jax
import jax.numpy as jnp
from jax.experimental import pallas as pl
from jax.experimental.pallas import tpu as pltpu


def _round_up(x, m):
    return ((x + m - 1) // m) * m


# ---------------------------------------------------------------------------
# Pallas kernels
# ---------------------------------------------------------------------------

def _linear_kernel(x_ref, w_ref, b_ref, o_ref, *, relu):
    """o = [relu](x @ w + b) for one (tm, tn) output tile; full K per block."""
    acc = jnp.dot(x_ref[...], w_ref[...], preferred_element_type=jnp.float32)
    acc = acc + b_ref[...]                      # (1, tn) broadcasts over rows
    if relu:
        acc = jnp.maximum(acc, 0.0)
    o_ref[...] = acc.astype(o_ref.dtype)


def linear_pallas(x, w, b, relu=False, compute_dtype=jnp.float32):
    """o = [relu](x @ w + b);  x:(M,K)  w:(K,N)  b:(1,N)  ->  (M,N) float32.

    Tiled over M and N.  N is zero-padded to a multiple of 128 so output tiles
    are lane-dense; M is padded to a multiple of 8 sublanes and the M tile.
    K (max 3136 here) stays whole per block: the largest double-buffered
    working set is ~3.5 MiB, well inside every chip's default scoped VMEM.
    """
    M, K = x.shape
    Kw, N = w.shape
    assert Kw == K and b.shape == (1, N)

    N_pad = _round_up(N, 128)
    tn = 256 if (N_pad % 256 == 0) else 128
    M8 = _round_up(M, 8)
    tm = M8 if M8 <= 512 else 256
    M_pad = _round_up(M, tm)

    if M_pad != M:
        x = jnp.pad(x, ((0, M_pad - M), (0, 0)))
    if N_pad != N:
        w = jnp.pad(w, ((0, 0), (0, N_pad - N)))
        b = jnp.pad(b, ((0, 0), (0, N_pad - N)))

    x = x.astype(compute_dtype)
    w = w.astype(compute_dtype)
    b = b.astype(jnp.float32)                   # bias added to the f32 accumulator

    grid = (M_pad // tm, N_pad // tn)
    kernel = functools.partial(_linear_kernel, relu=relu)
    out = pl.pallas_call(
        kernel,
        out_shape=jax.ShapeDtypeStruct((M_pad, N_pad), jnp.float32),
        grid_spec=pltpu.PrefetchScalarGridSpec(
            num_scalar_prefetch=0,
            grid=grid,
            in_specs=[
                pl.BlockSpec((tm, K), lambda i, j: (i, 0)),
                pl.BlockSpec((K, tn), lambda i, j: (0, j)),
                pl.BlockSpec((1, tn), lambda i, j: (0, j)),
            ],
            out_specs=pl.BlockSpec((tm, tn), lambda i, j: (i, j)),
        ),
        compiler_params=pltpu.CompilerParams(
            dimension_semantics=("parallel", "parallel")),
    )(x, w, b)

    if M_pad != M or N_pad != N:
        out = out[:M, :N]
    return out


_NEG = -1e9   # pad value for the atoms axis: exp() underflows to exactly 0


def _dueling_softmax_kernel(v_ref, a_ref, q_ref, *, log):
    v = v_ref[...]                               # (B, 1, AT)  AT = padded atoms
    a = a_ref[...]                               # (B, A, AT)
    q = v + a - jnp.mean(a, axis=1, keepdims=True)
    m = jnp.max(q, axis=2, keepdims=True)
    e = jnp.exp(q - m)
    s = jnp.sum(e, axis=2, keepdims=True)
    if log:
        q_ref[...] = (q - m) - jnp.log(s)
    else:
        q_ref[...] = e * pl.reciprocal(s, approx=True)   # divide goes to the EUP


def dueling_softmax_pallas(v, a, log=False):
    """v:(B,1,atoms), a:(B,A,atoms) -> (B,A,atoms) softmax/log_softmax over atoms."""
    B, A, atoms = a.shape
    AT = _round_up(atoms, 128)                   # lane-dense atoms axis
    pad = AT - atoms
    if pad:
        v = jnp.pad(v, ((0, 0), (0, 0), (0, pad)), constant_values=_NEG)
        a = jnp.pad(a, ((0, 0), (0, 0), (0, pad)), constant_values=_NEG)
    kernel = functools.partial(_dueling_softmax_kernel, log=log)
    out = pl.pallas_call(
        kernel,
        out_shape=jax.ShapeDtypeStruct((B, A, AT), jnp.float32),
        grid=(1,),
        in_specs=[
            pl.BlockSpec((B, 1, AT), lambda i: (0, 0, 0)),
            pl.BlockSpec((B, A, AT), lambda i: (0, 0, 0)),
        ],
        out_specs=pl.BlockSpec((B, A, AT), lambda i: (0, 0, 0)),
    )(v, a)
    return out[:, :, :atoms] if pad else out


# ---------------------------------------------------------------------------
# Glue: NHWC im2col (strided slicing only; stays NHWC — no layout ping-pong)
# ---------------------------------------------------------------------------
# TODO(synk): fold patch extraction into the matmul kernel (strided pl.ds reads
# from a VMEM-resident padded input tile) to avoid materializing the kh*kw
# replicated patch tensor in HBM.

def im2col_nhwc(x, kh, kw, stride, padding):
    B, H, W, C = x.shape
    if padding > 0:
        x = jnp.pad(x, ((0, 0), (padding, padding), (padding, padding), (0, 0)))
    Hp, Wp = H + 2 * padding, W + 2 * padding
    OH = (Hp - kh) // stride + 1
    OW = (Wp - kw) // stride + 1
    cols = []
    for i in range(kh):
        for j in range(kw):
            cols.append(x[:, i:i + stride * OH:stride, j:j + stride * OW:stride, :])
    patches = jnp.stack(cols, axis=3)            # (B, OH, OW, kh*kw, C) -> (kh,kw,c) order
    patches = patches.reshape(B * OH * OW, kh * kw * C)
    return patches, OH, OW


def conv2d_relu_nhwc(x, wmat, b, k, stride, padding, compute_dtype):
    """x NHWC; wmat:(k*k*C, OC) with (kh, kw, c) row order; b:(1, OC)."""
    B = x.shape[0]
    patches, OH, OW = im2col_nhwc(x, k, k, stride, padding)
    out = linear_pallas(patches, wmat, b, relu=True, compute_dtype=compute_dtype)
    OC = wmat.shape[1]
    return out.reshape(B, OH, OW, OC)            # stays NHWC


# ---------------------------------------------------------------------------
# Parameter construction (PyTorch layout) and one-time repacking
# ---------------------------------------------------------------------------

def init_conv(key, oc, ic, k):
    fan_in = ic * k * k
    bound = 1.0 / math.sqrt(fan_in)
    k1, k2 = jax.random.split(key)
    w = jax.random.uniform(k1, (oc, ic, k, k), jnp.float32, -bound, bound)
    b = jax.random.uniform(k2, (oc,), jnp.float32, -bound, bound)
    return w, b


def init_noisy(key, in_f, out_f, std_init):
    """Effective (training-mode) weight (out,in) and bias (out,): mu + sigma*eps."""
    k1, k2, k3, k4 = jax.random.split(key, 4)
    mu_range = 1.0 / math.sqrt(in_f)
    w_mu = jax.random.uniform(k1, (out_f, in_f), jnp.float32, -mu_range, mu_range)
    b_mu = jax.random.uniform(k2, (out_f,), jnp.float32, -mu_range, mu_range)
    w_sigma = jnp.full((out_f, in_f), std_init / math.sqrt(in_f), jnp.float32)
    b_sigma = jnp.full((out_f,), std_init / math.sqrt(out_f), jnp.float32)

    def scale_noise(k, n):
        z = jax.random.normal(k, (n,), jnp.float32)
        return jnp.sign(z) * jnp.sqrt(jnp.abs(z))

    eps_in = scale_noise(k3, in_f)
    eps_out = scale_noise(k4, out_f)
    return w_mu + w_sigma * jnp.outer(eps_out, eps_in), b_mu + b_sigma * eps_out


def init_dqn_params(key, action_space, atoms, history_length, hidden_size, noisy_std):
    keys = jax.random.split(key, 7)
    p = {}
    p['conv1_w'], p['conv1_b'] = init_conv(keys[0], 32, history_length, 8)
    p['conv2_w'], p['conv2_b'] = init_conv(keys[1], 64, 32, 4)
    p['conv3_w'], p['conv3_b'] = init_conv(keys[2], 64, 64, 3)
    p['fc_h_v_w'], p['fc_h_v_b'] = init_noisy(keys[3], 3136, hidden_size, noisy_std)
    p['fc_h_a_w'], p['fc_h_a_b'] = init_noisy(keys[4], 3136, hidden_size, noisy_std)
    p['fc_z_v_w'], p['fc_z_v_b'] = init_noisy(keys[5], hidden_size, atoms, noisy_std)
    p['fc_z_a_w'], p['fc_z_a_b'] = init_noisy(keys[6], hidden_size, action_space * atoms, noisy_std)
    return p


def _conv_out(h, k, s, p):
    return (h + 2 * p - k) // s + 1


def prepare_params(raw, *, action_space, atoms, hidden_size, in_hw=84):
    """One-time conversion of PyTorch-layout params into kernel layout:
    conv weights -> (k*k*C, OC) matmul matrices in (kh,kw,c) row order,
    fc weights pre-transposed to (in,out), biases reshaped to (1,N),
    fc_h heads fused along N, fc_z heads fused as a block-diagonal weight,
    fc_h rows permuted from NCHW-flatten order to NHWC-flatten order."""
    prep = {}
    for name in ('conv1', 'conv2', 'conv3'):
        w = raw[name + '_w']                     # (OC, C, KH, KW)
        OC, C, KH, KW = w.shape
        prep[name + '_w'] = jnp.transpose(w, (2, 3, 1, 0)).reshape(KH * KW * C, OC)
        prep[name + '_b'] = raw[name + '_b'].reshape(1, -1)

    # NHWC flatten position (h,w,c) -> PyTorch NCHW flatten index c*H*W + h*W + w
    h1 = _conv_out(in_hw, 8, 4, 1)
    h2 = _conv_out(h1, 4, 2, 0)
    h3 = _conv_out(h2, 3, 1, 0)
    C3 = raw['conv3_w'].shape[0]
    hh = np.arange(h3)[:, None, None]
    ww = np.arange(h3)[None, :, None]
    cc = np.arange(C3)[None, None, :]
    perm = (cc * (h3 * h3) + hh * h3 + ww).reshape(-1)

    w_h = jnp.concatenate([raw['fc_h_v_w'].T, raw['fc_h_a_w'].T], axis=1)  # (3136, 2H)
    prep['fc_h_w'] = w_h[perm, :]
    prep['fc_h_b'] = jnp.concatenate([raw['fc_h_v_b'], raw['fc_h_a_b']]).reshape(1, -1)

    n_z = atoms + action_space * atoms
    w_z = jnp.zeros((2 * hidden_size, n_z), jnp.float32)
    w_z = w_z.at[:hidden_size, :atoms].set(raw['fc_z_v_w'].T)
    w_z = w_z.at[hidden_size:, atoms:].set(raw['fc_z_a_w'].T)
    prep['fc_z_w'] = w_z
    prep['fc_z_b'] = jnp.concatenate([raw['fc_z_v_b'], raw['fc_z_a_b']]).reshape(1, -1)
    return prep


# ---------------------------------------------------------------------------
# Forward pass (Pallas) and pure-JAX reference
# ---------------------------------------------------------------------------

def dqn_forward(x, prep, *, action_space, atoms, log=False,
                compute_dtype=jnp.float32):
    """x: (B, history_length, 84, 84) float32 (NCHW, PyTorch convention)."""
    B = x.shape[0]
    x = jnp.transpose(x, (0, 2, 3, 1))           # -> NHWC once; stay NHWC
    x = conv2d_relu_nhwc(x, prep['conv1_w'], prep['conv1_b'], 8, 4, 1, compute_dtype)
    x = conv2d_relu_nhwc(x, prep['conv2_w'], prep['conv2_b'], 4, 2, 0, compute_dtype)
    x = conv2d_relu_nhwc(x, prep['conv3_w'], prep['conv3_b'], 3, 1, 0, compute_dtype)
    feat = x.reshape(B, -1)                      # (B, 3136), NHWC flatten

    # fused fc_h_v | fc_h_a  (shared input -> one matmul)
    h = linear_pallas(feat, prep['fc_h_w'], prep['fc_h_b'], relu=True,
                      compute_dtype=compute_dtype)          # (B, 2*hidden)
    # fused fc_z_v | fc_z_a  (block-diagonal weight -> one matmul)
    z = linear_pallas(h, prep['fc_z_w'], prep['fc_z_b'], relu=False,
                      compute_dtype=compute_dtype)          # (B, atoms + A*atoms)

    v = z[:, :atoms].reshape(B, 1, atoms)
    a = z[:, atoms:].reshape(B, action_space, atoms)
    return dueling_softmax_pallas(v, a, log=log)


def dqn_forward_ref(x, raw, *, action_space, atoms, log=False):
    """Pure-JAX reference with PyTorch layout / semantics (validation only)."""
    def conv(x, w, b, stride, padding):
        y = jax.lax.conv_general_dilated(
            x, w, window_strides=(stride, stride),
            padding=[(padding, padding), (padding, padding)],
            dimension_numbers=('NCHW', 'OIHW', 'NCHW'))
        return jax.nn.relu(y + b[None, :, None, None])

    x = conv(x, raw['conv1_w'], raw['conv1_b'], 4, 1)
    x = conv(x, raw['conv2_w'], raw['conv2_b'], 2, 0)
    x = conv(x, raw['conv3_w'], raw['conv3_b'], 1, 0)
    B = x.shape[0]
    x = x.reshape(B, -1)
    h_v = jax.nn.relu(x @ raw['fc_h_v_w'].T + raw['fc_h_v_b'])
    h_a = jax.nn.relu(x @ raw['fc_h_a_w'].T + raw['fc_h_a_b'])
    v = (h_v @ raw['fc_z_v_w'].T + raw['fc_z_v_b']).reshape(B, 1, atoms)
    a = (h_a @ raw['fc_z_a_w'].T + raw['fc_z_a_b']).reshape(B, action_space, atoms)
    q = v + a - a.mean(axis=1, keepdims=True)
    return jax.nn.log_softmax(q, axis=2) if log else jax.nn.softmax(q, axis=2)


# ---------------------------------------------------------------------------
# Main
# ---------------------------------------------------------------------------

if __name__ == "__main__":
    action_space = 6
    atoms = 51
    history_length = 4
    hidden_size = 32          # small hidden size for the synthetic run
    noisy_std = 0.5
    batch = 2

    key = jax.random.PRNGKey(0)
    k_params, k_x = jax.random.split(key)
    raw = init_dqn_params(k_params, action_space, atoms, history_length,
                          hidden_size, noisy_std)
    prep = prepare_params(raw, action_space=action_space, atoms=atoms,
                          hidden_size=hidden_size)

    # 84x84 spatial input so the conv stack yields exactly 3136 features.
    x = jax.random.uniform(k_x, (batch, history_length, 84, 84), jnp.float32)

    fwd = jax.jit(functools.partial(dqn_forward, action_space=action_space,
                                    atoms=atoms, log=False))
    q = jax.block_until_ready(fwd(x, prep))
    assert q.shape == (batch, action_space, atoms), q.shape
    assert bool(jnp.all(jnp.abs(jnp.sum(q, axis=2) - 1.0) < 1e-2))

    # correctness vs. pure-JAX PyTorch-layout reference
    q_ref = dqn_forward_ref(x, raw, action_space=action_space, atoms=atoms, log=False)
    assert bool(jnp.max(jnp.abs(q - q_ref)) < 1e-2)

    # log_softmax path
    fwd_log = jax.jit(functools.partial(dqn_forward, action_space=action_space,
                                        atoms=atoms, log=True))
    lq = jax.block_until_ready(fwd_log(x, prep))
    assert bool(jnp.all(jnp.abs(jnp.sum(jnp.exp(lq), axis=2) - 1.0) < 1e-2))

    # bf16 matmul-input path (recommended on v6e/v7x; f32 accumulation)
    fwd_bf16 = jax.jit(functools.partial(dqn_forward, action_space=action_space,
                                         atoms=atoms, log=False,
                                         compute_dtype=jnp.bfloat16))
    qb = jax.block_until_ready(fwd_bf16(x, prep))
    assert qb.shape == (batch, action_space, atoms)
    assert bool(jnp.all(jnp.abs(jnp.sum(qb, axis=2) - 1.0) < 1e-2))

    print("KERNEL_OK")
</pallas_src>

<mosaic_0001>
module attributes {stable_mosaic.version = 11 : i64} {
  func.func @_linear_kernel(%arg0: i32, %arg1: i32, %arg2: memref<256x256xf32, #tpu.memory_space<vmem>>, %arg3: memref<256x128xf32, #tpu.memory_space<vmem>>, %arg4: memref<1x128xf32, #tpu.memory_space<vmem>>, %arg5: memref<256x128xf32, #tpu.memory_space<vmem>>) attributes {dimension_semantics = [#tpu.dimension_semantics<parallel>, #tpu.dimension_semantics<parallel>], iteration_bounds = array<i64: 4, 1>, scalar_prefetch = 0 : i64, scratch_operands = 0 : i64, tpu.core_type = #tpu.core_type<tc>, window_params = [{transform_indices = @transform_0, window_bounds = array<i64: 256, 256>}, {transform_indices = @transform_1, window_bounds = array<i64: 256, 128>}, {transform_indices = @transform_2, window_bounds = array<i64: 1, 128>}, {transform_indices = @transform_3, window_bounds = array<i64: 256, 128>}]} {
    %c0 = arith.constant 0 : index
    %c0_0 = arith.constant 0 : index
    %0 = vector.load %arg2[%c0, %c0_0] : memref<256x256xf32, #tpu.memory_space<vmem>>, vector<256x256xf32>
    %c0_1 = arith.constant 0 : index
    %c0_2 = arith.constant 0 : index
    %1 = vector.load %arg3[%c0_1, %c0_2] : memref<256x128xf32, #tpu.memory_space<vmem>>, vector<256x128xf32>
    %cst = arith.constant dense<0.000000e+00> : vector<256x128xf32>
    %2 = tpu.matmul %0, %1, %cst {dimension_numbers = #tpu.dot_dimension_numbers<[1], [0], [0], [1], [0, 0, 1, 1], [], []>} : vector<256x256xf32>, vector<256x128xf32>, vector<256x128xf32> -> vector<256x128xf32>
    %c0_3 = arith.constant 0 : index
    %c0_4 = arith.constant 0 : index
    %3 = vector.load %arg4[%c0_3, %c0_4] : memref<1x128xf32, #tpu.memory_space<vmem>>, vector<1x128xf32>
    %4 = vector.broadcast %3 : vector<1x128xf32> to vector<256x128xf32>
    %5 = arith.addf %2, %4 : vector<256x128xf32>
    %cst_5 = arith.constant 0.000000e+00 : f32
    %6 = vector.broadcast %cst_5 : f32 to vector<256x128xf32>
    %7 = arith.maximumf %5, %6 : vector<256x128xf32>
    %c0_6 = arith.constant 0 : index
    %c0_7 = arith.constant 0 : index
    %8 = vector.load %arg5[%c0_6, %c0_7] : memref<256x128xf32, #tpu.memory_space<vmem>>, vector<256x128xf32>
    tpu.vector_store %arg5[%c0_6, %c0_7], %7 {strides = array<i32>} : memref<256x128xf32, #tpu.memory_space<vmem>>, vector<256x128xf32>,
    return
  }
  func.func @transform_0(%arg0: i32, %arg1: i32) -> (i32, i32) {
    %c0_i32 = arith.constant 0 : i32
    %c0_i32_0 = arith.constant 0 : i32
    return %arg0, %c0_i32 : i32, i32
  }
  func.func @transform_1(%arg0: i32, %arg1: i32) -> (i32, i32) {
    %c0_i32 = arith.constant 0 : i32
    %c0_i32_0 = arith.constant 0 : i32
    return %c0_i32, %arg1 : i32, i32
  }
  func.func @transform_2(%arg0: i32, %arg1: i32) -> (i32, i32) {
    %c0_i32 = arith.constant 0 : i32
    %c0_i32_0 = arith.constant 0 : i32
    return %c0_i32, %arg1 : i32, i32
  }
  func.func @transform_3(%arg0: i32, %arg1: i32) -> (i32, i32) {
    %c0_i32 = arith.constant 0 : i32
    return %arg0, %arg1 : i32, i32
  }
}

module attributes {stable_mosaic.version = 11 : i64} {
  func.func @_linear_kernel(%arg0: i32, %arg1: i32, %arg2: memref<168x512xf32, #tpu.memory_space<vmem>>, %arg3: memref<512x128xf32, #tpu.memory_space<vmem>>, %arg4: memref<1x128xf32, #tpu.memory_space<vmem>>, %arg5: memref<168x128xf32, #tpu.memory_space<vmem>>) attributes {dimension_semantics = [#tpu.dimension_semantics<parallel>, #tpu.dimension_semantics<parallel>], iteration_bounds = array<i64: 1, 1>, scalar_prefetch = 0 : i64, scratch_operands = 0 : i64, tpu.core_type = #tpu.core_type<tc>, window_params = [{transform_indices = @transform_0, window_bounds = array<i64: 168, 512>}, {transform_indices = @transform_1, window_bounds = array<i64: 512, 128>}, {transform_indices = @transform_2, window_bounds = array<i64: 1, 128>}, {transform_indices = @transform_3, window_bounds = array<i64: 168, 128>}]} {
    %c0 = arith.constant 0 : index
    %c0_0 = arith.constant 0 : index
    %0 = vector.load %arg2[%c0, %c0_0] : memref<168x512xf32, #tpu.memory_space<vmem>>, vector<168x512xf32>
    %c0_1 = arith.constant 0 : index
    %c0_2 = arith.constant 0 : index
    %1 = vector.load %arg3[%c0_1, %c0_2] : memref<512x128xf32, #tpu.memory_space<vmem>>, vector<512x128xf32>
    %cst = arith.constant dense<0.000000e+00> : vector<168x128xf32>
    %2 = tpu.matmul %0, %1, %cst {dimension_numbers = #tpu.dot_dimension_numbers<[1], [0], [0], [1], [0, 0, 1, 1], [], []>} : vector<168x512xf32>, vector<512x128xf32>, vector<168x128xf32> -> vector<168x128xf32>
    %c0_3 = arith.constant 0 : index
    %c0_4 = arith.constant 0 : index
    %3 = vector.load %arg4[%c0_3, %c0_4] : memref<1x128xf32, #tpu.memory_space<vmem>>, vector<1x128xf32>
    %4 = vector.broadcast %3 : vector<1x128xf32> to vector<168x128xf32>
    %5 = arith.addf %2, %4 : vector<168x128xf32>
    %cst_5 = arith.constant 0.000000e+00 : f32
    %6 = vector.broadcast %cst_5 : f32 to vector<168x128xf32>
    %7 = arith.maximumf %5, %6 : vector<168x128xf32>
    %c0_6 = arith.constant 0 : index
    %c0_7 = arith.constant 0 : index
    %8 = vector.load %arg5[%c0_6, %c0_7] : memref<168x128xf32, #tpu.memory_space<vmem>>, vector<168x128xf32>
    tpu.vector_store %arg5[%c0_6, %c0_7], %7 {strides = array<i32>} : memref<168x128xf32, #tpu.memory_space<vmem>>, vector<168x128xf32>,
    return
  }
  func.func @transform_0(%arg0: i32, %arg1: i32) -> (i32, i32) {
    %c0_i32 = arith.constant 0 : i32
    %c0_i32_0 = arith.constant 0 : i32
    return %arg0, %c0_i32 : i32, i32
  }
  func.func @transform_1(%arg0: i32, %arg1: i32) -> (i32, i32) {
    %c0_i32 = arith.constant 0 : i32
    %c0_i32_0 = arith.constant 0 : i32
    return %c0_i32, %arg1 : i32, i32
  }
  func.func @transform_2(%arg0: i32, %arg1: i32) -> (i32, i32) {
    %c0_i32 = arith.constant 0 : i32
    %c0_i32_0 = arith.constant 0 : i32
    return %c0_i32, %arg1 : i32, i32
  }
  func.func @transform_3(%arg0: i32, %arg1: i32) -> (i32, i32) {
    %c0_i32 = arith.constant 0 : i32
    return %arg0, %arg1 : i32, i32
  }
}

module attributes {stable_mosaic.version = 11 : i64} {
  func.func @_linear_kernel(%arg0: i32, %arg1: i32, %arg2: memref<104x576xf32, #tpu.memory_space<vmem>>, %arg3: memref<576x128xf32, #tpu.memory_space<vmem>>, %arg4: memref<1x128xf32, #tpu.memory_space<vmem>>, %arg5: memref<104x128xf32, #tpu.memory_space<vmem>>) attributes {dimension_semantics = [#tpu.dimension_semantics<parallel>, #tpu.dimension_semantics<parallel>], iteration_bounds = array<i64: 1, 1>, scalar_prefetch = 0 : i64, scratch_operands = 0 : i64, tpu.core_type = #tpu.core_type<tc>, window_params = [{transform_indices = @transform_0, window_bounds = array<i64: 104, 576>}, {transform_indices = @transform_1, window_bounds = array<i64: 576, 128>}, {transform_indices = @transform_2, window_bounds = array<i64: 1, 128>}, {transform_indices = @transform_3, window_bounds = array<i64: 104, 128>}]} {
    %c0 = arith.constant 0 : index
    %c0_0 = arith.constant 0 : index
    %0 = vector.load %arg2[%c0, %c0_0] : memref<104x576xf32, #tpu.memory_space<vmem>>, vector<104x576xf32>
    %c0_1 = arith.constant 0 : index
    %c0_2 = arith.constant 0 : index
    %1 = vector.load %arg3[%c0_1, %c0_2] : memref<576x128xf32, #tpu.memory_space<vmem>>, vector<576x128xf32>
    %cst = arith.constant dense<0.000000e+00> : vector<104x128xf32>
    %2 = tpu.matmul %0, %1, %cst {dimension_numbers = #tpu.dot_dimension_numbers<[1], [0], [0], [1], [0, 0, 1, 1], [], []>} : vector<104x576xf32>, vector<576x128xf32>, vector<104x128xf32> -> vector<104x128xf32>
    %c0_3 = arith.constant 0 : index
    %c0_4 = arith.constant 0 : index
    %3 = vector.load %arg4[%c0_3, %c0_4] : memref<1x128xf32, #tpu.memory_space<vmem>>, vector<1x128xf32>
    %4 = vector.broadcast %3 : vector<1x128xf32> to vector<104x128xf32>
    %5 = arith.addf %2, %4 : vector<104x128xf32>
    %cst_5 = arith.constant 0.000000e+00 : f32
    %6 = vector.broadcast %cst_5 : f32 to vector<104x128xf32>
    %7 = arith.maximumf %5, %6 : vector<104x128xf32>
    %c0_6 = arith.constant 0 : index
    %c0_7 = arith.constant 0 : index
    %8 = vector.load %arg5[%c0_6, %c0_7] : memref<104x128xf32, #tpu.memory_space<vmem>>, vector<104x128xf32>
    tpu.vector_store %arg5[%c0_6, %c0_7], %7 {strides = array<i32>} : memref<104x128xf32, #tpu.memory_space<vmem>>, vector<104x128xf32>,
    return
  }
  func.func @transform_0(%arg0: i32, %arg1: i32) -> (i32, i32) {
    %c0_i32 = arith.constant 0 : i32
    %c0_i32_0 = arith.constant 0 : i32
    return %arg0, %c0_i32 : i32, i32
  }
  func.func @transform_1(%arg0: i32, %arg1: i32) -> (i32, i32) {
    %c0_i32 = arith.constant 0 : i32
    %c0_i32_0 = arith.constant 0 : i32
    return %c0_i32, %arg1 : i32, i32
  }
  func.func @transform_2(%arg0: i32, %arg1: i32) -> (i32, i32) {
    %c0_i32 = arith.constant 0 : i32
    %c0_i32_0 = arith.constant 0 : i32
    return %c0_i32, %arg1 : i32, i32
  }
  func.func @transform_3(%arg0: i32, %arg1: i32) -> (i32, i32) {
    %c0_i32 = arith.constant 0 : i32
    return %arg0, %arg1 : i32, i32
  }
}

module attributes {stable_mosaic.version = 11 : i64} {
  func.func @_linear_kernel(%arg0: i32, %arg1: i32, %arg2: memref<8x3136xf32, #tpu.memory_space<vmem>>, %arg3: memref<3136x128xf32, #tpu.memory_space<vmem>>, %arg4: memref<1x128xf32, #tpu.memory_space<vmem>>, %arg5: memref<8x128xf32, #tpu.memory_space<vmem>>) attributes {dimension_semantics = [#tpu.dimension_semantics<parallel>, #tpu.dimension_semantics<parallel>], iteration_bounds = array<i64: 1, 1>, scalar_prefetch = 0 : i64, scratch_operands = 0 : i64, tpu.core_type = #tpu.core_type<tc>, window_params = [{transform_indices = @transform_0, window_bounds = array<i64: 8, 3136>}, {transform_indices = @transform_1, window_bounds = array<i64: 3136, 128>}, {transform_indices = @transform_2, window_bounds = array<i64: 1, 128>}, {transform_indices = @transform_3, window_bounds = array<i64: 8, 128>}]} {
    %c0 = arith.constant 0 : index
    %c0_0 = arith.constant 0 : index
    %0 = vector.load %arg2[%c0, %c0_0] : memref<8x3136xf32, #tpu.memory_space<vmem>>, vector<8x3136xf32>
    %c0_1 = arith.constant 0 : index
    %c0_2 = arith.constant 0 : index
    %1 = vector.load %arg3[%c0_1, %c0_2] : memref<3136x128xf32, #tpu.memory_space<vmem>>, vector<3136x128xf32>
    %cst = arith.constant dense<0.000000e+00> : vector<8x128xf32>
    %2 = tpu.matmul %0, %1, %cst {dimension_numbers = #tpu.dot_dimension_numbers<[1], [0], [0], [1], [0, 0, 1, 1], [], []>} : vector<8x3136xf32>, vector<3136x128xf32>, vector<8x128xf32> -> vector<8x128xf32>
    %c0_3 = arith.constant 0 : index
    %c0_4 = arith.constant 0 : index
    %3 = vector.load %arg4[%c0_3, %c0_4] : memref<1x128xf32, #tpu.memory_space<vmem>>, vector<1x128xf32>
    %4 = vector.broadcast %3 : vector<1x128xf32> to vector<8x128xf32>
    %5 = arith.addf %2, %4 : vector<8x128xf32>
    %cst_5 = arith.constant 0.000000e+00 : f32
    %6 = vector.broadcast %cst_5 : f32 to vector<8x128xf32>
    %7 = arith.maximumf %5, %6 : vector<8x128xf32>
    %c0_6 = arith.constant 0 : index
    %c0_7 = arith.constant 0 : index
    %8 = vector.load %arg5[%c0_6, %c0_7] : memref<8x128xf32, #tpu.memory_space<vmem>>, vector<8x128xf32>
    tpu.vector_store %arg5[%c0_6, %c0_7], %7 {strides = array<i32>} : memref<8x128xf32, #tpu.memory_space<vmem>>, vector<8x128xf32>,
    return
  }
  func.func @transform_0(%arg0: i32, %arg1: i32) -> (i32, i32) {
    %c0_i32 = arith.constant 0 : i32
    %c0_i32_0 = arith.constant 0 : i32
    return %arg0, %c0_i32 : i32, i32
  }
  func.func @transform_1(%arg0: i32, %arg1: i32) -> (i32, i32) {
    %c0_i32 = arith.constant 0 : i32
    %c0_i32_0 = arith.constant 0 : i32
    return %c0_i32, %arg1 : i32, i32
  }
  func.func @transform_2(%arg0: i32, %arg1: i32) -> (i32, i32) {
    %c0_i32 = arith.constant 0 : i32
    %c0_i32_0 = arith.constant 0 : i32
    return %c0_i32, %arg1 : i32, i32
  }
  func.func @transform_3(%arg0: i32, %arg1: i32) -> (i32, i32) {
    %c0_i32 = arith.constant 0 : i32
    return %arg0, %arg1 : i32, i32
  }
}

module attributes {stable_mosaic.version = 11 : i64} {
  func.func @_linear_kernel(%arg0: i32, %arg1: i32, %arg2: memref<8x64xf32, #tpu.memory_space<vmem>>, %arg3: memref<64x128xf32, #tpu.memory_space<vmem>>, %arg4: memref<1x128xf32, #tpu.memory_space<vmem>>, %arg5: memref<8x128xf32, #tpu.memory_space<vmem>>) attributes {dimension_semantics = [#tpu.dimension_semantics<parallel>, #tpu.dimension_semantics<parallel>], iteration_bounds = array<i64: 1, 3>, scalar_prefetch = 0 : i64, scratch_operands = 0 : i64, tpu.core_type = #tpu.core_type<tc>, window_params = [{transform_indices = @transform_0, window_bounds = array<i64: 8, 64>}, {transform_indices = @transform_1, window_bounds = array<i64: 64, 128>}, {transform_indices = @transform_2, window_bounds = array<i64: 1, 128>}, {transform_indices = @transform_3, window_bounds = array<i64: 8, 128>}]} {
    %c0 = arith.constant 0 : index
    %c0_0 = arith.constant 0 : index
    %0 = vector.load %arg2[%c0, %c0_0] : memref<8x64xf32, #tpu.memory_space<vmem>>, vector<8x64xf32>
    %c0_1 = arith.constant 0 : index
    %c0_2 = arith.constant 0 : index
    %1 = vector.load %arg3[%c0_1, %c0_2] : memref<64x128xf32, #tpu.memory_space<vmem>>, vector<64x128xf32>
    %cst = arith.constant dense<0.000000e+00> : vector<8x128xf32>
    %2 = tpu.matmul %0, %1, %cst {dimension_numbers = #tpu.dot_dimension_numbers<[1], [0], [0], [1], [0, 0, 1, 1], [], []>} : vector<8x64xf32>, vector<64x128xf32>, vector<8x128xf32> -> vector<8x128xf32>
    %c0_3 = arith.constant 0 : index
    %c0_4 = arith.constant 0 : index
    %3 = vector.load %arg4[%c0_3, %c0_4] : memref<1x128xf32, #tpu.memory_space<vmem>>, vector<1x128xf32>
    %4 = vector.broadcast %3 : vector<1x128xf32> to vector<8x128xf32>
    %5 = arith.addf %2, %4 : vector<8x128xf32>
    %c0_5 = arith.constant 0 : index
    %c0_6 = arith.constant 0 : index
    %6 = vector.load %arg5[%c0_5, %c0_6] : memref<8x128xf32, #tpu.memory_space<vmem>>, vector<8x128xf32>
    tpu.vector_store %arg5[%c0_5, %c0_6], %5 {strides = array<i32>} : memref<8x128xf32, #tpu.memory_space<vmem>>, vector<8x128xf32>,
    return
  }
  func.func @transform_0(%arg0: i32, %arg1: i32) -> (i32, i32) {
    %c0_i32 = arith.constant 0 : i32
    %c0_i32_0 = arith.constant 0 : i32
    return %arg0, %c0_i32 : i32, i32
  }
  func.func @transform_1(%arg0: i32, %arg1: i32) -> (i32, i32) {
    %c0_i32 = arith.constant 0 : i32
    %c0_i32_0 = arith.constant 0 : i32
    return %c0_i32, %arg1 : i32, i32
  }
  func.func @transform_2(%arg0: i32, %arg1: i32) -> (i32, i32) {
    %c0_i32 = arith.constant 0 : i32
    %c0_i32_0 = arith.constant 0 : i32
    return %c0_i32, %arg1 : i32, i32
  }
  func.func @transform_3(%arg0: i32, %arg1: i32) -> (i32, i32) {
    %c0_i32 = arith.constant 0 : i32
    return %arg0, %arg1 : i32, i32
  }
}

module attributes {stable_mosaic.version = 11 : i64} {
  func.func @_dueling_softmax_kernel(%arg0: i32, %arg1: memref<2x1x128xf32, #tpu.memory_space<vmem>>, %arg2: memref<2x6x128xf32, #tpu.memory_space<vmem>>, %arg3: memref<2x6x128xf32, #tpu.memory_space<vmem>>) attributes {dimension_semantics = [#tpu.dimension_semantics<arbitrary>], iteration_bounds = array<i64: 1>, scalar_prefetch = 0 : i64, scratch_operands = 0 : i64, tpu.core_type = #tpu.core_type<tc>, window_params = [{pipeline_mode = #tpu.pipeline_mode<synchronous>, transform_indices = @transform_0, window_bounds = array<i64: 2, 1, 128>}, {pipeline_mode = #tpu.pipeline_mode<synchronous>, transform_indices = @transform_1, window_bounds = array<i64: 2, 6, 128>}, {pipeline_mode = #tpu.pipeline_mode<synchronous>, transform_indices = @transform_2, window_bounds = array<i64: 2, 6, 128>}]} {
    %c0 = arith.constant 0 : index
    %c0_0 = arith.constant 0 : index
    %c0_1 = arith.constant 0 : index
    %0 = vector.load %arg1[%c0, %c0_0, %c0_1] : memref<2x1x128xf32, #tpu.memory_space<vmem>>, vector<2x1x128xf32>
    %c0_2 = arith.constant 0 : index
    %c0_3 = arith.constant 0 : index
    %c0_4 = arith.constant 0 : index
    %1 = vector.load %arg2[%c0_2, %c0_3, %c0_4] : memref<2x6x128xf32, #tpu.memory_space<vmem>>, vector<2x6x128xf32>
    %2 = vector.broadcast %0 : vector<2x1x128xf32> to vector<2x6x128xf32>
    %3 = arith.addf %2, %1 : vector<2x6x128xf32>
    %cst = arith.constant dense<0.000000e+00> : vector<2x128xf32>
    %4 = vector.multi_reduction <add>, %1, %cst [1] : vector<2x6x128xf32> to vector<2x128xf32>
    %5 = vector.shape_cast %4 : vector<2x128xf32> to vector<2x1x128xf32>
    %cst_5 = arith.constant 6.000000e+00 : f32
    %6 = vector.broadcast %cst_5 : f32 to vector<2x1x128xf32>
    %7 = arith.divf %5, %6 : vector<2x1x128xf32>
    %8 = vector.broadcast %7 : vector<2x1x128xf32> to vector<2x6x128xf32>
    %9 = arith.subf %3, %8 : vector<2x6x128xf32>
    %cst_6 = arith.constant dense<0xFF800000> : vector<2x6xf32>
    %10 = vector.multi_reduction <maximumf>, %9, %cst_6 [2] : vector<2x6x128xf32> to vector<2x6xf32>
    %11 = vector.shape_cast %10 : vector<2x6xf32> to vector<2x6x1xf32>
    %12 = vector.broadcast %11 : vector<2x6x1xf32> to vector<2x6x128xf32>
    %13 = arith.subf %9, %12 : vector<2x6x128xf32>
    %14 = math.exp %13 : vector<2x6x128xf32>
    %cst_7 = arith.constant dense<0.000000e+00> : vector<2x6xf32>
    %15 = vector.multi_reduction <add>, %14, %cst_7 [2] : vector<2x6x128xf32> to vector<2x6xf32>
    %16 = vector.shape_cast %15 : vector<2x6xf32> to vector<2x6x1xf32>
    %17 = tpu.reciprocal %16 {approx = true} : vector<2x6x1xf32> -> vector<2x6x1xf32>
    %18 = vector.broadcast %17 : vector<2x6x1xf32> to vector<2x6x128xf32>
    %19 = arith.mulf %14, %18 : vector<2x6x128xf32>
    %c0_8 = arith.constant 0 : index
    %c0_9 = arith.constant 0 : index
    %c0_10 = arith.constant 0 : index
    %20 = vector.load %arg3[%c0_8, %c0_9, %c0_10] : memref<2x6x128xf32, #tpu.memory_space<vmem>>, vector<2x6x128xf32>
    tpu.vector_store %arg3[%c0_8, %c0_9, %c0_10], %19 {strides = array<i32>} : memref<2x6x128xf32, #tpu.memory_space<vmem>>, vector<2x6x128xf32>,
    return
  }
  func.func @transform_0(%arg0: i32) -> (i32, i32, i32) {
    %c0_i32 = arith.constant 0 : i32
    %c0_i32_0 = arith.constant 0 : i32
    %c0_i32_1 = arith.constant 0 : i32
    %c0_i32_2 = arith.constant 0 : i32
    return %c0_i32, %c0_i32_0, %c0_i32_1 : i32, i32, i32
  }
  func.func @transform_1(%arg0: i32) -> (i32, i32, i32) {
    %c0_i32 = arith.constant 0 : i32
    %c0_i32_0 = arith.constant 0 : i32
    %c0_i32_1 = arith.constant 0 : i32
    %c0_i32_2 = arith.constant 0 : i32
    return %c0_i32, %c0_i32_0, %c0_i32_1 : i32, i32, i32
  }
  func.func @transform_2(%arg0: i32) -> (i32, i32, i32) {
    %c0_i32 = arith.constant 0 : i32
    %c0_i32_0 = arith.constant 0 : i32
    %c0_i32_1 = arith.constant 0 : i32
    %c0_i32_2 = arith.constant 0 : i32
    return %c0_i32, %c0_i32_0, %c0_i32_1 : i32, i32, i32
  }
}

</mosaic_0001>

<llo_original>
// kernel: dqn_forward.6
$region0: #{dqn_forward.6}
  #allocation0 [shape = 'u32[]', space=smem, size = 0x4, offset = 0x4, fixed_abs, tag = 'smem constant byte address 0x4 - core index']
  #allocation1 [shape = 'u32[144,128]{1,0:T(1,128)}', space=vmem, size = 0x12000, scoped, tag = 'internal scratch']
  %s0 = inlined_call_operand.vmem [shape: f32[1024,256], index: 0, kind: input, shape index: {}]
  %s1 = inlined_call_operand.vmem [shape: f32[256,128], index: 1, kind: input, shape index: {}]
  %s2 = inlined_call_operand.vmem [shape: f32[1,128], index: 2, kind: input, shape index: {}]
  %s3 = inlined_call_operand.vmem [shape: f32[1024,128], index: 3, kind: output, shape index: {}]
  %s4 = sld [smem:[#allocation0]]
  $region45: #{dqn_forward.6} parent=0
    _
  %s6 = ssub.s32 1, %s4
  %s7 = scalar_select 0, %s6, %s4
  loop: start=0, step=1, limit=6
  $region2: #{dqn_forward.6} parent=0 // loop_pre_header
    _
  $region3: #{dqn_forward.6} parent=0 // loop_header
    %s9 = sphi 0, %s13
    %p10 = scmp.ge.s32.totalorder %s9, 6
    %s16 = sphi 0, %s28
    %s17 = sphi 0, %s24
    %s18 = sphi 0, %s16
    %s19 = sphi 0, %s17
    %s20 = sphi 0, %s18
    %s21 = sphi 0, %s19
    %s31 = sphi 0, %s33
    %s34 = sphi 0, %s31
    %s35 = sphi 0, %s34
    %s51 = sphi 0, %s35
    %s57 = sphi 0, %s59
    %s60 = sphi 0, %s57
    %s61 = sphi 0, %s60
    %s77 = sphi 0, %s61
    %s83 = sphi 0, %s85
    %s86 = sphi 0, %s83
    %s87 = sphi 0, %s86
    %s103 = sphi 0, %s87
    %s111 = sphi 0, %s113
    %s114 = sphi 0, %s111
    %s115 = sphi 0, %s114
    %s131 = sphi 0, %s115
  $region4: #{dqn_forward.6} parent=0 // loop_header_branch
    %12 = sbr.rel (%p10) target = $region8
  $region5: #{dqn_forward.6} parent=0 // loop_body
    %s14 = ssub.s32 %s9, 1
    %s15 = ssub.s32 %s9, 2
    %s22 = sadd.s32 1, %s17
    %p23 = scmp.ge.s32.totalorder %s22, 1
    %s24 = scalar_select %p23, 0, %s22
    %s25 = sadd.s32 1, %s16
    %s26 = scalar_select %p23, %s25, %s16
    %p27 = scmp.ge.s32.totalorder %s26, 4
    %s28 = scalar_select %p27, 0, %s26
    %s29 = ssub.s32 %s16, %s28
    %p30 = scmp.eq.s32.totalorder %s29, 0
    %s32 = sadd.s32 %s31, 1
    %s33 = scalar_select %p30, %s31, %s32
    %p36 = pneg %p30
    %p37 = scmp.eq.s32.totalorder %s9, 3
    %p38 = por %p36, %p37
    %p39 = scmp.ne.s32.totalorder %s31, %s34
    %p40 = scmp.eq.s32.totalorder %s9, 0
    %p41 = por %p39, %p40
    %p42 = scmp.ne.s32.totalorder %s31, %s34
    %p43 = scmp.eq.s32.totalorder %s14, 3
    %p44 = por %p42, %p43
    %p45 = scmp.ne.s32.totalorder %s34, %s35
    %p46 = scmp.eq.s32.totalorder %s14, 0
    %p47 = por %p45, %p46
    %p48 = scmp.ne.s32.totalorder %s34, %s35
    %p49 = scmp.eq.s32.totalorder %s15, 3
    %p50 = por %p48, %p49
    %p52 = scmp.ne.s32.totalorder %s35, %s51
    %p53 = scmp.eq.s32.totalorder %s15, 0
    %p54 = por %p52, %p53
    %s55 = ssub.s32 %s17, %s24
    %p56 = scmp.eq.s32.totalorder %s55, 0
    %s58 = sadd.s32 %s57, 1
    %s59 = scalar_select %p56, %s57, %s58
    %p62 = pneg %p56
    %p63 = scmp.eq.s32.totalorder %s9, 3
    %p64 = por %p62, %p63
    %p65 = scmp.ne.s32.totalorder %s57, %s60
    %p66 = scmp.eq.s32.totalorder %s9, 0
    %p67 = por %p65, %p66
    %p68 = scmp.ne.s32.totalorder %s57, %s60
    %p69 = scmp.eq.s32.totalorder %s14, 3
    %p70 = por %p68, %p69
    %p71 = scmp.ne.s32.totalorder %s60, %s61
    %p72 = scmp.eq.s32.totalorder %s14, 0
    %p73 = por %p71, %p72
    %p74 = scmp.ne.s32.totalorder %s60, %s61
    %p75 = scmp.eq.s32.totalorder %s15, 3
    %p76 = por %p74, %p75
    %p78 = scmp.ne.s32.totalorder %s61, %s77
    %p79 = scmp.eq.s32.totalorder %s15, 0
    %p80 = por %p78, %p79
    %s81 = ssub.s32 %s17, %s24
    %p82 = scmp.eq.s32.totalorder %s81, 0
    %s84 = sadd.s32 %s83, 1
    %s85 = scalar_select %p82, %s83, %s84
    %p88 = pneg %p82
    %p89 = scmp.eq.s32.totalorder %s9, 3
    %p90 = por %p88, %p89
    %p91 = scmp.ne.s32.totalorder %s83, %s86
    %p92 = scmp.eq.s32.totalorder %s9, 0
    %p93 = por %p91, %p92
    %p94 = scmp.ne.s32.totalorder %s83, %s86
    %p95 = scmp.eq.s32.totalorder %s14, 3
    %p96 = por %p94, %p95
    %p97 = scmp.ne.s32.totalorder %s86, %s87
    %p98 = scmp.eq.s32.totalorder %s14, 0
    %p99 = por %p97, %p98
    %p100 = scmp.ne.s32.totalorder %s86, %s87
    %p101 = scmp.eq.s32.totalorder %s15, 3
    %p102 = por %p100, %p101
    %p104 = scmp.ne.s32.totalorder %s87, %s103
    %p105 = scmp.eq.s32.totalorder %s15, 0
    %p106 = por %p104, %p105
    %s107 = ssub.s32 %s16, %s28
    %s108 = ssub.s32 %s17, %s24
    %s109 = sor.u32 %s107, %s108
    %p110 = scmp.eq.s32.totalorder %s109, 0
    %s112 = sadd.s32 %s111, 1
    %s113 = scalar_select %p110, %s111, %s112
    %p116 = pneg %p110
    %p117 = scmp.eq.s32.totalorder %s9, 3
    %p118 = por %p116, %p117
    %p119 = scmp.ne.s32.totalorder %s111, %s114
    %p120 = scmp.eq.s32.totalorder %s9, 0
    %p121 = por %p119, %p120
    %p122 = scmp.ne.s32.totalorder %s111, %s114
    %p123 = scmp.eq.s32.totalorder %s14, 3
    %p124 = por %p122, %p123
    %p125 = scmp.ne.s32.totalorder %s114, %s115
    %p126 = scmp.eq.s32.totalorder %s14, 0
    %p127 = por %p125, %p126
    %p128 = scmp.ne.s32.totalorder %s114, %s115
    %p129 = scmp.eq.s32.totalorder %s15, 3
    %p130 = por %p128, %p129
    %p132 = scmp.ne.s32.totalorder %s115, %s131
    %p133 = scmp.eq.s32.totalorder %s15, 0
    %p134 = por %p132, %p133
    %p135 = scmp.le.s32.totalorder 1, %s9
    %p136 = scmp.lt.s32.totalorder %s9, 5
    %p137 = pnand %p135, %p136
    %p138 = pneg %p137
    // Predicated region
    $region9: #{dqn_forward.6} parent=5 // pred_check
      _
    $region10: #{dqn_forward.6} parent=5 // pred_check_branch
      %140 = sbr.rel (%p137) target = $region12
    $region11: #{dqn_forward.6} parent=5 // pred_region
      %s141 = ssub.s32 %s9, 1
      // Predicated region
      $region13: #{dqn_forward.6} parent=11 // pred_check
        %p142 = pneg %p73
      $region14: #{dqn_forward.6} parent=11 // pred_check_branch
        %144 = sbr.rel (%p142) target = $region16
      $region15: #{dqn_forward.6} parent=11 // pred_region
        %p145 = scmp.lt.s32.totalorder %s19, 0
        %s146 = scalar_select %p145, %s19, 0
        %s147 = smul.addr %s146, 8
        %s148 = scalar_lea.vmem %s1, %s147
      $region16: #{dqn_forward.6} parent=11 // pred_fallthru
        _
      // Predicated region
      $region17: #{dqn_forward.6} parent=11 // pred_check
        %p149 = pneg %p99
      $region18: #{dqn_forward.6} parent=11 // pred_check_branch
        %151 = sbr.rel (%p149) target = $region20
      $region19: #{dqn_forward.6} parent=11 // pred_region
        %p152 = scmp.lt.s32.totalorder %s19, 0
        %s153 = scalar_select %p152, %s19, 0
        %s154 = scalar_lea.vmem %s2, %s153
      $region20: #{dqn_forward.6} parent=11 // pred_fallthru
        _
    $region12: #{dqn_forward.6} parent=5 // pred_fallthru
      _
    %p155 = scmp.lt.s32.totalorder %s9, 4
    // Predicated region
    $region21: #{dqn_forward.6} parent=5 // pred_check
      %p156 = pneg %p155
    $region22: #{dqn_forward.6} parent=5 // pred_check_branch
      %158 = sbr.rel (%p156) target = $region24
    $region23: #{dqn_forward.6} parent=5 // pred_region
      // Predicated region
      $region25: #{dqn_forward.6} parent=23 // pred_check
        %p159 = pneg %p41
      $region26: #{dqn_forward.6} parent=23 // pred_check_branch
        %161 = sbr.rel (%p159) target = $region28
      $region27: #{dqn_forward.6} parent=23 // pred_region
        %s162 = smul.u32 32, %s16
        %p163 = scmp.lt.s32.totalorder %s162, 127
        %s164 = scalar_select %p163, %s162, 127
        %s165 = smul.addr %s164, 2
        %s166 = smul.addr %s165, 8
        %s167 = scalar_lea.vmem %s0, %s166
        %s168 = smul.u32 32, %s16
      $region28: #{dqn_forward.6} parent=23 // pred_fallthru
        _
    $region24: #{dqn_forward.6} parent=5 // pred_fallthru
      _
    %p169 = scmp.le.s32.totalorder 1, %s9
    %p170 = scmp.lt.s32.totalorder %s9, 5
    %p171 = pnand %p169, %p170
    %p172 = pneg %p171
    // Predicated region
    $region29: #{dqn_forward.6} parent=5 // pred_check
      _
    $region30: #{dqn_forward.6} parent=5 // pred_check_branch
      %174 = sbr.rel (%p171) target = $region32
    $region31: #{dqn_forward.6} parent=5 // pred_region
      %s175 = ssub.s32 %s9, 1
      %s176 = smul.u32 32, %s18
      %p177 = scmp.lt.s32.totalorder %s176, 127
      %s178 = scalar_select %p177, %s176, 127
      %s179 = smul.addr %s178, 2
      %s180 = smul.addr %s179, 8
      %s181 = scalar_lea.vmem %s0, %s180
      %p182 = pneg %p47
      %p183 = pneg %p44
      %p184 = scmp.lt.s32.totalorder %s19, 0
      %s185 = scalar_select %p184, %s19, 0
      %s186 = smul.addr %s185, 8
      %s187 = scalar_lea.vmem %s1, %s186
      %p188 = pneg %p73
      %p189 = pneg %p70
      %p190 = scmp.lt.s32.totalorder %s19, 0
      %s191 = scalar_select %p190, %s19, 0
      %s192 = scalar_lea.vmem %s2, %s191
      %p193 = pneg %p99
      %p194 = pneg %p96
      %p195 = pneg %p127
      %p196 = pneg %p124
      %s197 = smul.u32 32, %s18
      %p198 = scmp.lt.s32.totalorder %s197, 127
      %s199 = scalar_select %p198, %s197, 127
      %p200 = scmp.lt.s32.totalorder %s19, 0
      %s201 = scalar_select %p200, %s19, 0
      %s202 = sadd.s32 %s201, %s199
      %s203 = smul.addr %s202, 8
      %s204 = scalar_lea.vmem %s3, %s203
      %s205 = smul.u32 32, %s18
      %p206 = scmp.lt.s32.totalorder %s205, 127
      %s207 = scalar_select %p206, %s205, 127
      %s208 = smul.addr %s207, 2
      %s209 = smul.addr %s208, 8
      %s210 = scalar_lea.vmem %s0, %s209
      %s211 = smul.u32 32, %s18
      %p212 = scmp.lt.s32.totalorder %s19, 0
      %s213 = scalar_select %p212, %s19, 0
      %s214 = smul.addr %s213, 8
      %s215 = scalar_lea.vmem %s1, %s214
      %p216 = scmp.lt.s32.totalorder %s19, 0
      %s217 = scalar_select %p216, %s19, 0
      %s218 = scalar_lea.vmem %s2, %s217
      %s219 = smul.u32 32, %s18
      %p220 = scmp.lt.s32.totalorder %s219, 127
      %s221 = scalar_select %p220, %s219, 127
      %p222 = scmp.lt.s32.totalorder %s19, 0
      %s223 = scalar_select %p222, %s19, 0
      %s224 = sadd.s32 %s223, %s221
      %s225 = smul.addr %s224, 8
      %s226 = scalar_lea.vmem %s3, %s225
      %s227 = smul.u32 32, %s18
      %v228 = vld [vmem:[%s210] sm:$0xff]
      %v229 = vld [vmem:[%s210 + $0x8] sm:$0xff]
      %v230 = vld [vmem:[%s210 + $0x10] sm:$0xff]
      %v231 = vld [vmem:[%s210 + $0x18] sm:$0xff]
      %v232 = vld [vmem:[%s210 + $0x20] sm:$0xff]
      %v233 = vld [vmem:[%s210 + $0x28] sm:$0xff]
      %v234 = vld [vmem:[%s210 + $0x30] sm:$0xff]
      %v235 = vld [vmem:[%s210 + $0x38] sm:$0xff]
      %v236 = vld [vmem:[%s210 + $0x40] sm:$0xff]
      %v237 = vld [vmem:[%s210 + $0x48] sm:$0xff]
      %v238 = vld [vmem:[%s210 + $0x50] sm:$0xff]
      %v239 = vld [vmem:[%s210 + $0x58] sm:$0xff]
      %v240 = vld [vmem:[%s210 + $0x60] sm:$0xff]
      %v241 = vld [vmem:[%s210 + $0x68] sm:$0xff]
      %v242 = vld [vmem:[%s210 + $0x70] sm:$0xff]
      %v243 = vld [vmem:[%s210 + $0x78] sm:$0xff]
      %v244 = vld [vmem:[%s210 + $0x80] sm:$0xff]
      %v245 = vld [vmem:[%s210 + $0x88] sm:$0xff]
      %v246 = vld [vmem:[%s210 + $0x90] sm:$0xff]
      %v247 = vld [vmem:[%s210 + $0x98] sm:$0xff]
      %v248 = vld [vmem:[%s210 + $0xa0] sm:$0xff]
      %v249 = vld [vmem:[%s210 + $0xa8] sm:$0xff]
      %v250 = vld [vmem:[%s210 + $0xb0] sm:$0xff]
      %v251 = vld [vmem:[%s210 + $0xb8] sm:$0xff]
      %v252 = vld [vmem:[%s210 + $0xc0] sm:$0xff]
      %v253 = vld [vmem:[%s210 + $0xc8] sm:$0xff]
      %v254 = vld [vmem:[%s210 + $0xd0] sm:$0xff]
      %v255 = vld [vmem:[%s210 + $0xd8] sm:$0xff]
      %v256 = vld [vmem:[%s210 + $0xe0] sm:$0xff]
      %v257 = vld [vmem:[%s210 + $0xe8] sm:$0xff]
      %v258 = vld [vmem:[%s210 + $0xf0] sm:$0xff]
      %v259 = vld [vmem:[%s210 + $0xf8] sm:$0xff]
      %v260 = vld [vmem:[%s210 + $0x100] sm:$0xff]
      %v261 = vld [vmem:[%s210 + $0x108] sm:$0xff]
      %v262 = vld [vmem:[%s210 + $0x110] sm:$0xff]
      %v263 = vld [vmem:[%s210 + $0x118] sm:$0xff]
      %v264 = vld [vmem:[%s210 + $0x120] sm:$0xff]
      %v265 = vld [vmem:[%s210 + $0x128] sm:$0xff]
      %v266 = vld [vmem:[%s210 + $0x130] sm:$0xff]
      %v267 = vld [vmem:[%s210 + $0x138] sm:$0xff]
      %v268 = vld [vmem:[%s210 + $0x140] sm:$0xff]
      %v269 = vld [vmem:[%s210 + $0x148] sm:$0xff]
      %v270 = vld [vmem:[%s210 + $0x150] sm:$0xff]
      %v271 = vld [vmem:[%s210 + $0x158] sm:$0xff]
      %v272 = vld [vmem:[%s210 + $0x160] sm:$0xff]
      %v273 = vld [vmem:[%s210 + $0x168] sm:$0xff]
      %v274 = vld [vmem:[%s210 + $0x170] sm:$0xff]
      %v275 = vld [vmem:[%s210 + $0x178] sm:$0xff]
      %v276 = vld [vmem:[%s210 + $0x180] sm:$0xff]
      %v277 = vld [vmem:[%s210 + $0x188] sm:$0xff]
      %v278 = vld [vmem:[%s210 + $0x190] sm:$0xff]
      %v279 = vld [vmem:[%s210 + $0x198] sm:$0xff]
      %v280 = vld [vmem:[%s210 + $0x1a0] sm:$0xff]
      %v281 = vld [vmem:[%s210 + $0x1a8] sm:$0xff]
      %v282 = vld [vmem:[%s210 + $0x1b0] sm:$0xff]
      %v283 = vld [vmem:[%s210 + $0x1b8] sm:$0xff]
      %v284 = vld [vmem:[%s210 + $0x1c0] sm:$0xff]
      %v285 = vld [vmem:[%s210 + $0x1c8] sm:$0xff]
      %v286 = vld [vmem:[%s210 + $0x1d0] sm:$0xff]
      %v287 = vld [vmem:[%s210 + $0x1d8] sm:$0xff]
      %v288 = vld [vmem:[%s210 + $0x1e0] sm:$0xff]
      %v289 = vld [vmem:[%s210 + $0x1e8] sm:$0xff]
      %v290 = vld [vmem:[%s210 + $0x1f0] sm:$0xff]
      %v291 = vld [vmem:[%s210 + $0x1f8] sm:$0xff]
      %v292 = vld [vmem:[%s215] sm:$0xff]
      %v293 = vld [vmem:[%s215 + $0x8] sm:$0xff]
      %v294 = vld [vmem:[%s215 + $0x10] sm:$0xff]
      %v295 = vld [vmem:[%s215 + $0x18] sm:$0xff]
      %v296 = vld [vmem:[%s215 + $0x20] sm:$0xff]
      %v297 = vld [vmem:[%s215 + $0x28] sm:$0xff]
      %v298 = vld [vmem:[%s215 + $0x30] sm:$0xff]
      %v299 = vld [vmem:[%s215 + $0x38] sm:$0xff]
      %v300 = vld [vmem:[%s215 + $0x40] sm:$0xff]
      %v301 = vld [vmem:[%s215 + $0x48] sm:$0xff]
      %v302 = vld [vmem:[%s215 + $0x50] sm:$0xff]
      %v303 = vld [vmem:[%s215 + $0x58] sm:$0xff]
      %v304 = vld [vmem:[%s215 + $0x60] sm:$0xff]
      %v305 = vld [vmem:[%s215 + $0x68] sm:$0xff]
      %v306 = vld [vmem:[%s215 + $0x70] sm:$0xff]
      %v307 = vld [vmem:[%s215 + $0x78] sm:$0xff]
      %v308 = vld [vmem:[%s215 + $0x80] sm:$0xff]
      %v309 = vld [vmem:[%s215 + $0x88] sm:$0xff]
      %v310 = vld [vmem:[%s215 + $0x90] sm:$0xff]
      %v311 = vld [vmem:[%s215 + $0x98] sm:$0xff]
      %v312 = vld [vmem:[%s215 + $0xa0] sm:$0xff]
      %v313 = vld [vmem:[%s215 + $0xa8] sm:$0xff]
      %v314 = vld [vmem:[%s215 + $0xb0] sm:$0xff]
      %v315 = vld [vmem:[%s215 + $0xb8] sm:$0xff]
      %v316 = vld [vmem:[%s215 + $0xc0] sm:$0xff]
      %v317 = vld [vmem:[%s215 + $0xc8] sm:$0xff]
      %v318 = vld [vmem:[%s215 + $0xd0] sm:$0xff]
      %v319 = vld [vmem:[%s215 + $0xd8] sm:$0xff]
      %v320 = vld [vmem:[%s215 + $0xe0] sm:$0xff]
      %v321 = vld [vmem:[%s215 + $0xe8] sm:$0xff]
      %v322 = vld [vmem:[%s215 + $0xf0] sm:$0xff]
      %v323 = vld [vmem:[%s215 + $0xf8] sm:$0xff]
      %v324 = vld [vmem:[%s218] sm:$0x1]
      %v326 = vlaneseq
      %v327 = vshrl.u32 %v326, 7
      %v328 = vsub.s32 0, %v327
      %v329 = vrot.slane %v324, %v328
      %331 = vmatprep.subr.mxu0 0.0
      %332 = vmatpush1.msra.mxu0 %v292
      %333 = vmatprep.subr.mxu0 0.0
      %334 = vmatpush1.msra.mxu0 %v293
      %335 = vmatprep.subr.mxu0 0.0
      %336 = vmatpush1.msra.mxu0 %v294
      %337 = vmatprep.subr.mxu0 0.0
      %338 = vmatpush1.msra.mxu0 %v295
      %339 = vmatprep.subr.mxu0 0.0
      %340 = vmatpush1.msra.mxu0 %v296
      %341 = vmatprep.subr.mxu0 0.0
      %342 = vmatpush1.msra.mxu0 %v297
      %343 = vmatprep.subr.mxu0 0.0
      %344 = vmatpush1.msra.mxu0 %v298
      %345 = vmatprep.subr.mxu0 0.0
      %346 = vmatpush1.msra.mxu0 %v299
      %347 = vmatprep.subr.mxu0 0.0
      %348 = vmatpush1.msra.mxu0 %v300
      %349 = vmatprep.subr.mxu0 0.0
      %350 = vmatpush1.msra.mxu0 %v301
      %351 = vmatprep.subr.mxu0 0.0
      %352 = vmatpush1.msra.mxu0 %v302
      %353 = vmatprep.subr.mxu0 0.0
      %354 = vmatpush1.msra.mxu0 %v303
      %355 = vmatprep.subr.mxu0 0.0
      %356 = vmatpush1.msra.mxu0 %v304
      %357 = vmatprep.subr.mxu0 0.0
      %358 = vmatpush1.msra.mxu0 %v305
      %359 = vmatprep.subr.mxu0 0.0
      %360 = vmatpush1.msra.mxu0 %v306
      %361 = vmatprep.subr.mxu0 0.0
      %362 = vmatpush1.msra.mxu0 %v307
      %363 = vmatprep.subr.mxu0 0.0
      %364 = vmatpush1.msra.mxu0 %v308
      %365 = vmatprep.subr.mxu0 0.0
      %366 = vmatpush1.msra.mxu0 %v309
      %367 = vmatprep.subr.mxu0 0.0
      %368 = vmatpush1.msra.mxu0 %v310
      %369 = vmatprep.subr.mxu0 0.0
      %370 = vmatpush1.msra.mxu0 %v311
      %371 = vmatprep.subr.mxu0 0.0
      %372 = vmatpush1.msra.mxu0 %v312
      %373 = vmatprep.subr.mxu0 0.0
      %374 = vmatpush1.msra.mxu0 %v313
      %375 = vmatprep.subr.mxu0 0.0
      %376 = vmatpush1.msra.mxu0 %v314
      %377 = vmatprep.subr.mxu0 0.0
      %378 = vmatpush1.msra.mxu0 %v315
      %379 = vmatprep.subr.mxu0 0.0
      %380 = vmatpush1.msra.mxu0 %v316
      %381 = vmatprep.subr.mxu0 0.0
      %382 = vmatpush1.msra.mxu0 %v317
      %383 = vmatprep.subr.mxu0 0.0
      %384 = vmatpush1.msra.mxu0 %v318
      %385 = vmatprep.subr.mxu0 0.0
      %386 = vmatpush1.msra.mxu0 %v319
      %387 = vmatprep.subr.mxu0 0.0
      %388 = vmatpush1.msra.mxu0 %v320
      %389 = vmatprep.subr.mxu0 0.0
      %390 = vmatpush1.msra.mxu0 %v321
      %391 = vmatprep.subr.mxu0 0.0
      %392 = vmatpush1.msra.mxu0 %v322
      %393 = vmatprep.subr.mxu0 0.0
      %394 = vmatpush1.msra.mxu0 %v323
      %395 = vmatprep.mubr.f32.mxu0 %v229
      %396 = vmatmul.mubr.f32.gmra.mrb[0].mxu0 %v228
      %v397 = vpop.f32.mrb[0].mxu0
      %v398 = vadd.f32 %v329, %v397
      %v399 = vpop.f32.mrb[0].mxu0
      %400 = vmatprep.mubr.f32.mxu0 %v231
      %401 = vmatmul.mubr.f32.gmra.mrb[0].mxu0 %v230
      %v402 = vpop.f32.mrb[0].mxu0
      %v403 = vadd.f32 %v329, %v402
      %v404 = vpop.f32.mrb[0].mxu0
      %405 = vmatprep.mubr.f32.mxu0 %v233
      %406 = vmatmul.mubr.f32.gmra.mrb[0].mxu0 %v232
      %v407 = vpop.f32.mrb[0].mxu0
      %v408 = vadd.f32 %v329, %v407
      %v409 = vpop.f32.mrb[0].mxu0
      %410 = vmatprep.mubr.f32.mxu0 %v235
      %411 = vmatmul.mubr.f32.gmra.mrb[0].mxu0 %v234
      %v412 = vpop.f32.mrb[0].mxu0
      %v413 = vadd.f32 %v329, %v412
      %v414 = vpop.f32.mrb[0].mxu0
      %415 = vmatprep.mubr.f32.mxu0 %v237
      %416 = vmatmul.mubr.f32.gmra.mrb[0].mxu0 %v236
      %v417 = vpop.f32.mrb[0].mxu0
      %v418 = vadd.f32 %v329, %v417
      %v419 = vpop.f32.mrb[0].mxu0
      %420 = vmatprep.mubr.f32.mxu0 %v239
      %421 = vmatmul.mubr.f32.gmra.mrb[0].mxu0 %v238
      %v422 = vpop.f32.mrb[0].mxu0
      %v423 = vadd.f32 %v329, %v422
      %v424 = vpop.f32.mrb[0].mxu0
      %425 = vmatprep.mubr.f32.mxu0 %v241
      %426 = vmatmul.mubr.f32.gmra.mrb[0].mxu0 %v240
      %v427 = vpop.f32.mrb[0].mxu0
      %v428 = vadd.f32 %v329, %v427
      %v429 = vpop.f32.mrb[0].mxu0
      %430 = vmatprep.mubr.f32.mxu0 %v243
      %431 = vmatmul.mubr.f32.gmra.mrb[0].mxu0 %v242
      %v432 = vpop.f32.mrb[0].mxu0
      %v433 = vadd.f32 %v329, %v432
      %v434 = vpop.f32.mrb[0].mxu0
      %435 = vmatprep.mubr.f32.mxu0 %v245
      %436 = vmatmul.mubr.f32.gmra.mrb[0].mxu0 %v244
      %v437 = vpop.f32.mrb[0].mxu0
      %v438 = vadd.f32 %v329, %v437
      %v439 = vpop.f32.mrb[0].mxu0
      %440 = vmatprep.mubr.f32.mxu0 %v247
      %441 = vmatmul.mubr.f32.gmra.mrb[0].mxu0 %v246
      %v442 = vpop.f32.mrb[0].mxu0
      %v443 = vadd.f32 %v329, %v442
      %v444 = vpop.f32.mrb[0].mxu0
      %445 = vmatprep.mubr.f32.mxu0 %v249
      %446 = vmatmul.mubr.f32.gmra.mrb[0].mxu0 %v248
      %v447 = vpop.f32.mrb[0].mxu0
      %v448 = vadd.f32 %v329, %v447
      %v449 = vpop.f32.mrb[0].mxu0
      %450 = vmatprep.mubr.f32.mxu0 %v251
      %451 = vmatmul.mubr.f32.gmra.mrb[0].mxu0 %v250
      %v452 = vpop.f32.mrb[0].mxu0
      %v453 = vadd.f32 %v329, %v452
      %v454 = vpop.f32.mrb[0].mxu0
      %455 = vmatprep.mubr.f32.mxu0 %v253
      %456 = vmatmul.mubr.f32.gmra.mrb[0].mxu0 %v252
      %v457 = vpop.f32.mrb[0].mxu0
      %v458 = vadd.f32 %v329, %v457
      %v459 = vpop.f32.mrb[0].mxu0
      %460 = vmatprep.mubr.f32.mxu0 %v255
      %461 = vmatmul.mubr.f32.gmra.mrb[0].mxu0 %v254
      %v462 = vpop.f32.mrb[0].mxu0
      %v463 = vadd.f32 %v329, %v462
      %v464 = vpop.f32.mrb[0].mxu0
      %465 = vmatprep.mubr.f32.mxu0 %v257
      %466 = vmatmul.mubr.f32.gmra.mrb[0].mxu0 %v256
      %v467 = vpop.f32.mrb[0].mxu0
      %v468 = vadd.f32 %v329, %v467
      %v469 = vpop.f32.mrb[0].mxu0
      %470 = vmatprep.mubr.f32.mxu0 %v259
      %471 = vmatmul.mubr.f32.gmra.mrb[0].mxu0 %v258
      %v472 = vpop.f32.mrb[0].mxu0
      %v473 = vadd.f32 %v329, %v472
      %v474 = vpop.f32.mrb[0].mxu0
      %475 = vmatprep.mubr.f32.mxu0 %v261
      %476 = vmatmul.mubr.f32.gmra.mrb[0].mxu0 %v260
      %v477 = vpop.f32.mrb[0].mxu0
      %v478 = vadd.f32 %v329, %v477
      %v479 = vpop.f32.mrb[0].mxu0
      %480 = vmatprep.mubr.f32.mxu0 %v263
      %481 = vmatmul.mubr.f32.gmra.mrb[0].mxu0 %v262
      %v482 = vpop.f32.mrb[0].mxu0
      %v483 = vadd.f32 %v329, %v482
      %v484 = vpop.f32.mrb[0].mxu0
      %485 = vmatprep.mubr.f32.mxu0 %v265
      %486 = vmatmul.mubr.f32.gmra.mrb[0].mxu0 %v264
      %v487 = vpop.f32.mrb[0].mxu0
      %v488 = vadd.f32 %v329, %v487
      %v489 = vpop.f32.mrb[0].mxu0
      %490 = vmatprep.mubr.f32.mxu0 %v267
      %491 = vmatmul.mubr.f32.gmra.mrb[0].mxu0 %v266
      %v492 = vpop.f32.mrb[0].mxu0
      %v493 = vadd.f32 %v329, %v492
      %v494 = vpop.f32.mrb[0].mxu0
      %495 = vmatprep.mubr.f32.mxu0 %v269
      %496 = vmatmul.mubr.f32.gmra.mrb[0].mxu0 %v268
      %v497 = vpop.f32.mrb[0].mxu0
      %v498 = vadd.f32 %v329, %v497
      %v499 = vpop.f32.mrb[0].mxu0
      %500 = vmatprep.mubr.f32.mxu0 %v271
      %501 = vmatmul.mubr.f32.gmra.mrb[0].mxu0 %v270
      %v502 = vpop.f32.mrb[0].mxu0
      %v503 = vadd.f32 %v329, %v502
      %v504 = vpop.f32.mrb[0].mxu0
      %505 = vmatprep.mubr.f32.mxu0 %v273
      %506 = vmatmul.mubr.f32.gmra.mrb[0].mxu0 %v272
      %v507 = vpop.f32.mrb[0].mxu0
      %v508 = vadd.f32 %v329, %v507
      %v509 = vpop.f32.mrb[0].mxu0
      %510 = vmatprep.mubr.f32.mxu0 %v275
      %511 = vmatmul.mubr.f32.gmra.mrb[0].mxu0 %v274
      %v512 = vpop.f32.mrb[0].mxu0
      %v513 = vadd.f32 %v329, %v512
      %v514 = vpop.f32.mrb[0].mxu0
      %515 = vmatprep.mubr.f32.mxu0 %v277
      %516 = vmatmul.mubr.f32.gmra.mrb[0].mxu0 %v276
      %v517 = vpop.f32.mrb[0].mxu0
      %v518 = vadd.f32 %v329, %v517
      %v519 = vpop.f32.mrb[0].mxu0
      %520 = vmatprep.mubr.f32.mxu0 %v279
      %521 = vmatmul.mubr.f32.gmra.mrb[0].mxu0 %v278
      %v522 = vpop.f32.mrb[0].mxu0
      %v523 = vadd.f32 %v329, %v522
      %v524 = vpop.f32.mrb[0].mxu0
      %525 = vmatprep.mubr.f32.mxu0 %v281
      %526 = vmatmul.mubr.f32.gmra.mrb[0].mxu0 %v280
      %v527 = vpop.f32.mrb[0].mxu0
      %v528 = vadd.f32 %v329, %v527
      %v529 = vpop.f32.mrb[0].mxu0
      %530 = vmatprep.mubr.f32.mxu0 %v283
      %531 = vmatmul.mubr.f32.gmra.mrb[0].mxu0 %v282
      %v532 = vpop.f32.mrb[0].mxu0
      %v533 = vadd.f32 %v329, %v532
      %v534 = vpop.f32.mrb[0].mxu0
      %535 = vmatprep.mubr.f32.mxu0 %v285
      %536 = vmatmul.mubr.f32.gmra.mrb[0].mxu0 %v284
      %v537 = vpop.f32.mrb[0].mxu0
      %v538 = vadd.f32 %v329, %v537
      %v539 = vpop.f32.mrb[0].mxu0
      %540 = vmatprep.mubr.f32.mxu0 %v287
      %541 = vmatmul.mubr.f32.gmra.mrb[0].mxu0 %v286
      %v542 = vpop.f32.mrb[0].mxu0
      %v543 = vadd.f32 %v329, %v542
      %v544 = vpop.f32.mrb[0].mxu0
      %545 = vmatprep.mubr.f32.mxu0 %v289
      %546 = vmatmul.mubr.f32.gmra.mrb[0].mxu0 %v288
      %v547 = vpop.f32.mrb[0].mxu0
      %v548 = vadd.f32 %v329, %v547
      %v549 = vpop.f32.mrb[0].mxu0
      %550 = vmatprep.mubr.f32.mxu0 %v291
      %551 = vmatmul.mubr.f32.gmra.mrb[0].mxu0 %v290
      %v552 = vpop.f32.mrb[0].mxu0
      %v553 = vadd.f32 %v329, %v552
      %v554 = vpop.f32.mrb[0].mxu0
      %555 = vdwg.mxu0
      %v556 = vmax.f32 %v398, 0.0
      %v557 = vmax.f32 %v403, 0.0
      %v558 = vmax.f32 %v408, 0.0
      %v559 = vmax.f32 %v413, 0.0
      %v560 = vmax.f32 %v418, 0.0
      %v561 = vmax.f32 %v423, 0.0
      %v562 = vmax.f32 %v428, 0.0
      %v563 = vmax.f32 %v433, 0.0
      %v564 = vmax.f32 %v438, 0.0
      %v565 = vmax.f32 %v443, 0.0
      %v566 = vmax.f32 %v448, 0.0
      %v567 = vmax.f32 %v453, 0.0
      %v568 = vmax.f32 %v458, 0.0
      %v569 = vmax.f32 %v463, 0.0
      %v570 = vmax.f32 %v468, 0.0
      %v571 = vmax.f32 %v473, 0.0
      %v572 = vmax.f32 %v478, 0.0
      %v573 = vmax.f32 %v483, 0.0
      %v574 = vmax.f32 %v488, 0.0
      %v575 = vmax.f32 %v493, 0.0
      %v576 = vmax.f32 %v498, 0.0
      %v577 = vmax.f32 %v503, 0.0
      %v578 = vmax.f32 %v508, 0.0
      %v579 = vmax.f32 %v513, 0.0
      %v580 = vmax.f32 %v518, 0.0
      %v581 = vmax.f32 %v523, 0.0
      %v582 = vmax.f32 %v528, 0.0
      %v583 = vmax.f32 %v533, 0.0
      %v584 = vmax.f32 %v538, 0.0
      %v585 = vmax.f32 %v543, 0.0
      %v586 = vmax.f32 %v548, 0.0
      %v587 = vmax.f32 %v553, 0.0
      %588 = vst [vmem:[%s226] sm:$0xff] %v556
      %589 = vst [vmem:[%s226 + $0x8] sm:$0xff] %v557
      %590 = vst [vmem:[%s226 + $0x10] sm:$0xff] %v558
      %591 = vst [vmem:[%s226 + $0x18] sm:$0xff] %v559
      %592 = vst [vmem:[%s226 + $0x20] sm:$0xff] %v560
      %593 = vst [vmem:[%s226 + $0x28] sm:$0xff] %v561
      %594 = vst [vmem:[%s226 + $0x30] sm:$0xff] %v562
      %595 = vst [vmem:[%s226 + $0x38] sm:$0xff] %v563
      %596 = vst [vmem:[%s226 + $0x40] sm:$0xff] %v564
      %597 = vst [vmem:[%s226 + $0x48] sm:$0xff] %v565
      %598 = vst [vmem:[%s226 + $0x50] sm:$0xff] %v566
      %599 = vst [vmem:[%s226 + $0x58] sm:$0xff] %v567
      %600 = vst [vmem:[%s226 + $0x60] sm:$0xff] %v568
      %601 = vst [vmem:[%s226 + $0x68] sm:$0xff] %v569
      %602 = vst [vmem:[%s226 + $0x70] sm:$0xff] %v570
      %603 = vst [vmem:[%s226 + $0x78] sm:$0xff] %v571
      %604 = vst [vmem:[%s226 + $0x80] sm:$0xff] %v572
      %605 = vst [vmem:[%s226 + $0x88] sm:$0xff] %v573
      %606 = vst [vmem:[%s226 + $0x90] sm:$0xff] %v574
      %607 = vst [vmem:[%s226 + $0x98] sm:$0xff] %v575
      %608 = vst [vmem:[%s226 + $0xa0] sm:$0xff] %v576
      %609 = vst [vmem:[%s226 + $0xa8] sm:$0xff] %v577
      %610 = vst [vmem:[%s226 + $0xb0] sm:$0xff] %v578
      %611 = vst [vmem:[%s226 + $0xb8] sm:$0xff] %v579
      %612 = vst [vmem:[%s226 + $0xc0] sm:$0xff] %v580
      %613 = vst [vmem:[%s226 + $0xc8] sm:$0xff] %v581
      %614 = vst [vmem:[%s226 + $0xd0] sm:$0xff] %v582
      %615 = vst [vmem:[%s226 + $0xd8] sm:$0xff] %v583
      %616 = vst [vmem:[%s226 + $0xe0] sm:$0xff] %v584
      %617 = vst [vmem:[%s226 + $0xe8] sm:$0xff] %v585
      %618 = vst [vmem:[%s226 + $0xf0] sm:$0xff] %v586
      %619 = vst [vmem:[%s226 + $0xf8] sm:$0xff] %v587
      %s620 = smul.u32 32, %s18
      %p621 = scmp.lt.s32.totalorder %s620, 127
      %s622 = scalar_select %p621, %s620, 127
      %p623 = scmp.lt.s32.totalorder %s19, 0
      %s624 = scalar_select %p623, %s19, 0
      %s625 = sadd.s32 %s624, %s622
      %s626 = smul.addr %s625, 8
      %s627 = scalar_lea.vmem %s3, %s626
      // Predicated region
      $region33: #{dqn_forward.6} parent=31 // pred_check
        %p628 = pneg %p124
      $region34: #{dqn_forward.6} parent=31 // pred_check_branch
        %630 = sbr.rel (%p628) target = $region36
      $region35: #{dqn_forward.6} parent=31 // pred_region
        %s631 = smul.u32 32, %s18
      $region36: #{dqn_forward.6} parent=31 // pred_fallthru
        _
    $region32: #{dqn_forward.6} parent=5 // pred_fallthru
      _
    %p632 = scmp.le.s32.totalorder 2, %s9
    // Predicated region
    $region37: #{dqn_forward.6} parent=5 // pred_check
      %p633 = pneg %p632
    $region38: #{dqn_forward.6} parent=5 // pred_check_branch
      %635 = sbr.rel (%p633) target = $region40
    $region39: #{dqn_forward.6} parent=5 // pred_region
      %s636 = ssub.s32 %s9, 2
      // Predicated region
      $region41: #{dqn_forward.6} parent=39 // pred_check
        %p637 = pneg %p130
      $region42: #{dqn_forward.6} parent=39 // pred_check_branch
        %639 = sbr.rel (%p637) target = $region44
      $region43: #{dqn_forward.6} parent=39 // pred_region
        %s640 = smul.u32 32, %s20
        %p641 = scmp.lt.s32.totalorder %s640, 127
        %s642 = scalar_select %p641, %s640, 127
        %p643 = scmp.lt.s32.totalorder %s21, 0
        %s644 = scalar_select %p643, %s21, 0
        %s645 = sadd.s32 %s644, %s642
        %s646 = smul.addr %s645, 8
        %s647 = scalar_lea.vmem %s3, %s646
      $region44: #{dqn_forward.6} parent=39 // pred_fallthru
        _
    $region40: #{dqn_forward.6} parent=5 // pred_fallthru
      _
  $region6: #{dqn_forward.6} parent=0 // loop_footer
    %s13 = sadd.s32 1, %s9
  $region7: #{dqn_forward.6} parent=0 // loop_footer_branch
    %8 = sbr.rel target = $region3
  $region8: #{dqn_forward.6} parent=0 // loop_exit
    _

// kernel: dqn_forward.7
$region0: #{dqn_forward.7}
  #allocation0 [shape = 'u32[]', space=smem, size = 0x4, offset = 0x4, fixed_abs, tag = 'smem constant byte address 0x4 - core index']
  #allocation1 [shape = 'u32[144,128]{1,0:T(1,128)}', space=vmem, size = 0x12000, scoped, tag = 'internal scratch']
  %s0 = inlined_call_operand.vmem [shape: f32[168,512], index: 0, kind: input, shape index: {}]
  %s1 = inlined_call_operand.vmem [shape: f32[512,128], index: 1, kind: input, shape index: {}]
  %s2 = inlined_call_operand.vmem [shape: f32[1,128], index: 2, kind: input, shape index: {}]
  %s3 = inlined_call_operand.vmem [shape: f32[168,128], index: 3, kind: output, shape index: {}]
  %s4 = sld [smem:[#allocation0]]
  $region22: #{dqn_forward.7} parent=0
    _
  %s6 = ssub.s32 1, %s4
  %s7 = scalar_select 0, %s6, %s4
  // Predicated region
  $region2: #{dqn_forward.7} parent=0 // pred_check
    _
  $region3: #{dqn_forward.7} parent=0 // pred_check_branch
    %9 = sbr.rel (0) target = $region5
  $region4: #{dqn_forward.7} parent=0 // pred_region
    _
  $region5: #{dqn_forward.7} parent=0 // pred_fallthru
    _
  // Predicated region
  $region6: #{dqn_forward.7} parent=0 // pred_check
    _
  $region7: #{dqn_forward.7} parent=0 // pred_check_branch
    %11 = sbr.rel (0) target = $region9
  $region8: #{dqn_forward.7} parent=0 // pred_region
    _
  $region9: #{dqn_forward.7} parent=0 // pred_fallthru
    _
  // Predicated region
  $region10: #{dqn_forward.7} parent=0 // pred_check
    _
  $region11: #{dqn_forward.7} parent=0 // pred_check_branch
    %13 = sbr.rel (0) target = $region13
  $region12: #{dqn_forward.7} parent=0 // pred_region
    _
  $region13: #{dqn_forward.7} parent=0 // pred_fallthru
    _
  %v14 = vld [vmem:[%s0] sm:$0xff]
  %v15 = vld [vmem:[%s0 + $0x8] sm:$0xff]
  %v16 = vld [vmem:[%s0 + $0x10] sm:$0xff]
  %v17 = vld [vmem:[%s0 + $0x18] sm:$0xff]
  %v18 = vld [vmem:[%s0 + $0x20] sm:$0xff]
  %v19 = vld [vmem:[%s0 + $0x28] sm:$0xff]
  %v20 = vld [vmem:[%s0 + $0x30] sm:$0xff]
  %v21 = vld [vmem:[%s0 + $0x38] sm:$0xff]
  %v22 = vld [vmem:[%s0 + $0x40] sm:$0xff]
  %v23 = vld [vmem:[%s0 + $0x48] sm:$0xff]
  %v24 = vld [vmem:[%s0 + $0x50] sm:$0xff]
  %v25 = vld [vmem:[%s0 + $0x58] sm:$0xff]
  %v26 = vld [vmem:[%s0 + $0x60] sm:$0xff]
  %v27 = vld [vmem:[%s0 + $0x68] sm:$0xff]
  %v28 = vld [vmem:[%s0 + $0x70] sm:$0xff]
  %v29 = vld [vmem:[%s0 + $0x78] sm:$0xff]
  %v30 = vld [vmem:[%s0 + $0x80] sm:$0xff]
  %v31 = vld [vmem:[%s0 + $0x88] sm:$0xff]
  %v32 = vld [vmem:[%s0 + $0x90] sm:$0xff]
  %v33 = vld [vmem:[%s0 + $0x98] sm:$0xff]
  %v34 = vld [vmem:[%s0 + $0xa0] sm:$0xff]
  %v35 = vld [vmem:[%s0 + $0xa8] sm:$0xff]
  %v36 = vld [vmem:[%s0 + $0xb0] sm:$0xff]
  %v37 = vld [vmem:[%s0 + $0xb8] sm:$0xff]
  %v38 = vld [vmem:[%s0 + $0xc0] sm:$0xff]
  %v39 = vld [vmem:[%s0 + $0xc8] sm:$0xff]
  %v40 = vld [vmem:[%s0 + $0xd0] sm:$0xff]
  %v41 = vld [vmem:[%s0 + $0xd8] sm:$0xff]
  %v42 = vld [vmem:[%s0 + $0xe0] sm:$0xff]
  %v43 = vld [vmem:[%s0 + $0xe8] sm:$0xff]
  %v44 = vld [vmem:[%s0 + $0xf0] sm:$0xff]
  %v45 = vld [vmem:[%s0 + $0xf8] sm:$0xff]
  %v46 = vld [vmem:[%s0 + $0x100] sm:$0xff]
  %v47 = vld [vmem:[%s0 + $0x108] sm:$0xff]
  %v48 = vld [vmem:[%s0 + $0x110] sm:$0xff]
  %v49 = vld [vmem:[%s0 + $0x118] sm:$0xff]
  %v50 = vld [vmem:[%s0 + $0x120] sm:$0xff]
  %v51 = vld [vmem:[%s0 + $0x128] sm:$0xff]
  %v52 = vld [vmem:[%s0 + $0x130] sm:$0xff]
  %v53 = vld [vmem:[%s0 + $0x138] sm:$0xff]
  %v54 = vld [vmem:[%s0 + $0x140] sm:$0xff]
  %v55 = vld [vmem:[%s0 + $0x148] sm:$0xff]
  %v56 = vld [vmem:[%s0 + $0x150] sm:$0xff]
  %v57 = vld [vmem:[%s0 + $0x158] sm:$0xff]
  %v58 = vld [vmem:[%s0 + $0x160] sm:$0xff]
  %v59 = vld [vmem:[%s0 + $0x168] sm:$0xff]
  %v60 = vld [vmem:[%s0 + $0x170] sm:$0xff]
  %v61 = vld [vmem:[%s0 + $0x178] sm:$0xff]
  %v62 = vld [vmem:[%s0 + $0x180] sm:$0xff]
  %v63 = vld [vmem:[%s0 + $0x188] sm:$0xff]
  %v64 = vld [vmem:[%s0 + $0x190] sm:$0xff]
  %v65 = vld [vmem:[%s0 + $0x198] sm:$0xff]
  %v66 = vld [vmem:[%s0 + $0x1a0] sm:$0xff]
  %v67 = vld [vmem:[%s0 + $0x1a8] sm:$0xff]
  %v68 = vld [vmem:[%s0 + $0x1b0] sm:$0xff]
  %v69 = vld [vmem:[%s0 + $0x1b8] sm:$0xff]
  %v70 = vld [vmem:[%s0 + $0x1c0] sm:$0xff]
  %v71 = vld [vmem:[%s0 + $0x1c8] sm:$0xff]
  %v72 = vld [vmem:[%s0 + $0x1d0] sm:$0xff]
  %v73 = vld [vmem:[%s0 + $0x1d8] sm:$0xff]
  %v74 = vld [vmem:[%s0 + $0x1e0] sm:$0xff]
  %v75 = vld [vmem:[%s0 + $0x1e8] sm:$0xff]
  %v76 = vld [vmem:[%s0 + $0x1f0] sm:$0xff]
  %v77 = vld [vmem:[%s0 + $0x1f8] sm:$0xff]
  %v78 = vld [vmem:[%s0 + $0x200] sm:$0xff]
  %v79 = vld [vmem:[%s0 + $0x208] sm:$0xff]
  %v80 = vld [vmem:[%s0 + $0x210] sm:$0xff]
  %v81 = vld [vmem:[%s0 + $0x218] sm:$0xff]
  %v82 = vld [vmem:[%s0 + $0x220] sm:$0xff]
  %v83 = vld [vmem:[%s0 + $0x228] sm:$0xff]
  %v84 = vld [vmem:[%s0 + $0x230] sm:$0xff]
  %v85 = vld [vmem:[%s0 + $0x238] sm:$0xff]
  %v86 = vld [vmem:[%s0 + $0x240] sm:$0xff]
  %v87 = vld [vmem:[%s0 + $0x248] sm:$0xff]
  %v88 = vld [vmem:[%s0 + $0x250] sm:$0xff]
  %v89 = vld [vmem:[%s0 + $0x258] sm:$0xff]
  %v90 = vld [vmem:[%s0 + $0x260] sm:$0xff]
  %v91 = vld [vmem:[%s0 + $0x268] sm:$0xff]
  %v92 = vld [vmem:[%s0 + $0x270] sm:$0xff]
  %v93 = vld [vmem:[%s0 + $0x278] sm:$0xff]
  %v94 = vld [vmem:[%s0 + $0x280] sm:$0xff]
  %v95 = vld [vmem:[%s0 + $0x288] sm:$0xff]
  %v96 = vld [vmem:[%s0 + $0x290] sm:$0xff]
  %v97 = vld [vmem:[%s0 + $0x298] sm:$0xff]
  %v98 = vld [vmem:[%s1] sm:$0xff]
  %v99 = vld [vmem:[%s1 + $0x8] sm:$0xff]
  %v100 = vld [vmem:[%s1 + $0x10] sm:$0xff]
  %v101 = vld [vmem:[%s1 + $0x18] sm:$0xff]
  %v102 = vld [vmem:[%s1 + $0x20] sm:$0xff]
  %v103 = vld [vmem:[%s1 + $0x28] sm:$0xff]
  %v104 = vld [vmem:[%s1 + $0x30] sm:$0xff]
  %v105 = vld [vmem:[%s1 + $0x38] sm:$0xff]
  %v106 = vld [vmem:[%s1 + $0x40] sm:$0xff]
  %v107 = vld [vmem:[%s1 + $0x48] sm:$0xff]
  %v108 = vld [vmem:[%s1 + $0x50] sm:$0xff]
  %v109 = vld [vmem:[%s1 + $0x58] sm:$0xff]
  %v110 = vld [vmem:[%s1 + $0x60] sm:$0xff]
  %v111 = vld [vmem:[%s1 + $0x68] sm:$0xff]
  %v112 = vld [vmem:[%s1 + $0x70] sm:$0xff]
  %v113 = vld [vmem:[%s1 + $0x78] sm:$0xff]
  %v114 = vld [vmem:[%s1 + $0x80] sm:$0xff]
  %v115 = vld [vmem:[%s1 + $0x88] sm:$0xff]
  %v116 = vld [vmem:[%s1 + $0x90] sm:$0xff]
  %v117 = vld [vmem:[%s1 + $0x98] sm:$0xff]
  %v118 = vld [vmem:[%s1 + $0xa0] sm:$0xff]
  %v119 = vld [vmem:[%s1 + $0xa8] sm:$0xff]
  %v120 = vld [vmem:[%s1 + $0xb0] sm:$0xff]
  %v121 = vld [vmem:[%s1 + $0xb8] sm:$0xff]
  %v122 = vld [vmem:[%s1 + $0xc0] sm:$0xff]
  %v123 = vld [vmem:[%s1 + $0xc8] sm:$0xff]
  %v124 = vld [vmem:[%s1 + $0xd0] sm:$0xff]
  %v125 = vld [vmem:[%s1 + $0xd8] sm:$0xff]
  %v126 = vld [vmem:[%s1 + $0xe0] sm:$0xff]
  %v127 = vld [vmem:[%s1 + $0xe8] sm:$0xff]
  %v128 = vld [vmem:[%s1 + $0xf0] sm:$0xff]
  %v129 = vld [vmem:[%s1 + $0xf8] sm:$0xff]
  %v130 = vld [vmem:[%s1 + $0x100] sm:$0xff]
  %v131 = vld [vmem:[%s1 + $0x108] sm:$0xff]
  %v132 = vld [vmem:[%s1 + $0x110] sm:$0xff]
  %v133 = vld [vmem:[%s1 + $0x118] sm:$0xff]
  %v134 = vld [vmem:[%s1 + $0x120] sm:$0xff]
  %v135 = vld [vmem:[%s1 + $0x128] sm:$0xff]
  %v136 = vld [vmem:[%s1 + $0x130] sm:$0xff]
  %v137 = vld [vmem:[%s1 + $0x138] sm:$0xff]
  %v138 = vld [vmem:[%s1 + $0x140] sm:$0xff]
  %v139 = vld [vmem:[%s1 + $0x148] sm:$0xff]
  %v140 = vld [vmem:[%s1 + $0x150] sm:$0xff]
  %v141 = vld [vmem:[%s1 + $0x158] sm:$0xff]
  %v142 = vld [vmem:[%s1 + $0x160] sm:$0xff]
  %v143 = vld [vmem:[%s1 + $0x168] sm:$0xff]
  %v144 = vld [vmem:[%s1 + $0x170] sm:$0xff]
  %v145 = vld [vmem:[%s1 + $0x178] sm:$0xff]
  %v146 = vld [vmem:[%s1 + $0x180] sm:$0xff]
  %v147 = vld [vmem:[%s1 + $0x188] sm:$0xff]
  %v148 = vld [vmem:[%s1 + $0x190] sm:$0xff]
  %v149 = vld [vmem:[%s1 + $0x198] sm:$0xff]
  %v150 = vld [vmem:[%s1 + $0x1a0] sm:$0xff]
  %v151 = vld [vmem:[%s1 + $0x1a8] sm:$0xff]
  %v152 = vld [vmem:[%s1 + $0x1b0] sm:$0xff]
  %v153 = vld [vmem:[%s1 + $0x1b8] sm:$0xff]
  %v154 = vld [vmem:[%s1 + $0x1c0] sm:$0xff]
  %v155 = vld [vmem:[%s1 + $0x1c8] sm:$0xff]
  %v156 = vld [vmem:[%s1 + $0x1d0] sm:$0xff]
  %v157 = vld [vmem:[%s1 + $0x1d8] sm:$0xff]
  %v158 = vld [vmem:[%s1 + $0x1e0] sm:$0xff]
  %v159 = vld [vmem:[%s1 + $0x1e8] sm:$0xff]
  %v160 = vld [vmem:[%s1 + $0x1f0] sm:$0xff]
  %v161 = vld [vmem:[%s1 + $0x1f8] sm:$0xff]
  %v162 = vld [vmem:[%s2] sm:$0x1]
  %v164 = vlaneseq
  %v165 = vshrl.u32 %v164, 7
  %v166 = vsub.s32 0, %v165
  %v167 = vrot.slane %v162, %v166
  %169 = vmatprep.subr.mxu0 0.0
  %170 = vmatpush1.msra.mxu0 %v98
  %171 = vmatprep.subr.mxu0 0.0
  %172 = vmatpush1.msra.mxu0 %v99
  %173 = vmatprep.subr.mxu0 0.0
  %174 = vmatpush1.msra.mxu0 %v100
  %175 = vmatprep.subr.mxu0 0.0
  %176 = vmatpush1.msra.mxu0 %v101
  %177 = vmatprep.subr.mxu0 0.0
  %178 = vmatpush1.msra.mxu0 %v102
  %179 = vmatprep.subr.mxu0 0.0
  %180 = vmatpush1.msra.mxu0 %v103
  %181 = vmatprep.subr.mxu0 0.0
  %182 = vmatpush1.msra.mxu0 %v104
  %183 = vmatprep.subr.mxu0 0.0
  %184 = vmatpush1.msra.mxu0 %v105
  %185 = vmatprep.subr.mxu0 0.0
  %186 = vmatpush1.msra.mxu0 %v106
  %187 = vmatprep.subr.mxu0 0.0
  %188 = vmatpush1.msra.mxu0 %v107
  %189 = vmatprep.subr.mxu0 0.0
  %190 = vmatpush1.msra.mxu0 %v108
  %191 = vmatprep.subr.mxu0 0.0
  %192 = vmatpush1.msra.mxu0 %v109
  %193 = vmatprep.subr.mxu0 0.0
  %194 = vmatpush1.msra.mxu0 %v110
  %195 = vmatprep.subr.mxu0 0.0
  %196 = vmatpush1.msra.mxu0 %v111
  %197 = vmatprep.subr.mxu0 0.0
  %198 = vmatpush1.msra.mxu0 %v112
  %199 = vmatprep.subr.mxu0 0.0
  %200 = vmatpush1.msra.mxu0 %v113
  %201 = vmatprep.subr.mxu0 0.0
  %202 = vmatpush1.msra.mxu0 %v114
  %203 = vmatprep.subr.mxu0 0.0
  %204 = vmatpush1.msra.mxu0 %v115
  %205 = vmatprep.subr.mxu0 0.0
  %206 = vmatpush1.msra.mxu0 %v116
  %207 = vmatprep.subr.mxu0 0.0
  %208 = vmatpush1.msra.mxu0 %v117
  %209 = vmatprep.subr.mxu0 0.0
  %210 = vmatpush1.msra.mxu0 %v118
  %211 = vmatprep.subr.mxu0 0.0
  %212 = vmatpush1.msra.mxu0 %v119
  %213 = vmatprep.subr.mxu0 0.0
  %214 = vmatpush1.msra.mxu0 %v120
  %215 = vmatprep.subr.mxu0 0.0
  %216 = vmatpush1.msra.mxu0 %v121
  %217 = vmatprep.subr.mxu0 0.0
  %218 = vmatpush1.msra.mxu0 %v122
  %219 = vmatprep.subr.mxu0 0.0
  %220 = vmatpush1.msra.mxu0 %v123
  %221 = vmatprep.subr.mxu0 0.0
  %222 = vmatpush1.msra.mxu0 %v124
  %223 = vmatprep.subr.mxu0 0.0
  %224 = vmatpush1.msra.mxu0 %v125
  %225 = vmatprep.subr.mxu0 0.0
  %226 = vmatpush1.msra.mxu0 %v126
  %227 = vmatprep.subr.mxu0 0.0
  %228 = vmatpush1.msra.mxu0 %v127
  %229 = vmatprep.subr.mxu0 0.0
  %230 = vmatpush1.msra.mxu0 %v128
  %231 = vmatprep.subr.mxu0 0.0
  %232 = vmatpush1.msra.mxu0 %v129
  %233 = vmatprep.mubr.f32.mxu0 %v15
  %234 = vmatmul.mubr.f32.gmra.mrb[0].mxu0 %v14
  %v235 = vpop.f32.mrb[0].mxu0
  %v236 = vadd.f32 %v167, %v235
  %v237 = vpop.f32.mrb[0].mxu0
  %238 = vmatprep.mubr.f32.mxu0 %v19
  %239 = vmatmul.mubr.f32.gmra.mrb[0].mxu0 %v18
  %v240 = vpop.f32.mrb[0].mxu0
  %v241 = vadd.f32 %v167, %v240
  %v242 = vpop.f32.mrb[0].mxu0
  %243 = vmatprep.mubr.f32.mxu0 %v23
  %244 = vmatmul.mubr.f32.gmra.mrb[0].mxu0 %v22
  %v245 = vpop.f32.mrb[0].mxu0
  %v246 = vadd.f32 %v167, %v245
  %v247 = vpop.f32.mrb[0].mxu0
  %248 = vmatprep.mubr.f32.mxu0 %v27
  %249 = vmatmul.mubr.f32.gmra.mrb[0].mxu0 %v26
  %v250 = vpop.f32.mrb[0].mxu0
  %v251 = vadd.f32 %v167, %v250
  %v252 = vpop.f32.mrb[0].mxu0
  %253 = vmatprep.mubr.f32.mxu0 %v31
  %254 = vmatmul.mubr.f32.gmra.mrb[0].mxu0 %v30
  %v255 = vpop.f32.mrb[0].mxu0
  %v256 = vadd.f32 %v167, %v255
  %v257 = vpop.f32.mrb[0].mxu0
  %258 = vmatprep.mubr.f32.mxu0 %v35
  %259 = vmatmul.mubr.f32.gmra.mrb[0].mxu0 %v34
  %v260 = vpop.f32.mrb[0].mxu0
  %v261 = vadd.f32 %v167, %v260
  %v262 = vpop.f32.mrb[0].mxu0
  %263 = vmatprep.mubr.f32.mxu0 %v39
  %264 = vmatmul.mubr.f32.gmra.mrb[0].mxu0 %v38
  %v265 = vpop.f32.mrb[0].mxu0
  %v266 = vadd.f32 %v167, %v265
  %v267 = vpop.f32.mrb[0].mxu0
  %268 = vmatprep.mubr.f32.mxu0 %v43
  %269 = vmatmul.mubr.f32.gmra.mrb[0].mxu0 %v42
  %v270 = vpop.f32.mrb[0].mxu0
  %v271 = vadd.f32 %v167, %v270
  %v272 = vpop.f32.mrb[0].mxu0
  %273 = vmatprep.mubr.f32.mxu0 %v47
  %274 = vmatmul.mubr.f32.gmra.mrb[0].mxu0 %v46
  %v275 = vpop.f32.mrb[0].mxu0
  %v276 = vadd.f32 %v167, %v275
  %v277 = vpop.f32.mrb[0].mxu0
  %278 = vmatprep.mubr.f32.mxu0 %v51
  %279 = vmatmul.mubr.f32.gmra.mrb[0].mxu0 %v50
  %v280 = vpop.f32.mrb[0].mxu0
  %v281 = vadd.f32 %v167, %v280
  %v282 = vpop.f32.mrb[0].mxu0
  %283 = vmatprep.mubr.f32.mxu0 %v55
  %284 = vmatmul.mubr.f32.gmra.mrb[0].mxu0 %v54
  %v285 = vpop.f32.mrb[0].mxu0
  %v286 = vadd.f32 %v167, %v285
  %v287 = vpop.f32.mrb[0].mxu0
  %288 = vmatprep.mubr.f32.mxu0 %v59
  %289 = vmatmul.mubr.f32.gmra.mrb[0].mxu0 %v58
  %v290 = vpop.f32.mrb[0].mxu0
  %v291 = vadd.f32 %v167, %v290
  %v292 = vpop.f32.mrb[0].mxu0
  %293 = vmatprep.mubr.f32.mxu0 %v63
  %294 = vmatmul.mubr.f32.gmra.mrb[0].mxu0 %v62
  %v295 = vpop.f32.mrb[0].mxu0
  %v296 = vadd.f32 %v167, %v295
  %v297 = vpop.f32.mrb[0].mxu0
  %298 = vmatprep.mubr.f32.mxu0 %v67
  %299 = vmatmul.mubr.f32.gmra.mrb[0].mxu0 %v66
  %v300 = vpop.f32.mrb[0].mxu0
  %v301 = vadd.f32 %v167, %v300
  %v302 = vpop.f32.mrb[0].mxu0
  %303 = vmatprep.mubr.f32.mxu0 %v71
  %304 = vmatmul.mubr.f32.gmra.mrb[0].mxu0 %v70
  %v305 = vpop.f32.mrb[0].mxu0
  %v306 = vadd.f32 %v167, %v305
  %v307 = vpop.f32.mrb[0].mxu0
  %308 = vmatprep.mubr.f32.mxu0 %v75
  %309 = vmatmul.mubr.f32.gmra.mrb[0].mxu0 %v74
  %v310 = vpop.f32.mrb[0].mxu0
  %v311 = vadd.f32 %v167, %v310
  %v312 = vpop.f32.mrb[0].mxu0
  %313 = vmatprep.mubr.f32.mxu0 %v79
  %314 = vmatmul.mubr.f32.gmra.mrb[0].mxu0 %v78
  %v315 = vpop.f32.mrb[0].mxu0
  %v316 = vadd.f32 %v167, %v315
  %v317 = vpop.f32.mrb[0].mxu0
  %318 = vmatprep.mubr.f32.mxu0 %v83
  %319 = vmatmul.mubr.f32.gmra.mrb[0].mxu0 %v82
  %v320 = vpop.f32.mrb[0].mxu0
  %v321 = vadd.f32 %v167, %v320
  %v322 = vpop.f32.mrb[0].mxu0
  %323 = vmatprep.mubr.f32.mxu0 %v87
  %324 = vmatmul.mubr.f32.gmra.mrb[0].mxu0 %v86
  %v325 = vpop.f32.mrb[0].mxu0
  %v326 = vadd.f32 %v167, %v325
  %v327 = vpop.f32.mrb[0].mxu0
  %328 = vmatprep.mubr.f32.mxu0 %v91
  %329 = vmatmul.mubr.f32.gmra.mrb[0].mxu0 %v90
  %v330 = vpop.f32.mrb[0].mxu0
  %v331 = vadd.f32 %v167, %v330
  %v332 = vpop.f32.mrb[0].mxu0
  %333 = vmatprep.mubr.f32.mxu0 %v95
  %334 = vmatmul.mubr.f32.gmra.mrb[0].mxu0 %v94
  %v335 = vpop.f32.mrb[0].mxu0
  %v336 = vadd.f32 %v167, %v335
  %v337 = vpop.f32.mrb[0].mxu0
  %338 = vdwg.mxu0
  %339 = vmatprep.subr.mxu0 0.0
  %340 = vmatpush1.msra.mxu0 %v130
  %341 = vmatprep.subr.mxu0 0.0
  %342 = vmatpush1.msra.mxu0 %v131
  %343 = vmatprep.subr.mxu0 0.0
  %344 = vmatpush1.msra.mxu0 %v132
  %345 = vmatprep.subr.mxu0 0.0
  %346 = vmatpush1.msra.mxu0 %v133
  %347 = vmatprep.subr.mxu0 0.0
  %348 = vmatpush1.msra.mxu0 %v134
  %349 = vmatprep.subr.mxu0 0.0
  %350 = vmatpush1.msra.mxu0 %v135
  %351 = vmatprep.subr.mxu0 0.0
  %352 = vmatpush1.msra.mxu0 %v136
  %353 = vmatprep.subr.mxu0 0.0
  %354 = vmatpush1.msra.mxu0 %v137
  %355 = vmatprep.subr.mxu0 0.0
  %356 = vmatpush1.msra.mxu0 %v138
  %357 = vmatprep.subr.mxu0 0.0
  %358 = vmatpush1.msra.mxu0 %v139
  %359 = vmatprep.subr.mxu0 0.0
  %360 = vmatpush1.msra.mxu0 %v140
  %361 = vmatprep.subr.mxu0 0.0
  %362 = vmatpush1.msra.mxu0 %v141
  %363 = vmatprep.subr.mxu0 0.0
  %364 = vmatpush1.msra.mxu0 %v142
  %365 = vmatprep.subr.mxu0 0.0
  %366 = vmatpush1.msra.mxu0 %v143
  %367 = vmatprep.subr.mxu0 0.0
  %368 = vmatpush1.msra.mxu0 %v144
  %369 = vmatprep.subr.mxu0 0.0
  %370 = vmatpush1.msra.mxu0 %v145
  %371 = vmatprep.subr.mxu0 0.0
  %372 = vmatpush1.msra.mxu0 %v146
  %373 = vmatprep.subr.mxu0 0.0
  %374 = vmatpush1.msra.mxu0 %v147
  %375 = vmatprep.subr.mxu0 0.0
  %376 = vmatpush1.msra.mxu0 %v148
  %377 = vmatprep.subr.mxu0 0.0
  %378 = vmatpush1.msra.mxu0 %v149
  %379 = vmatprep.subr.mxu0 0.0
  %380 = vmatpush1.msra.mxu0 %v150
  %381 = vmatprep.subr.mxu0 0.0
  %382 = vmatpush1.msra.mxu0 %v151
  %383 = vmatprep.subr.mxu0 0.0
  %384 = vmatpush1.msra.mxu0 %v152
  %385 = vmatprep.subr.mxu0 0.0
  %386 = vmatpush1.msra.mxu0 %v153
  %387 = vmatprep.subr.mxu0 0.0
  %388 = vmatpush1.msra.mxu0 %v154
  %389 = vmatprep.subr.mxu0 0.0
  %390 = vmatpush1.msra.mxu0 %v155
  %391 = vmatprep.subr.mxu0 0.0
  %392 = vmatpush1.msra.mxu0 %v156
  %393 = vmatprep.subr.mxu0 0.0
  %394 = vmatpush1.msra.mxu0 %v157
  %395 = vmatprep.subr.mxu0 0.0
  %396 = vmatpush1.msra.mxu0 %v158
  %397 = vmatprep.subr.mxu0 0.0
  %398 = vmatpush1.msra.mxu0 %v159
  %399 = vmatprep.subr.mxu0 0.0
  %400 = vmatpush1.msra.mxu0 %v160
  %401 = vmatprep.subr.mxu0 0.0
  %402 = vmatpush1.msra.mxu0 %v161
  %403 = vmatprep.mubr.f32.mxu0 %v17
  %404 = vmatmul.mubr.f32.gmra.mrb[0].mxu0 %v16
  %v405 = vpop.f32.mrb[0].mxu0
  %v406 = vadd.f32 %v236, %v405
  %v407 = vpop.f32.mrb[0].mxu0
  %408 = vmatprep.mubr.f32.mxu0 %v21
  %409 = vmatmul.mubr.f32.gmra.mrb[0].mxu0 %v20
  %v410 = vpop.f32.mrb[0].mxu0
  %v411 = vadd.f32 %v241, %v410
  %v412 = vpop.f32.mrb[0].mxu0
  %413 = vmatprep.mubr.f32.mxu0 %v25
  %414 = vmatmul.mubr.f32.gmra.mrb[0].mxu0 %v24
  %v415 = vpop.f32.mrb[0].mxu0
  %v416 = vadd.f32 %v246, %v415
  %v417 = vpop.f32.mrb[0].mxu0
  %418 = vmatprep.mubr.f32.mxu0 %v29
  %419 = vmatmul.mubr.f32.gmra.mrb[0].mxu0 %v28
  %v420 = vpop.f32.mrb[0].mxu0
  %v421 = vadd.f32 %v251, %v420
  %v422 = vpop.f32.mrb[0].mxu0
  %423 = vmatprep.mubr.f32.mxu0 %v33
  %424 = vmatmul.mubr.f32.gmra.mrb[0].mxu0 %v32
  %v425 = vpop.f32.mrb[0].mxu0
  %v426 = vadd.f32 %v256, %v425
  %v427 = vpop.f32.mrb[0].mxu0
  %428 = vmatprep.mubr.f32.mxu0 %v37
  %429 = vmatmul.mubr.f32.gmra.mrb[0].mxu0 %v36
  %v430 = vpop.f32.mrb[0].mxu0
  %v431 = vadd.f32 %v261, %v430
  %v432 = vpop.f32.mrb[0].mxu0
  %433 = vmatprep.mubr.f32.mxu0 %v41
  %434 = vmatmul.mubr.f32.gmra.mrb[0].mxu0 %v40
  %v435 = vpop.f32.mrb[0].mxu0
  %v436 = vadd.f32 %v266, %v435
  %v437 = vpop.f32.mrb[0].mxu0
  %438 = vmatprep.mubr.f32.mxu0 %v45
  %439 = vmatmul.mubr.f32.gmra.mrb[0].mxu0 %v44
  %v440 = vpop.f32.mrb[0].mxu0
  %v441 = vadd.f32 %v271, %v440
  %v442 = vpop.f32.mrb[0].mxu0
  %443 = vmatprep.mubr.f32.mxu0 %v49
  %444 = vmatmul.mubr.f32.gmra.mrb[0].mxu0 %v48
  %v445 = vpop.f32.mrb[0].mxu0
  %v446 = vadd.f32 %v276, %v445
  %v447 = vpop.f32.mrb[0].mxu0
  %448 = vmatprep.mubr.f32.mxu0 %v53
  %449 = vmatmul.mubr.f32.gmra.mrb[0].mxu0 %v52
  %v450 = vpop.f32.mrb[0].mxu0
  %v451 = vadd.f32 %v281, %v450
  %v452 = vpop.f32.mrb[0].mxu0
  %453 = vmatprep.mubr.f32.mxu0 %v57
  %454 = vmatmul.mubr.f32.gmra.mrb[0].mxu0 %v56
  %v455 = vpop.f32.mrb[0].mxu0
  %v456 = vadd.f32 %v286, %v455
  %v457 = vpop.f32.mrb[0].mxu0
  %458 = vmatprep.mubr.f32.mxu0 %v61
  %459 = vmatmul.mubr.f32.gmra.mrb[0].mxu0 %v60
  %v460 = vpop.f32.mrb[0].mxu0
  %v461 = vadd.f32 %v291, %v460
  %v462 = vpop.f32.mrb[0].mxu0
  %463 = vmatprep.mubr.f32.mxu0 %v65
  %464 = vmatmul.mubr.f32.gmra.mrb[0].mxu0 %v64
  %v465 = vpop.f32.mrb[0].mxu0
  %v466 = vadd.f32 %v296, %v465
  %v467 = vpop.f32.mrb[0].mxu0
  %468 = vmatprep.mubr.f32.mxu0 %v69
  %469 = vmatmul.mubr.f32.gmra.mrb[0].mxu0 %v68
  %v470 = vpop.f32.mrb[0].mxu0
  %v471 = vadd.f32 %v301, %v470
  %v472 = vpop.f32.mrb[0].mxu0
  %473 = vmatprep.mubr.f32.mxu0 %v73
  %474 = vmatmul.mubr.f32.gmra.mrb[0].mxu0 %v72
  %v475 = vpop.f32.mrb[0].mxu0
  %v476 = vadd.f32 %v306, %v475
  %v477 = vpop.f32.mrb[0].mxu0
  %478 = vmatprep.mubr.f32.mxu0 %v77
  %479 = vmatmul.mubr.f32.gmra.mrb[0].mxu0 %v76
  %v480 = vpop.f32.mrb[0].mxu0
  %v481 = vadd.f32 %v311, %v480
  %v482 = vpop.f32.mrb[0].mxu0
  %483 = vmatprep.mubr.f32.mxu0 %v81
  %484 = vmatmul.mubr.f32.gmra.mrb[0].mxu0 %v80
  %v485 = vpop.f32.mrb[0].mxu0
  %v486 = vadd.f32 %v316, %v485
  %v487 = vpop.f32.mrb[0].mxu0
  %488 = vmatprep.mubr.f32.mxu0 %v85
  %489 = vmatmul.mubr.f32.gmra.mrb[0].mxu0 %v84
  %v490 = vpop.f32.mrb[0].mxu0
  %v491 = vadd.f32 %v321, %v490
  %v492 = vpop.f32.mrb[0].mxu0
  %493 = vmatprep.mubr.f32.mxu0 %v89
  %494 = vmatmul.mubr.f32.gmra.mrb[0].mxu0 %v88
  %v495 = vpop.f32.mrb[0].mxu0
  %v496 = vadd.f32 %v326, %v495
  %v497 = vpop.f32.mrb[0].mxu0
  %498 = vmatprep.mubr.f32.mxu0 %v93
  %499 = vmatmul.mubr.f32.gmra.mrb[0].mxu0 %v92
  %v500 = vpop.f32.mrb[0].mxu0
  %v501 = vadd.f32 %v331, %v500
  %v502 = vpop.f32.mrb[0].mxu0
  %503 = vmatprep.mubr.f32.mxu0 %v97
  %504 = vmatmul.mubr.f32.gmra.mrb[0].mxu0 %v96
  %v505 = vpop.f32.mrb[0].mxu0
  %v506 = vadd.f32 %v336, %v505
  %v507 = vpop.f32.mrb[0].mxu0
  %508 = vdwg.mxu0
  %v509 = vmax.f32 %v406, 0.0
  %v510 = vmax.f32 %v411, 0.0
  %v511 = vmax.f32 %v416, 0.0
  %v512 = vmax.f32 %v421, 0.0
  %v513 = vmax.f32 %v426, 0.0
  %v514 = vmax.f32 %v431, 0.0
  %v515 = vmax.f32 %v436, 0.0
  %v516 = vmax.f32 %v441, 0.0
  %v517 = vmax.f32 %v446, 0.0
  %v518 = vmax.f32 %v451, 0.0
  %v519 = vmax.f32 %v456, 0.0
  %v520 = vmax.f32 %v461, 0.0
  %v521 = vmax.f32 %v466, 0.0
  %v522 = vmax.f32 %v471, 0.0
  %v523 = vmax.f32 %v476, 0.0
  %v524 = vmax.f32 %v481, 0.0
  %v525 = vmax.f32 %v486, 0.0
  %v526 = vmax.f32 %v491, 0.0
  %v527 = vmax.f32 %v496, 0.0
  %v528 = vmax.f32 %v501, 0.0
  %v529 = vmax.f32 %v506, 0.0
  %530 = vst [vmem:[%s3] sm:$0xff] %v509
  %531 = vst [vmem:[%s3 + $0x8] sm:$0xff] %v510
  %532 = vst [vmem:[%s3 + $0x10] sm:$0xff] %v511
  %533 = vst [vmem:[%s3 + $0x18] sm:$0xff] %v512
  %534 = vst [vmem:[%s3 + $0x20] sm:$0xff] %v513
  %535 = vst [vmem:[%s3 + $0x28] sm:$0xff] %v514
  %536 = vst [vmem:[%s3 + $0x30] sm:$0xff] %v515
  %537 = vst [vmem:[%s3 + $0x38] sm:$0xff] %v516
  %538 = vst [vmem:[%s3 + $0x40] sm:$0xff] %v517
  %539 = vst [vmem:[%s3 + $0x48] sm:$0xff] %v518
  %540 = vst [vmem:[%s3 + $0x50] sm:$0xff] %v519
  %541 = vst [vmem:[%s3 + $0x58] sm:$0xff] %v520
  %542 = vst [vmem:[%s3 + $0x60] sm:$0xff] %v521
  %543 = vst [vmem:[%s3 + $0x68] sm:$0xff] %v522
  %544 = vst [vmem:[%s3 + $0x70] sm:$0xff] %v523
  %545 = vst [vmem:[%s3 + $0x78] sm:$0xff] %v524
  %546 = vst [vmem:[%s3 + $0x80] sm:$0xff] %v525
  %547 = vst [vmem:[%s3 + $0x88] sm:$0xff] %v526
  %548 = vst [vmem:[%s3 + $0x90] sm:$0xff] %v527
  %549 = vst [vmem:[%s3 + $0x98] sm:$0xff] %v528
  %550 = vst [vmem:[%s3 + $0xa0] sm:$0xff] %v529
  // Predicated region
  $region14: #{dqn_forward.7} parent=0 // pred_check
    _
  $region15: #{dqn_forward.7} parent=0 // pred_check_branch
    %552 = sbr.rel (0) target = $region17
  $region16: #{dqn_forward.7} parent=0 // pred_region
    _
  $region17: #{dqn_forward.7} parent=0 // pred_fallthru
    _
  // Predicated region
  $region18: #{dqn_forward.7} parent=0 // pred_check
    _
  $region19: #{dqn_forward.7} parent=0 // pred_check_branch
    %554 = sbr.rel (0) target = $region21
  $region20: #{dqn_forward.7} parent=0 // pred_region
    _
  $region21: #{dqn_forward.7} parent=0 // pred_fallthru
    _

// kernel: dqn_forward.8
$region0: #{dqn_forward.8}
  #allocation0 [shape = 'u32[]', space=smem, size = 0x4, offset = 0x4, fixed_abs, tag = 'smem constant byte address 0x4 - core index']
  #allocation1 [shape = 'u32[144,128]{1,0:T(1,128)}', space=vmem, size = 0x12000, scoped, tag = 'internal scratch']
  %s0 = inlined_call_operand.vmem [shape: f32[104,576], index: 0, kind: input, shape index: {}]
  %s1 = inlined_call_operand.vmem [shape: f32[576,128], index: 1, kind: input, shape index: {}]
  %s2 = inlined_call_operand.vmem [shape: f32[1,128], index: 2, kind: input, shape index: {}]
  %s3 = inlined_call_operand.vmem [shape: f32[104,128], index: 3, kind: output, shape index: {}]
  %s4 = sld [smem:[#allocation0]]
  $region22: #{dqn_forward.8} parent=0
    _
  %s6 = ssub.s32 1, %s4
  %s7 = scalar_select 0, %s6, %s4
  // Predicated region
  $region2: #{dqn_forward.8} parent=0 // pred_check
    _
  $region3: #{dqn_forward.8} parent=0 // pred_check_branch
    %9 = sbr.rel (0) target = $region5
  $region4: #{dqn_forward.8} parent=0 // pred_region
    _
  $region5: #{dqn_forward.8} parent=0 // pred_fallthru
    _
  // Predicated region
  $region6: #{dqn_forward.8} parent=0 // pred_check
    _
  $region7: #{dqn_forward.8} parent=0 // pred_check_branch
    %11 = sbr.rel (0) target = $region9
  $region8: #{dqn_forward.8} parent=0 // pred_region
    _
  $region9: #{dqn_forward.8} parent=0 // pred_fallthru
    _
  // Predicated region
  $region10: #{dqn_forward.8} parent=0 // pred_check
    _
  $region11: #{dqn_forward.8} parent=0 // pred_check_branch
    %13 = sbr.rel (0) target = $region13
  $region12: #{dqn_forward.8} parent=0 // pred_region
    _
  $region13: #{dqn_forward.8} parent=0 // pred_fallthru
    _
  %v14 = vld [vmem:[%s0] sm:$0xff]
  %v15 = vld [vmem:[%s0 + $0x8] sm:$0xff]
  %v16 = vld [vmem:[%s0 + $0x10] sm:$0xff]
  %v17 = vld [vmem:[%s0 + $0x18] sm:$0xff]
  %v18 = vld [vmem:[%s0 + $0x20] sm:$0xff]
  %v19 = vld [vmem:[%s0 + $0x28] sm:$0xff]
  %v20 = vld [vmem:[%s0 + $0x30] sm:$0xff]
  %v21 = vld [vmem:[%s0 + $0x38] sm:$0xff]
  %v22 = vld [vmem:[%s0 + $0x40] sm:$0xff]
  %v23 = vld [vmem:[%s0 + $0x48] sm:$0xff]
  %v24 = vld [vmem:[%s0 + $0x50] sm:$0xff]
  %v25 = vld [vmem:[%s0 + $0x58] sm:$0xff]
  %v26 = vld [vmem:[%s0 + $0x60] sm:$0xff]
  %v27 = vld [vmem:[%s0 + $0x68] sm:$0xff]
  %v28 = vld [vmem:[%s0 + $0x70] sm:$0xff]
  %v29 = vld [vmem:[%s0 + $0x78] sm:$0xff]
  %v30 = vld [vmem:[%s0 + $0x80] sm:$0xff]
  %v31 = vld [vmem:[%s0 + $0x88] sm:$0xff]
  %v32 = vld [vmem:[%s0 + $0x90] sm:$0xff]
  %v33 = vld [vmem:[%s0 + $0x98] sm:$0xff]
  %v34 = vld [vmem:[%s0 + $0xa0] sm:$0xff]
  %v35 = vld [vmem:[%s0 + $0xa8] sm:$0xff]
  %v36 = vld [vmem:[%s0 + $0xb0] sm:$0xff]
  %v37 = vld [vmem:[%s0 + $0xb8] sm:$0xff]
  %v38 = vld [vmem:[%s0 + $0xc0] sm:$0xff]
  %v39 = vld [vmem:[%s0 + $0xc8] sm:$0xff]
  %v40 = vld [vmem:[%s0 + $0xd0] sm:$0xff]
  %v41 = vld [vmem:[%s0 + $0xd8] sm:$0xff]
  %v42 = vld [vmem:[%s0 + $0xe0] sm:$0xff]
  %v43 = vld [vmem:[%s0 + $0xe8] sm:$0xff]
  %v44 = vld [vmem:[%s0 + $0xf0] sm:$0xff]
  %v45 = vld [vmem:[%s0 + $0xf8] sm:$0xff]
  %v46 = vld [vmem:[%s0 + $0x100] sm:$0xff]
  %v47 = vld [vmem:[%s0 + $0x108] sm:$0xff]
  %v48 = vld [vmem:[%s0 + $0x110] sm:$0xff]
  %v49 = vld [vmem:[%s0 + $0x118] sm:$0xff]
  %v50 = vld [vmem:[%s0 + $0x120] sm:$0xff]
  %v51 = vld [vmem:[%s0 + $0x128] sm:$0xff]
  %v52 = vld [vmem:[%s0 + $0x130] sm:$0xff]
  %v53 = vld [vmem:[%s0 + $0x138] sm:$0xff]
  %v54 = vld [vmem:[%s0 + $0x140] sm:$0xff]
  %v55 = vld [vmem:[%s0 + $0x148] sm:$0xff]
  %v56 = vld [vmem:[%s0 + $0x150] sm:$0xff]
  %v57 = vld [vmem:[%s0 + $0x158] sm:$0xff]
  %v58 = vld [vmem:[%s0 + $0x160] sm:$0xff]
  %v59 = vld [vmem:[%s0 + $0x168] sm:$0xff]
  %v60 = vld [vmem:[%s0 + $0x170] sm:$0xff]
  %v61 = vld [vmem:[%s0 + $0x178] sm:$0xff]
  %v62 = vld [vmem:[%s0 + $0x180] sm:$0xff]
  %v63 = vld [vmem:[%s0 + $0x188] sm:$0xff]
  %v64 = vld [vmem:[%s0 + $0x190] sm:$0xff]
  %v65 = vld [vmem:[%s0 + $0x198] sm:$0xff]
  %v66 = vld [vmem:[%s0 + $0x1a0] sm:$0xff]
  %v67 = vld [vmem:[%s0 + $0x1a8] sm:$0xff]
  %v68 = vld [vmem:[%s0 + $0x1b0] sm:$0xff]
  %v69 = vld [vmem:[%s0 + $0x1b8] sm:$0xff]
  %v70 = vld [vmem:[%s0 + $0x1c0] sm:$0xff]
  %v71 = vld [vmem:[%s0 + $0x1c8] sm:$0xff]
  %v72 = vld [vmem:[%s0 + $0x1d0] sm:$0xff]
  %v73 = vld [vmem:[%s0 + $0x1d8] sm:$0xff]
  %v74 = vld [vmem:[%s0 + $0x1e0] sm:$0xff]
  %v75 = vld [vmem:[%s0 + $0x1e8] sm:$0xff]
  %v76 = vld [vmem:[%s0 + $0x1f0] sm:$0xff]
  %v77 = vld [vmem:[%s0 + $0x1f8] sm:$0xff]
  %v78 = vld [vmem:[%s0 + $0x200] sm:$0xff]
  %v79 = vld [vmem:[%s1] sm:$0xff]
  %v80 = vld [vmem:[%s1 + $0x8] sm:$0xff]
  %v81 = vld [vmem:[%s1 + $0x10] sm:$0xff]
  %v82 = vld [vmem:[%s1 + $0x18] sm:$0xff]
  %v83 = vld [vmem:[%s1 + $0x20] sm:$0xff]
  %v84 = vld [vmem:[%s1 + $0x28] sm:$0xff]
  %v85 = vld [vmem:[%s1 + $0x30] sm:$0xff]
  %v86 = vld [vmem:[%s1 + $0x38] sm:$0xff]
  %v87 = vld [vmem:[%s1 + $0x40] sm:$0xff]
  %v88 = vld [vmem:[%s1 + $0x48] sm:$0xff]
  %v89 = vld [vmem:[%s1 + $0x50] sm:$0xff]
  %v90 = vld [vmem:[%s1 + $0x58] sm:$0xff]
  %v91 = vld [vmem:[%s1 + $0x60] sm:$0xff]
  %v92 = vld [vmem:[%s1 + $0x68] sm:$0xff]
  %v93 = vld [vmem:[%s1 + $0x70] sm:$0xff]
  %v94 = vld [vmem:[%s1 + $0x78] sm:$0xff]
  %v95 = vld [vmem:[%s1 + $0x80] sm:$0xff]
  %v96 = vld [vmem:[%s1 + $0x88] sm:$0xff]
  %v97 = vld [vmem:[%s1 + $0x90] sm:$0xff]
  %v98 = vld [vmem:[%s1 + $0x98] sm:$0xff]
  %v99 = vld [vmem:[%s1 + $0xa0] sm:$0xff]
  %v100 = vld [vmem:[%s1 + $0xa8] sm:$0xff]
  %v101 = vld [vmem:[%s1 + $0xb0] sm:$0xff]
  %v102 = vld [vmem:[%s1 + $0xb8] sm:$0xff]
  %v103 = vld [vmem:[%s1 + $0xc0] sm:$0xff]
  %v104 = vld [vmem:[%s1 + $0xc8] sm:$0xff]
  %v105 = vld [vmem:[%s1 + $0xd0] sm:$0xff]
  %v106 = vld [vmem:[%s1 + $0xd8] sm:$0xff]
  %v107 = vld [vmem:[%s1 + $0xe0] sm:$0xff]
  %v108 = vld [vmem:[%s1 + $0xe8] sm:$0xff]
  %v109 = vld [vmem:[%s1 + $0xf0] sm:$0xff]
  %v110 = vld [vmem:[%s1 + $0xf8] sm:$0xff]
  %v111 = vld [vmem:[%s1 + $0x100] sm:$0xff]
  %v112 = vld [vmem:[%s1 + $0x108] sm:$0xff]
  %v113 = vld [vmem:[%s1 + $0x110] sm:$0xff]
  %v114 = vld [vmem:[%s1 + $0x118] sm:$0xff]
  %v115 = vld [vmem:[%s1 + $0x120] sm:$0xff]
  %v116 = vld [vmem:[%s1 + $0x128] sm:$0xff]
  %v117 = vld [vmem:[%s1 + $0x130] sm:$0xff]
  %v118 = vld [vmem:[%s1 + $0x138] sm:$0xff]
  %v119 = vld [vmem:[%s1 + $0x140] sm:$0xff]
  %v120 = vld [vmem:[%s1 + $0x148] sm:$0xff]
  %v121 = vld [vmem:[%s1 + $0x150] sm:$0xff]
  %v122 = vld [vmem:[%s1 + $0x158] sm:$0xff]
  %v123 = vld [vmem:[%s1 + $0x160] sm:$0xff]
  %v124 = vld [vmem:[%s1 + $0x168] sm:$0xff]
  %v125 = vld [vmem:[%s1 + $0x170] sm:$0xff]
  %v126 = vld [vmem:[%s1 + $0x178] sm:$0xff]
  %v127 = vld [vmem:[%s1 + $0x180] sm:$0xff]
  %v128 = vld [vmem:[%s1 + $0x188] sm:$0xff]
  %v129 = vld [vmem:[%s1 + $0x190] sm:$0xff]
  %v130 = vld [vmem:[%s1 + $0x198] sm:$0xff]
  %v131 = vld [vmem:[%s1 + $0x1a0] sm:$0xff]
  %v132 = vld [vmem:[%s1 + $0x1a8] sm:$0xff]
  %v133 = vld [vmem:[%s1 + $0x1b0] sm:$0xff]
  %v134 = vld [vmem:[%s1 + $0x1b8] sm:$0xff]
  %v135 = vld [vmem:[%s1 + $0x1c0] sm:$0xff]
  %v136 = vld [vmem:[%s1 + $0x1c8] sm:$0xff]
  %v137 = vld [vmem:[%s1 + $0x1d0] sm:$0xff]
  %v138 = vld [vmem:[%s1 + $0x1d8] sm:$0xff]
  %v139 = vld [vmem:[%s1 + $0x1e0] sm:$0xff]
  %v140 = vld [vmem:[%s1 + $0x1e8] sm:$0xff]
  %v141 = vld [vmem:[%s1 + $0x1f0] sm:$0xff]
  %v142 = vld [vmem:[%s1 + $0x1f8] sm:$0xff]
  %v143 = vld [vmem:[%s1 + $0x200] sm:$0xff]
  %v144 = vld [vmem:[%s1 + $0x208] sm:$0xff]
  %v145 = vld [vmem:[%s1 + $0x210] sm:$0xff]
  %v146 = vld [vmem:[%s1 + $0x218] sm:$0xff]
  %v147 = vld [vmem:[%s1 + $0x220] sm:$0xff]
  %v148 = vld [vmem:[%s1 + $0x228] sm:$0xff]
  %v149 = vld [vmem:[%s1 + $0x230] sm:$0xff]
  %v150 = vld [vmem:[%s1 + $0x238] sm:$0xff]
  %v151 = vld [vmem:[%s2] sm:$0x1]
  %v153 = vlaneseq
  %v154 = vshrl.u32 %v153, 7
  %v155 = vsub.s32 0, %v154
  %v156 = vrot.slane %v151, %v155
  %vm158 = vcmask 523264
  %v160 = vsel %vm158, %v18, 0
  %v163 = vsel %vm158, %v23, 0
  %v166 = vsel %vm158, %v28, 0
  %v169 = vsel %vm158, %v33, 0
  %v172 = vsel %vm158, %v38, 0
  %v175 = vsel %vm158, %v43, 0
  %v178 = vsel %vm158, %v48, 0
  %v181 = vsel %vm158, %v53, 0
  %v184 = vsel %vm158, %v58, 0
  %v187 = vsel %vm158, %v63, 0
  %v190 = vsel %vm158, %v68, 0
  %v193 = vsel %vm158, %v73, 0
  %v196 = vsel %vm158, %v78, 0
  %198 = vmatprep.subr.mxu0 0.0
  %199 = vmatpush1.msra.mxu0 %v79
  %200 = vmatprep.subr.mxu0 0.0
  %201 = vmatpush1.msra.mxu0 %v80
  %202 = vmatprep.subr.mxu0 0.0
  %203 = vmatpush1.msra.mxu0 %v81
  %204 = vmatprep.subr.mxu0 0.0
  %205 = vmatpush1.msra.mxu0 %v82
  %206 = vmatprep.subr.mxu0 0.0
  %207 = vmatpush1.msra.mxu0 %v83
  %208 = vmatprep.subr.mxu0 0.0
  %209 = vmatpush1.msra.mxu0 %v84
  %210 = vmatprep.subr.mxu0 0.0
  %211 = vmatpush1.msra.mxu0 %v85
  %212 = vmatprep.subr.mxu0 0.0
  %213 = vmatpush1.msra.mxu0 %v86
  %214 = vmatprep.subr.mxu0 0.0
  %215 = vmatpush1.msra.mxu0 %v87
  %216 = vmatprep.subr.mxu0 0.0
  %217 = vmatpush1.msra.mxu0 %v88
  %218 = vmatprep.subr.mxu0 0.0
  %219 = vmatpush1.msra.mxu0 %v89
  %220 = vmatprep.subr.mxu0 0.0
  %221 = vmatpush1.msra.mxu0 %v90
  %222 = vmatprep.subr.mxu0 0.0
  %223 = vmatpush1.msra.mxu0 %v91
  %224 = vmatprep.subr.mxu0 0.0
  %225 = vmatpush1.msra.mxu0 %v92
  %226 = vmatprep.subr.mxu0 0.0
  %227 = vmatpush1.msra.mxu0 %v93
  %228 = vmatprep.subr.mxu0 0.0
  %229 = vmatpush1.msra.mxu0 %v94
  %230 = vmatprep.subr.mxu0 0.0
  %231 = vmatpush1.msra.mxu0 %v95
  %232 = vmatprep.subr.mxu0 0.0
  %233 = vmatpush1.msra.mxu0 %v96
  %234 = vmatprep.subr.mxu0 0.0
  %235 = vmatpush1.msra.mxu0 %v97
  %236 = vmatprep.subr.mxu0 0.0
  %237 = vmatpush1.msra.mxu0 %v98
  %238 = vmatprep.subr.mxu0 0.0
  %239 = vmatpush1.msra.mxu0 %v99
  %240 = vmatprep.subr.mxu0 0.0
  %241 = vmatpush1.msra.mxu0 %v100
  %242 = vmatprep.subr.mxu0 0.0
  %243 = vmatpush1.msra.mxu0 %v101
  %244 = vmatprep.subr.mxu0 0.0
  %245 = vmatpush1.msra.mxu0 %v102
  %246 = vmatprep.subr.mxu0 0.0
  %247 = vmatpush1.msra.mxu0 %v103
  %248 = vmatprep.subr.mxu0 0.0
  %249 = vmatpush1.msra.mxu0 %v104
  %250 = vmatprep.subr.mxu0 0.0
  %251 = vmatpush1.msra.mxu0 %v105
  %252 = vmatprep.subr.mxu0 0.0
  %253 = vmatpush1.msra.mxu0 %v106
  %254 = vmatprep.subr.mxu0 0.0
  %255 = vmatpush1.msra.mxu0 %v107
  %256 = vmatprep.subr.mxu0 0.0
  %257 = vmatpush1.msra.mxu0 %v108
  %258 = vmatprep.subr.mxu0 0.0
  %259 = vmatpush1.msra.mxu0 %v109
  %260 = vmatprep.subr.mxu0 0.0
  %261 = vmatpush1.msra.mxu0 %v110
  %262 = vmatprep.mubr.f32.mxu0 %v15
  %263 = vmatmul.mubr.f32.gmra.mrb[0].mxu0 %v14
  %v264 = vpop.f32.mrb[0].mxu0
  %v265 = vadd.f32 %v156, %v264
  %v266 = vpop.f32.mrb[0].mxu0
  %267 = vmatprep.mubr.f32.mxu0 %v20
  %268 = vmatmul.mubr.f32.gmra.mrb[0].mxu0 %v19
  %v269 = vpop.f32.mrb[0].mxu0
  %v270 = vadd.f32 %v156, %v269
  %v271 = vpop.f32.mrb[0].mxu0
  %272 = vmatprep.mubr.f32.mxu0 %v25
  %273 = vmatmul.mubr.f32.gmra.mrb[0].mxu0 %v24
  %v274 = vpop.f32.mrb[0].mxu0
  %v275 = vadd.f32 %v156, %v274
  %v276 = vpop.f32.mrb[0].mxu0
  %277 = vmatprep.mubr.f32.mxu0 %v30
  %278 = vmatmul.mubr.f32.gmra.mrb[0].mxu0 %v29
  %v279 = vpop.f32.mrb[0].mxu0
  %v280 = vadd.f32 %v156, %v279
  %v281 = vpop.f32.mrb[0].mxu0
  %282 = vmatprep.mubr.f32.mxu0 %v35
  %283 = vmatmul.mubr.f32.gmra.mrb[0].mxu0 %v34
  %v284 = vpop.f32.mrb[0].mxu0
  %v285 = vadd.f32 %v156, %v284
  %v286 = vpop.f32.mrb[0].mxu0
  %287 = vmatprep.mubr.f32.mxu0 %v40
  %288 = vmatmul.mubr.f32.gmra.mrb[0].mxu0 %v39
  %v289 = vpop.f32.mrb[0].mxu0
  %v290 = vadd.f32 %v156, %v289
  %v291 = vpop.f32.mrb[0].mxu0
  %292 = vmatprep.mubr.f32.mxu0 %v45
  %293 = vmatmul.mubr.f32.gmra.mrb[0].mxu0 %v44
  %v294 = vpop.f32.mrb[0].mxu0
  %v295 = vadd.f32 %v156, %v294
  %v296 = vpop.f32.mrb[0].mxu0
  %297 = vmatprep.mubr.f32.mxu0 %v50
  %298 = vmatmul.mubr.f32.gmra.mrb[0].mxu0 %v49
  %v299 = vpop.f32.mrb[0].mxu0
  %v300 = vadd.f32 %v156, %v299
  %v301 = vpop.f32.mrb[0].mxu0
  %302 = vmatprep.mubr.f32.mxu0 %v55
  %303 = vmatmul.mubr.f32.gmra.mrb[0].mxu0 %v54
  %v304 = vpop.f32.mrb[0].mxu0
  %v305 = vadd.f32 %v156, %v304
  %v306 = vpop.f32.mrb[0].mxu0
  %307 = vmatprep.mubr.f32.mxu0 %v60
  %308 = vmatmul.mubr.f32.gmra.mrb[0].mxu0 %v59
  %v309 = vpop.f32.mrb[0].mxu0
  %v310 = vadd.f32 %v156, %v309
  %v311 = vpop.f32.mrb[0].mxu0
  %312 = vmatprep.mubr.f32.mxu0 %v65
  %313 = vmatmul.mubr.f32.gmra.mrb[0].mxu0 %v64
  %v314 = vpop.f32.mrb[0].mxu0
  %v315 = vadd.f32 %v156, %v314
  %v316 = vpop.f32.mrb[0].mxu0
  %317 = vmatprep.mubr.f32.mxu0 %v70
  %318 = vmatmul.mubr.f32.gmra.mrb[0].mxu0 %v69
  %v319 = vpop.f32.mrb[0].mxu0
  %v320 = vadd.f32 %v156, %v319
  %v321 = vpop.f32.mrb[0].mxu0
  %322 = vmatprep.mubr.f32.mxu0 %v75
  %323 = vmatmul.mubr.f32.gmra.mrb[0].mxu0 %v74
  %v324 = vpop.f32.mrb[0].mxu0
  %v325 = vadd.f32 %v156, %v324
  %v326 = vpop.f32.mrb[0].mxu0
  %327 = vdwg.mxu0
  %328 = vmatprep.subr.mxu0 0.0
  %329 = vmatpush1.msra.mxu0 %v111
  %330 = vmatprep.subr.mxu0 0.0
  %331 = vmatpush1.msra.mxu0 %v112
  %332 = vmatprep.subr.mxu0 0.0
  %333 = vmatpush1.msra.mxu0 %v113
  %334 = vmatprep.subr.mxu0 0.0
  %335 = vmatpush1.msra.mxu0 %v114
  %336 = vmatprep.subr.mxu0 0.0
  %337 = vmatpush1.msra.mxu0 %v115
  %338 = vmatprep.subr.mxu0 0.0
  %339 = vmatpush1.msra.mxu0 %v116
  %340 = vmatprep.subr.mxu0 0.0
  %341 = vmatpush1.msra.mxu0 %v117
  %342 = vmatprep.subr.mxu0 0.0
  %343 = vmatpush1.msra.mxu0 %v118
  %344 = vmatprep.subr.mxu0 0.0
  %345 = vmatpush1.msra.mxu0 %v119
  %346 = vmatprep.subr.mxu0 0.0
  %347 = vmatpush1.msra.mxu0 %v120
  %348 = vmatprep.subr.mxu0 0.0
  %349 = vmatpush1.msra.mxu0 %v121
  %350 = vmatprep.subr.mxu0 0.0
  %351 = vmatpush1.msra.mxu0 %v122
  %352 = vmatprep.subr.mxu0 0.0
  %353 = vmatpush1.msra.mxu0 %v123
  %354 = vmatprep.subr.mxu0 0.0
  %355 = vmatpush1.msra.mxu0 %v124
  %356 = vmatprep.subr.mxu0 0.0
  %357 = vmatpush1.msra.mxu0 %v125
  %358 = vmatprep.subr.mxu0 0.0
  %359 = vmatpush1.msra.mxu0 %v126
  %360 = vmatprep.subr.mxu0 0.0
  %361 = vmatpush1.msra.mxu0 %v127
  %362 = vmatprep.subr.mxu0 0.0
  %363 = vmatpush1.msra.mxu0 %v128
  %364 = vmatprep.subr.mxu0 0.0
  %365 = vmatpush1.msra.mxu0 %v129
  %366 = vmatprep.subr.mxu0 0.0
  %367 = vmatpush1.msra.mxu0 %v130
  %368 = vmatprep.subr.mxu0 0.0
  %369 = vmatpush1.msra.mxu0 %v131
  %370 = vmatprep.subr.mxu0 0.0
  %371 = vmatpush1.msra.mxu0 %v132
  %372 = vmatprep.subr.mxu0 0.0
  %373 = vmatpush1.msra.mxu0 %v133
  %374 = vmatprep.subr.mxu0 0.0
  %375 = vmatpush1.msra.mxu0 %v134
  %376 = vmatprep.subr.mxu0 0.0
  %377 = vmatpush1.msra.mxu0 %v135
  %378 = vmatprep.subr.mxu0 0.0
  %379 = vmatpush1.msra.mxu0 %v136
  %380 = vmatprep.subr.mxu0 0.0
  %381 = vmatpush1.msra.mxu0 %v137
  %382 = vmatprep.subr.mxu0 0.0
  %383 = vmatpush1.msra.mxu0 %v138
  %384 = vmatprep.subr.mxu0 0.0
  %385 = vmatpush1.msra.mxu0 %v139
  %386 = vmatprep.subr.mxu0 0.0
  %387 = vmatpush1.msra.mxu0 %v140
  %388 = vmatprep.subr.mxu0 0.0
  %389 = vmatpush1.msra.mxu0 %v141
  %390 = vmatprep.subr.mxu0 0.0
  %391 = vmatpush1.msra.mxu0 %v142
  %392 = vmatprep.mubr.f32.mxu0 %v17
  %393 = vmatmul.mubr.f32.gmra.mrb[0].mxu0 %v16
  %v394 = vpop.f32.mrb[0].mxu0
  %v395 = vadd.f32 %v265, %v394
  %v396 = vpop.f32.mrb[0].mxu0
  %397 = vmatprep.mubr.f32.mxu0 %v22
  %398 = vmatmul.mubr.f32.gmra.mrb[0].mxu0 %v21
  %v399 = vpop.f32.mrb[0].mxu0
  %v400 = vadd.f32 %v270, %v399
  %v401 = vpop.f32.mrb[0].mxu0
  %402 = vmatprep.mubr.f32.mxu0 %v27
  %403 = vmatmul.mubr.f32.gmra.mrb[0].mxu0 %v26
  %v404 = vpop.f32.mrb[0].mxu0
  %v405 = vadd.f32 %v275, %v404
  %v406 = vpop.f32.mrb[0].mxu0
  %407 = vmatprep.mubr.f32.mxu0 %v32
  %408 = vmatmul.mubr.f32.gmra.mrb[0].mxu0 %v31
  %v409 = vpop.f32.mrb[0].mxu0
  %v410 = vadd.f32 %v280, %v409
  %v411 = vpop.f32.mrb[0].mxu0
  %412 = vmatprep.mubr.f32.mxu0 %v37
  %413 = vmatmul.mubr.f32.gmra.mrb[0].mxu0 %v36
  %v414 = vpop.f32.mrb[0].mxu0
  %v415 = vadd.f32 %v285, %v414
  %v416 = vpop.f32.mrb[0].mxu0
  %417 = vmatprep.mubr.f32.mxu0 %v42
  %418 = vmatmul.mubr.f32.gmra.mrb[0].mxu0 %v41
  %v419 = vpop.f32.mrb[0].mxu0
  %v420 = vadd.f32 %v290, %v419
  %v421 = vpop.f32.mrb[0].mxu0
  %422 = vmatprep.mubr.f32.mxu0 %v47
  %423 = vmatmul.mubr.f32.gmra.mrb[0].mxu0 %v46
  %v424 = vpop.f32.mrb[0].mxu0
  %v425 = vadd.f32 %v295, %v424
  %v426 = vpop.f32.mrb[0].mxu0
  %427 = vmatprep.mubr.f32.mxu0 %v52
  %428 = vmatmul.mubr.f32.gmra.mrb[0].mxu0 %v51
  %v429 = vpop.f32.mrb[0].mxu0
  %v430 = vadd.f32 %v300, %v429
  %v431 = vpop.f32.mrb[0].mxu0
  %432 = vmatprep.mubr.f32.mxu0 %v57
  %433 = vmatmul.mubr.f32.gmra.mrb[0].mxu0 %v56
  %v434 = vpop.f32.mrb[0].mxu0
  %v435 = vadd.f32 %v305, %v434
  %v436 = vpop.f32.mrb[0].mxu0
  %437 = vmatprep.mubr.f32.mxu0 %v62
  %438 = vmatmul.mubr.f32.gmra.mrb[0].mxu0 %v61
  %v439 = vpop.f32.mrb[0].mxu0
  %v440 = vadd.f32 %v310, %v439
  %v441 = vpop.f32.mrb[0].mxu0
  %442 = vmatprep.mubr.f32.mxu0 %v67
  %443 = vmatmul.mubr.f32.gmra.mrb[0].mxu0 %v66
  %v444 = vpop.f32.mrb[0].mxu0
  %v445 = vadd.f32 %v315, %v444
  %v446 = vpop.f32.mrb[0].mxu0
  %447 = vmatprep.mubr.f32.mxu0 %v72
  %448 = vmatmul.mubr.f32.gmra.mrb[0].mxu0 %v71
  %v449 = vpop.f32.mrb[0].mxu0
  %v450 = vadd.f32 %v320, %v449
  %v451 = vpop.f32.mrb[0].mxu0
  %452 = vmatprep.mubr.f32.mxu0 %v77
  %453 = vmatmul.mubr.f32.gmra.mrb[0].mxu0 %v76
  %v454 = vpop.f32.mrb[0].mxu0
  %v455 = vadd.f32 %v325, %v454
  %v456 = vpop.f32.mrb[0].mxu0
  %457 = vdwg.mxu0
  %458 = vmatprep.subr.mxu0 0.0
  %459 = vmatpush1.msra.mxu0 %v143
  %460 = vmatprep.subr.mxu0 0.0
  %461 = vmatpush1.msra.mxu0 %v144
  %462 = vmatprep.subr.mxu0 0.0
  %463 = vmatpush1.msra.mxu0 %v145
  %464 = vmatprep.subr.mxu0 0.0
  %465 = vmatpush1.msra.mxu0 %v146
  %466 = vmatprep.subr.mxu0 0.0
  %467 = vmatpush1.msra.mxu0 %v147
  %468 = vmatprep.subr.mxu0 0.0
  %469 = vmatpush1.msra.mxu0 %v148
  %470 = vmatprep.subr.mxu0 0.0
  %471 = vmatpush1.msra.mxu0 %v149
  %472 = vmatprep.subr.mxu0 0.0
  %473 = vmatpush1.msra.mxu0 %v150
  %474 = vmatprep.subr.mxu0 0.0
  %475 = vmatpush1.msra.mxu0 0.0
  %476 = vmatprep.subr.mxu0 0.0
  %477 = vmatpush1.msra.mxu0 0.0
  %478 = vmatprep.subr.mxu0 0.0
  %479 = vmatpush1.msra.mxu0 0.0
  %480 = vmatprep.subr.mxu0 0.0
  %481 = vmatpush1.msra.mxu0 0.0
  %482 = vmatprep.subr.mxu0 0.0
  %483 = vmatpush1.msra.mxu0 0.0
  %484 = vmatprep.subr.mxu0 0.0
  %485 = vmatpush1.msra.mxu0 0.0
  %486 = vmatprep.subr.mxu0 0.0
  %487 = vmatpush1.msra.mxu0 0.0
  %488 = vmatprep.subr.mxu0 0.0
  %489 = vmatpush1.msra.mxu0 0.0
  %490 = vmatprep.subr.mxu0 0.0
  %491 = vmatpush1.msra.mxu0 0.0
  %492 = vmatprep.subr.mxu0 0.0
  %493 = vmatpush1.msra.mxu0 0.0
  %494 = vmatprep.subr.mxu0 0.0
  %495 = vmatpush1.msra.mxu0 0.0
  %496 = vmatprep.subr.mxu0 0.0
  %497 = vmatpush1.msra.mxu0 0.0
  %498 = vmatprep.subr.mxu0 0.0
  %499 = vmatpush1.msra.mxu0 0.0
  %500 = vmatprep.subr.mxu0 0.0
  %501 = vmatpush1.msra.mxu0 0.0
  %502 = vmatprep.subr.mxu0 0.0
  %503 = vmatpush1.msra.mxu0 0.0
  %504 = vmatprep.subr.mxu0 0.0
  %505 = vmatpush1.msra.mxu0 0.0
  %506 = vmatprep.subr.mxu0 0.0
  %507 = vmatpush1.msra.mxu0 0.0
  %508 = vmatprep.subr.mxu0 0.0
  %509 = vmatpush1.msra.mxu0 0.0
  %510 = vmatprep.subr.mxu0 0.0
  %511 = vmatpush1.msra.mxu0 0.0
  %512 = vmatprep.subr.mxu0 0.0
  %513 = vmatpush1.msra.mxu0 0.0
  %514 = vmatprep.subr.mxu0 0.0
  %515 = vmatpush1.msra.mxu0 0.0
  %516 = vmatprep.subr.mxu0 0.0
  %517 = vmatpush1.msra.mxu0 0.0
  %518 = vmatprep.subr.mxu0 0.0
  %519 = vmatpush1.msra.mxu0 0.0
  %520 = vmatprep.subr.mxu0 0.0
  %521 = vmatpush1.msra.mxu0 0.0
  %522 = vmatprep.mubr.f32.mxu0 0.0
  %523 = vmatmul.mubr.f32.gmra.mrb[0].mxu0 %v160
  %v524 = vpop.f32.mrb[0].mxu0
  %v525 = vadd.f32 %v395, %v524
  %v526 = vpop.f32.mrb[0].mxu0
  %527 = vmatprep.mubr.f32.mxu0 0.0
  %528 = vmatmul.mubr.f32.gmra.mrb[0].mxu0 %v163
  %v529 = vpop.f32.mrb[0].mxu0
  %v530 = vadd.f32 %v400, %v529
  %v531 = vpop.f32.mrb[0].mxu0
  %532 = vmatprep.mubr.f32.mxu0 0.0
  %533 = vmatmul.mubr.f32.gmra.mrb[0].mxu0 %v166
  %v534 = vpop.f32.mrb[0].mxu0
  %v535 = vadd.f32 %v405, %v534
  %v536 = vpop.f32.mrb[0].mxu0
  %537 = vmatprep.mubr.f32.mxu0 0.0
  %538 = vmatmul.mubr.f32.gmra.mrb[0].mxu0 %v169
  %v539 = vpop.f32.mrb[0].mxu0
  %v540 = vadd.f32 %v410, %v539
  %v541 = vpop.f32.mrb[0].mxu0
  %542 = vmatprep.mubr.f32.mxu0 0.0
  %543 = vmatmul.mubr.f32.gmra.mrb[0].mxu0 %v172
  %v544 = vpop.f32.mrb[0].mxu0
  %v545 = vadd.f32 %v415, %v544
  %v546 = vpop.f32.mrb[0].mxu0
  %547 = vmatprep.mubr.f32.mxu0 0.0
  %548 = vmatmul.mubr.f32.gmra.mrb[0].mxu0 %v175
  %v549 = vpop.f32.mrb[0].mxu0
  %v550 = vadd.f32 %v420, %v549
  %v551 = vpop.f32.mrb[0].mxu0
  %552 = vmatprep.mubr.f32.mxu0 0.0
  %553 = vmatmul.mubr.f32.gmra.mrb[0].mxu0 %v178
  %v554 = vpop.f32.mrb[0].mxu0
  %v555 = vadd.f32 %v425, %v554
  %v556 = vpop.f32.mrb[0].mxu0
  %557 = vmatprep.mubr.f32.mxu0 0.0
  %558 = vmatmul.mubr.f32.gmra.mrb[0].mxu0 %v181
  %v559 = vpop.f32.mrb[0].mxu0
  %v560 = vadd.f32 %v430, %v559
  %v561 = vpop.f32.mrb[0].mxu0
  %562 = vmatprep.mubr.f32.mxu0 0.0
  %563 = vmatmul.mubr.f32.gmra.mrb[0].mxu0 %v184
  %v564 = vpop.f32.mrb[0].mxu0
  %v565 = vadd.f32 %v435, %v564
  %v566 = vpop.f32.mrb[0].mxu0
  %567 = vmatprep.mubr.f32.mxu0 0.0
  %568 = vmatmul.mubr.f32.gmra.mrb[0].mxu0 %v187
  %v569 = vpop.f32.mrb[0].mxu0
  %v570 = vadd.f32 %v440, %v569
  %v571 = vpop.f32.mrb[0].mxu0
  %572 = vmatprep.mubr.f32.mxu0 0.0
  %573 = vmatmul.mubr.f32.gmra.mrb[0].mxu0 %v190
  %v574 = vpop.f32.mrb[0].mxu0
  %v575 = vadd.f32 %v445, %v574
  %v576 = vpop.f32.mrb[0].mxu0
  %577 = vmatprep.mubr.f32.mxu0 0.0
  %578 = vmatmul.mubr.f32.gmra.mrb[0].mxu0 %v193
  %v579 = vpop.f32.mrb[0].mxu0
  %v580 = vadd.f32 %v450, %v579
  %v581 = vpop.f32.mrb[0].mxu0
  %582 = vmatprep.mubr.f32.mxu0 0.0
  %583 = vmatmul.mubr.f32.gmra.mrb[0].mxu0 %v196
  %v584 = vpop.f32.mrb[0].mxu0
  %v585 = vadd.f32 %v455, %v584
  %v586 = vpop.f32.mrb[0].mxu0
  %587 = vdwg.mxu0
  %v588 = vmax.f32 %v525, 0.0
  %v589 = vmax.f32 %v530, 0.0
  %v590 = vmax.f32 %v535, 0.0
  %v591 = vmax.f32 %v540, 0.0
  %v592 = vmax.f32 %v545, 0.0
  %v593 = vmax.f32 %v550, 0.0
  %v594 = vmax.f32 %v555, 0.0
  %v595 = vmax.f32 %v560, 0.0
  %v596 = vmax.f32 %v565, 0.0
  %v597 = vmax.f32 %v570, 0.0
  %v598 = vmax.f32 %v575, 0.0
  %v599 = vmax.f32 %v580, 0.0
  %v600 = vmax.f32 %v585, 0.0
  %601 = vst [vmem:[%s3] sm:$0xff] %v588
  %602 = vst [vmem:[%s3 + $0x8] sm:$0xff] %v589
  %603 = vst [vmem:[%s3 + $0x10] sm:$0xff] %v590
  %604 = vst [vmem:[%s3 + $0x18] sm:$0xff] %v591
  %605 = vst [vmem:[%s3 + $0x20] sm:$0xff] %v592
  %606 = vst [vmem:[%s3 + $0x28] sm:$0xff] %v593
  %607 = vst [vmem:[%s3 + $0x30] sm:$0xff] %v594
  %608 = vst [vmem:[%s3 + $0x38] sm:$0xff] %v595
  %609 = vst [vmem:[%s3 + $0x40] sm:$0xff] %v596
  %610 = vst [vmem:[%s3 + $0x48] sm:$0xff] %v597
  %611 = vst [vmem:[%s3 + $0x50] sm:$0xff] %v598
  %612 = vst [vmem:[%s3 + $0x58] sm:$0xff] %v599
  %613 = vst [vmem:[%s3 + $0x60] sm:$0xff] %v600
  // Predicated region
  $region14: #{dqn_forward.8} parent=0 // pred_check
    _
  $region15: #{dqn_forward.8} parent=0 // pred_check_branch
    %615 = sbr.rel (0) target = $region17
  $region16: #{dqn_forward.8} parent=0 // pred_region
    _
  $region17: #{dqn_forward.8} parent=0 // pred_fallthru
    _
  // Predicated region
  $region18: #{dqn_forward.8} parent=0 // pred_check
    _
  $region19: #{dqn_forward.8} parent=0 // pred_check_branch
    %617 = sbr.rel (0) target = $region21
  $region20: #{dqn_forward.8} parent=0 // pred_region
    _
  $region21: #{dqn_forward.8} parent=0 // pred_fallthru
    _

// kernel: dqn_forward.10
$region0: #{dqn_forward.10}
  #allocation0 [shape = 'u32[]', space=smem, size = 0x4, offset = 0x4, fixed_abs, tag = 'smem constant byte address 0x4 - core index']
  #allocation1 [shape = 'u32[144,128]{1,0:T(1,128)}', space=vmem, size = 0x12000, scoped, tag = 'internal scratch']
  %s0 = inlined_call_operand.vmem [shape: f32[8,64], index: 0, kind: input, shape index: {}]
  %s1 = inlined_call_operand.vmem [shape: f32[64,384], index: 1, kind: input, shape index: {}]
  %s2 = inlined_call_operand.vmem [shape: f32[1,384], index: 2, kind: input, shape index: {}]
  %s3 = inlined_call_operand.vmem [shape: f32[8,384], index: 3, kind: output, shape index: {}]
  %s4 = sld [smem:[#allocation0]]
  $region83: #{dqn_forward.10} parent=0
    _
  %s6 = ssub.s32 1, %s4
  %s7 = scalar_select 0, %s6, %s4
  $region1: #{dqn_forward.10} parent=0
    #allocation2 [shape = 'u8[65536]{0}', space=vmem, size = 0x10000, scoped, tag = 'input window, operand 1']
    loop: start=0, step=1, limit=5
    $region2: #{dqn_forward.10} parent=1 // loop_pre_header
      _
    $region3: #{dqn_forward.10} parent=1 // loop_header
      %s9 = sphi 0, %s13
      %p10 = scmp.ge.s32.totalorder %s9, 5
      %s16 = sphi 0, %s28
      %s17 = sphi 0, %s24
      %s18 = sphi 0, %s16
      %s19 = sphi 0, %s17
      %s20 = sphi 0, %s18
      %s21 = sphi 0, %s19
      %s31 = sphi 0, %s33
      %s34 = sphi 0, %s31
      %s35 = sphi 0, %s34
      %s51 = sphi 0, %s35
      %s57 = sphi 0, %s59
      %s60 = sphi 0, %s57
      %s61 = sphi 0, %s60
      %s77 = sphi 0, %s61
      %s83 = sphi 0, %s85
      %s86 = sphi 0, %s83
      %s87 = sphi 0, %s86
      %s103 = sphi 0, %s87
      %s111 = sphi 0, %s113
      %s114 = sphi 0, %s111
      %s115 = sphi 0, %s114
      %s131 = sphi 0, %s115
    $region4: #{dqn_forward.10} parent=1 // loop_header_branch
      %12 = sbr.rel (%p10) target = $region8
    $region5: #{dqn_forward.10} parent=1 // loop_body
      %s14 = ssub.s32 %s9, 1
      %s15 = ssub.s32 %s9, 2
      %s22 = sadd.s32 1, %s17
      %p23 = scmp.ge.s32.totalorder %s22, 3
      %s24 = scalar_select %p23, 0, %s22
      %s25 = sadd.s32 1, %s16
      %s26 = scalar_select %p23, %s25, %s16
      %p27 = scmp.ge.s32.totalorder %s26, 1
      %s28 = scalar_select %p27, 0, %s26
      %s29 = ssub.s32 %s16, %s28
      %p30 = scmp.eq.s32.totalorder %s29, 0
      %s32 = sadd.s32 %s31, 1
      %s33 = scalar_select %p30, %s31, %s32
      %p36 = pneg %p30
      %p37 = scmp.eq.s32.totalorder %s9, 2
      %p38 = por %p36, %p37
      %p39 = scmp.ne.s32.totalorder %s31, %s34
      %p40 = scmp.eq.s32.totalorder %s9, 0
      %p41 = por %p39, %p40
      %p42 = scmp.ne.s32.totalorder %s31, %s34
      %p43 = scmp.eq.s32.totalorder %s14, 2
      %p44 = por %p42, %p43
      %p45 = scmp.ne.s32.totalorder %s34, %s35
      %p46 = scmp.eq.s32.totalorder %s14, 0
      %p47 = por %p45, %p46
      %p48 = scmp.ne.s32.totalorder %s34, %s35
      %p49 = scmp.eq.s32.totalorder %s15, 2
      %p50 = por %p48, %p49
      %p52 = scmp.ne.s32.totalorder %s35, %s51
      %p53 = scmp.eq.s32.totalorder %s15, 0
      %p54 = por %p52, %p53
      %s55 = ssub.s32 %s17, %s24
      %p56 = scmp.eq.s32.totalorder %s55, 0
      %s58 = sadd.s32 %s57, 1
      %s59 = scalar_select %p56, %s57, %s58
      %p62 = pneg %p56
      %p63 = scmp.eq.s32.totalorder %s9, 2
      %p64 = por %p62, %p63
      %p65 = scmp.ne.s32.totalorder %s57, %s60
      %p66 = scmp.eq.s32.totalorder %s9, 0
      %p67 = por %p65, %p66
      %p68 = scmp.ne.s32.totalorder %s57, %s60
      %p69 = scmp.eq.s32.totalorder %s14, 2
      %p70 = por %p68, %p69
      %p71 = scmp.ne.s32.totalorder %s60, %s61
      %p72 = scmp.eq.s32.totalorder %s14, 0
      %p73 = por %p71, %p72
      %p74 = scmp.ne.s32.totalorder %s60, %s61
      %p75 = scmp.eq.s32.totalorder %s15, 2
      %p76 = por %p74, %p75
      %p78 = scmp.ne.s32.totalorder %s61, %s77
      %p79 = scmp.eq.s32.totalorder %s15, 0
      %p80 = por %p78, %p79
      %s81 = ssub.s32 %s17, %s24
      %p82 = scmp.eq.s32.totalorder %s81, 0
      %s84 = sadd.s32 %s83, 1
      %s85 = scalar_select %p82, %s83, %s84
      %p88 = pneg %p82
      %p89 = scmp.eq.s32.totalorder %s9, 2
      %p90 = por %p88, %p89
      %p91 = scmp.ne.s32.totalorder %s83, %s86
      %p92 = scmp.eq.s32.totalorder %s9, 0
      %p93 = por %p91, %p92
      %p94 = scmp.ne.s32.totalorder %s83, %s86
      %p95 = scmp.eq.s32.totalorder %s14, 2
      %p96 = por %p94, %p95
      %p97 = scmp.ne.s32.totalorder %s86, %s87
      %p98 = scmp.eq.s32.totalorder %s14, 0
      %p99 = por %p97, %p98
      %p100 = scmp.ne.s32.totalorder %s86, %s87
      %p101 = scmp.eq.s32.totalorder %s15, 2
      %p102 = por %p100, %p101
      %p104 = scmp.ne.s32.totalorder %s87, %s103
      %p105 = scmp.eq.s32.totalorder %s15, 0
      %p106 = por %p104, %p105
      %s107 = ssub.s32 %s16, %s28
      %s108 = ssub.s32 %s17, %s24
      %s109 = sor.u32 %s107, %s108
      %p110 = scmp.eq.s32.totalorder %s109, 0
      %s112 = sadd.s32 %s111, 1
      %s113 = scalar_select %p110, %s111, %s112
      %p116 = pneg %p110
      %p117 = scmp.eq.s32.totalorder %s9, 2
      %p118 = por %p116, %p117
      %p119 = scmp.ne.s32.totalorder %s111, %s114
      %p120 = scmp.eq.s32.totalorder %s9, 0
      %p121 = por %p119, %p120
      %p122 = scmp.ne.s32.totalorder %s111, %s114
      %p123 = scmp.eq.s32.totalorder %s14, 2
      %p124 = por %p122, %p123
      %p125 = scmp.ne.s32.totalorder %s114, %s115
      %p126 = scmp.eq.s32.totalorder %s14, 0
      %p127 = por %p125, %p126
      %p128 = scmp.ne.s32.totalorder %s114, %s115
      %p129 = scmp.eq.s32.totalorder %s15, 2
      %p130 = por %p128, %p129
      %p132 = scmp.ne.s32.totalorder %s115, %s131
      %p133 = scmp.eq.s32.totalorder %s15, 0
      %p134 = por %p132, %p133
      %p135 = scmp.le.s32.totalorder 1, %s9
      %p136 = scmp.lt.s32.totalorder %s9, 4
      %p137 = pnand %p135, %p136
      %p138 = pneg %p137
      // Predicated region
      $region9: #{dqn_forward.10} parent=5 // pred_check
        _
      $region10: #{dqn_forward.10} parent=5 // pred_check_branch
        %140 = sbr.rel (%p137) target = $region12
      $region11: #{dqn_forward.10} parent=5 // pred_region
        %s141 = ssub.s32 %s9, 1
        // Predicated region
        $region13: #{dqn_forward.10} parent=11 // pred_check
          %p142 = pneg %p47
        $region14: #{dqn_forward.10} parent=11 // pred_check_branch
          %144 = sbr.rel (%p142) target = $region16
        $region15: #{dqn_forward.10} parent=11 // pred_region
          %p145 = scmp.lt.s32.totalorder %s18, 0
          %s146 = scalar_select %p145, %s18, 0
          %s147 = smul.addr %s146, 8
          %s148 = scalar_lea.vmem %s0, %s147
        $region16: #{dqn_forward.10} parent=11 // pred_fallthru
          _
      $region12: #{dqn_forward.10} parent=5 // pred_fallthru
        _
      %p149 = scmp.lt.s32.totalorder %s9, 3
      // Predicated region
      $region17: #{dqn_forward.10} parent=5 // pred_check
        %p150 = pneg %p149
      $region18: #{dqn_forward.10} parent=5 // pred_check_branch
        %152 = sbr.rel (%p150) target = $region20
      $region19: #{dqn_forward.10} parent=5 // pred_region
        // Predicated region
        $region21: #{dqn_forward.10} parent=19 // pred_check
          %p153 = pneg %p67
        $region22: #{dqn_forward.10} parent=19 // pred_check_branch
          %155 = sbr.rel (%p153) target = $region24
        $region23: #{dqn_forward.10} parent=19 // pred_region
          %s156 = sand.u32 %s57, 1
          %s157 = sand.u32 %s57, 1
          %s158 = smul.addr %s157, 64
          %s159 = scalar_lea.vmem [#allocation2], %s158
          %s160 = smul.addr %s17, 8
          %s161 = scalar_lea.vmem %s1, %s160
          // Predicated region
          $region25: #{dqn_forward.10} parent=23 // pred_check
            _
          $region26: #{dqn_forward.10} parent=23 // pred_check_branch
            %163 = sbr.rel (0) target = $region28
          $region27: #{dqn_forward.10} parent=23 // pred_region
            // Predicated region
            $region29: #{dqn_forward.10} parent=27 // pred_check
              _
            $region30: #{dqn_forward.10} parent=27 // pred_check_branch
              %165 = sbr.rel (0) target = $region32
            $region31: #{dqn_forward.10} parent=27 // pred_region
              // Predicated region
              $region44: #{dqn_forward.10} parent=31 // pred_check
                _
              $region45: #{dqn_forward.10} parent=31 // pred_check_branch
                %194 = sbr.rel (0) target = $region47
              $region46: #{dqn_forward.10} parent=31 // pred_region
                loop: start=0, step=1, limit=1
                $region48: #{dqn_forward.10} parent=46 // loop_pre_header
                  _
                $region49: #{dqn_forward.10} parent=46 // loop_header
                  %s196 = sphi 0, %s200
                  %p197 = scmp.ge.s32.totalorder %s196, 1
                  %s201 = sphi %s161, %s161
                  %s202 = sphi %s159, %s159
                $region50: #{dqn_forward.10} parent=46 // loop_header_branch
                  %199 = sbr.rel (%p197) target = $region54
                $region51: #{dqn_forward.10} parent=46 // loop_body
                  %v203 = vld [vmem:[%s201] sm:$0xff]
                  %204 = vst [vmem:[%s202] sm:$0xff] %v203
                  %v205 = vld [vmem:[%s201 + $0x18] sm:$0xff]
                  %206 = vst [vmem:[%s202 + $0x8] sm:$0xff] %v205
                  %v207 = vld [vmem:[%s201 + $0x30] sm:$0xff]
                  %208 = vst [vmem:[%s202 + $0x10] sm:$0xff] %v207
                  %v209 = vld [vmem:[%s201 + $0x48] sm:$0xff]
                  %210 = vst [vmem:[%s202 + $0x18] sm:$0xff] %v209
                  %v211 = vld [vmem:[%s201 + $0x60] sm:$0xff]
                  %212 = vst [vmem:[%s202 + $0x20] sm:$0xff] %v211
                  %v213 = vld [vmem:[%s201 + $0x78] sm:$0xff]
                  %214 = vst [vmem:[%s202 + $0x28] sm:$0xff] %v213
                  %v215 = vld [vmem:[%s201 + $0x90] sm:$0xff]
                  %216 = vst [vmem:[%s202 + $0x30] sm:$0xff] %v215
                  %v217 = vld [vmem:[%s201 + $0xa8] sm:$0xff]
                  %218 = vst [vmem:[%s202 + $0x38] sm:$0xff] %v217
                $region52: #{dqn_forward.10} parent=46 // loop_footer
                  %s200 = sadd.s32 1, %s196
                $region53: #{dqn_forward.10} parent=46 // loop_footer_branch
                  %195 = sbr.rel target = $region49
                $region54: #{dqn_forward.10} parent=46 // loop_exit
                  _
              $region47: #{dqn_forward.10} parent=31 // pred_fallthru
                _
              // Predicated region
              $region55: #{dqn_forward.10} parent=31 // pred_check
                _
              $region56: #{dqn_forward.10} parent=31 // pred_check_branch
                %220 = sbr.rel target = $region58
              $region57: #{dqn_forward.10} parent=31 // pred_region
                _
              $region58: #{dqn_forward.10} parent=31 // pred_fallthru
                _
            $region32: #{dqn_forward.10} parent=27 // pred_fallthru
              _
            // Predicated region
            $region33: #{dqn_forward.10} parent=27 // pred_check
              _
            $region34: #{dqn_forward.10} parent=27 // pred_check_branch
              %167 = sbr.rel target = $region36
            $region35: #{dqn_forward.10} parent=27 // pred_region
              loop: start=0, step=1, limit=1
              $region37: #{dqn_forward.10} parent=35 // loop_pre_header
                _
              $region38: #{dqn_forward.10} parent=35 // loop_header
                %s170 = sphi 0, %s174
                %p171 = scmp.ge.s32.totalorder %s170, 1
                %s175 = sphi %s161, %s161
                %s176 = sphi %s159, %s159
              $region39: #{dqn_forward.10} parent=35 // loop_header_branch
                %173 = sbr.rel (%p171) target = $region43
              $region40: #{dqn_forward.10} parent=35 // loop_body
                %v177 = vld [vmem:[%s175] sm:$0xff]
                %178 = vst [vmem:[%s176] sm:$0xff] %v177
                %v179 = vld [vmem:[%s175 + $0x18] sm:$0xff]
                %180 = vst [vmem:[%s176 + $0x8] sm:$0xff] %v179
                %v181 = vld [vmem:[%s175 + $0x30] sm:$0xff]
                %182 = vst [vmem:[%s176 + $0x10] sm:$0xff] %v181
                %v183 = vld [vmem:[%s175 + $0x48] sm:$0xff]
                %184 = vst [vmem:[%s176 + $0x18] sm:$0xff] %v183
                %v185 = vld [vmem:[%s175 + $0x60] sm:$0xff]
                %186 = vst [vmem:[%s176 + $0x20] sm:$0xff] %v185
                %v187 = vld [vmem:[%s175 + $0x78] sm:$0xff]
                %188 = vst [vmem:[%s176 + $0x28] sm:$0xff] %v187
                %v189 = vld [vmem:[%s175 + $0x90] sm:$0xff]
                %190 = vst [vmem:[%s176 + $0x30] sm:$0xff] %v189
                %v191 = vld [vmem:[%s175 + $0xa8] sm:$0xff]
                %192 = vst [vmem:[%s176 + $0x38] sm:$0xff] %v191
              $region41: #{dqn_forward.10} parent=35 // loop_footer
                %s174 = sadd.s32 1, %s170
              $region42: #{dqn_forward.10} parent=35 // loop_footer_branch
                %169 = sbr.rel target = $region38
              $region43: #{dqn_forward.10} parent=35 // loop_exit
                _
            $region36: #{dqn_forward.10} parent=27 // pred_fallthru
              _
          $region28: #{dqn_forward.10} parent=23 // pred_fallthru
            _
          %221 = vnop
        $region24: #{dqn_forward.10} parent=19 // pred_fallthru
          _
        // Predicated region
        $region59: #{dqn_forward.10} parent=19 // pred_check
          %p222 = pneg %p93
        $region60: #{dqn_forward.10} parent=19 // pred_check_branch
          %224 = sbr.rel (%p222) target = $region62
        $region61: #{dqn_forward.10} parent=19 // pred_region
          %p225 = scmp.lt.s32.totalorder %s17, 2
          %s226 = scalar_select %p225, %s17, 2
          %s227 = scalar_lea.vmem %s2, %s226
        $region62: #{dqn_forward.10} parent=19 // pred_fallthru
          _
      $region20: #{dqn_forward.10} parent=5 // pred_fallthru
        _
      %p228 = scmp.le.s32.totalorder 1, %s9
      %p229 = scmp.lt.s32.totalorder %s9, 4
      %p230 = pnand %p228, %p229
      %p231 = pneg %p230
      // Predicated region
      $region63: #{dqn_forward.10} parent=5 // pred_check
        _
      $region64: #{dqn_forward.10} parent=5 // pred_check_branch
        %233 = sbr.rel (%p230) target = $region66
      $region65: #{dqn_forward.10} parent=5 // pred_region
        %s234 = ssub.s32 %s9, 1
        %s235 = sand.u32 %s60, 1
        %s236 = sand.u32 %s60, 1
        %s237 = smul.addr %s236, 64
        %s238 = scalar_lea.vmem [#allocation2], %s237
        // Predicated region
        $region67: #{dqn_forward.10} parent=65 // pred_check
          %p239 = pneg %p73
        $region68: #{dqn_forward.10} parent=65 // pred_check_branch
          %241 = sbr.rel (%p239) target = $region70
        $region69: #{dqn_forward.10} parent=65 // pred_region
          _
        $region70: #{dqn_forward.10} parent=65 // pred_fallthru
          _
        %p242 = scmp.lt.s32.totalorder %s18, 0
        %s243 = scalar_select %p242, %s18, 0
        %s244 = smul.addr %s243, 8
        %s245 = scalar_lea.vmem %s0, %s244
        %p246 = pneg %p47
        %p247 = pneg %p44
        %s248 = sand.u32 %s60, 1
        %s249 = sand.u32 %s60, 1
        %s250 = smul.addr %s249, 64
        %s251 = scalar_lea.vmem [#allocation2], %s250
        %p252 = pneg %p73
        %p253 = pneg %p70
        %p254 = scmp.lt.s32.totalorder %s19, 2
        %s255 = scalar_select %p254, %s19, 2
        %s256 = scalar_lea.vmem %s2, %s255
        %p257 = pneg %p99
        %p258 = pneg %p96
        %p259 = pneg %p127
        %p260 = pneg %p124
        %p261 = scmp.lt.s32.totalorder %s18, 0
        %s262 = scalar_select %p261, %s18, 0
        %p263 = scmp.lt.s32.totalorder %s19, 2
        %s264 = scalar_select %p263, %s19, 2
        %s265 = smul.addr %s262, 3
        %s266 = sadd.s32 %s264, %s265
        %s267 = smul.addr %s266, 8
        %s268 = scalar_lea.vmem %s3, %s267
        %p269 = scmp.lt.s32.totalorder %s18, 0
        %s270 = scalar_select %p269, %s18, 0
        %s271 = smul.addr %s270, 8
        %s272 = scalar_lea.vmem %s0, %s271
        %p273 = scmp.lt.s32.totalorder %s19, 2
        %s274 = scalar_select %p273, %s19, 2
        %s275 = scalar_lea.vmem %s2, %s274
        %p276 = scmp.lt.s32.totalorder %s18, 0
        %s277 = scalar_select %p276, %s18, 0
        %p278 = scmp.lt.s32.totalorder %s19, 2
        %s279 = scalar_select %p278, %s19, 2
        %s280 = smul.addr %s277, 3
        %s281 = sadd.s32 %s279, %s280
        %s282 = smul.addr %s281, 8
        %s283 = scalar_lea.vmem %s3, %s282
        %v284 = vld [vmem:[%s272] sm:$0xff]
        %v285 = vld [vmem:[%s238] sm:$0xff]
        %v286 = vld [vmem:[%s238 + $0x8] sm:$0xff]
        %v287 = vld [vmem:[%s238 + $0x10] sm:$0xff]
        %v288 = vld [vmem:[%s238 + $0x18] sm:$0xff]
        %v289 = vld [vmem:[%s238 + $0x20] sm:$0xff]
        %v290 = vld [vmem:[%s238 + $0x28] sm:$0xff]
        %v291 = vld [vmem:[%s238 + $0x30] sm:$0xff]
        %v292 = vld [vmem:[%s238 + $0x38] sm:$0xff]
        %v293 = vld [vmem:[%s275] sm:$0x1]
        %v295 = vlaneseq
        %v296 = vshrl.u32 %v295, 7
        %v297 = vsub.s32 0, %v296
        %v298 = vrot.slane %v293, %v297
        %vm300 = vcmask 523264
        %v302 = vsel %vm300, %v284, 0
        %304 = vmatprep.subr.mxu0 0.0
        %305 = vmatpush1.msra.mxu0 %v285
        %306 = vmatprep.subr.mxu0 0.0
        %307 = vmatpush1.msra.mxu0 %v286
        %308 = vmatprep.subr.mxu0 0.0
        %309 = vmatpush1.msra.mxu0 %v287
        %310 = vmatprep.subr.mxu0 0.0
        %311 = vmatpush1.msra.mxu0 %v288
        %312 = vmatprep.subr.mxu0 0.0
        %313 = vmatpush1.msra.mxu0 %v289
        %314 = vmatprep.subr.mxu0 0.0
        %315 = vmatpush1.msra.mxu0 %v290
        %316 = vmatprep.subr.mxu0 0.0
        %317 = vmatpush1.msra.mxu0 %v291
        %318 = vmatprep.subr.mxu0 0.0
        %319 = vmatpush1.msra.mxu0 %v292
        %320 = vmatprep.subr.mxu0 0.0
        %321 = vmatpush1.msra.mxu0 0.0
        %322 = vmatprep.subr.mxu0 0.0
        %323 = vmatpush1.msra.mxu0 0.0
        %324 = vmatprep.subr.mxu0 0.0
        %325 = vmatpush1.msra.mxu0 0.0
        %326 = vmatprep.subr.mxu0 0.0
        %327 = vmatpush1.msra.mxu0 0.0
        %328 = vmatprep.subr.mxu0 0.0
        %329 = vmatpush1.msra.mxu0 0.0
        %330 = vmatprep.subr.mxu0 0.0
        %331 = vmatpush1.msra.mxu0 0.0
        %332 = vmatprep.subr.mxu0 0.0
        %333 = vmatpush1.msra.mxu0 0.0
        %334 = vmatprep.subr.mxu0 0.0
        %335 = vmatpush1.msra.mxu0 0.0
        %336 = vmatprep.subr.mxu0 0.0
        %337 = vmatpush1.msra.mxu0 0.0
        %338 = vmatprep.subr.mxu0 0.0
        %339 = vmatpush1.msra.mxu0 0.0
        %340 = vmatprep.subr.mxu0 0.0
        %341 = vmatpush1.msra.mxu0 0.0
        %342 = vmatprep.subr.mxu0 0.0
        %343 = vmatpush1.msra.mxu0 0.0
        %344 = vmatprep.subr.mxu0 0.0
        %345 = vmatpush1.msra.mxu0 0.0
        %346 = vmatprep.subr.mxu0 0.0
        %347 = vmatpush1.msra.mxu0 0.0
        %348 = vmatprep.subr.mxu0 0.0
        %349 = vmatpush1.msra.mxu0 0.0
        %350 = vmatprep.subr.mxu0 0.0
        %351 = vmatpush1.msra.mxu0 0.0
        %352 = vmatprep.subr.mxu0 0.0
        %353 = vmatpush1.msra.mxu0 0.0
        %354 = vmatprep.subr.mxu0 0.0
        %355 = vmatpush1.msra.mxu0 0.0
        %356 = vmatprep.subr.mxu0 0.0
        %357 = vmatpush1.msra.mxu0 0.0
        %358 = vmatprep.subr.mxu0 0.0
        %359 = vmatpush1.msra.mxu0 0.0
        %360 = vmatprep.subr.mxu0 0.0
        %361 = vmatpush1.msra.mxu0 0.0
        %362 = vmatprep.subr.mxu0 0.0
        %363 = vmatpush1.msra.mxu0 0.0
        %364 = vmatprep.subr.mxu0 0.0
        %365 = vmatpush1.msra.mxu0 0.0
        %366 = vmatprep.subr.mxu0 0.0
        %367 = vmatpush1.msra.mxu0 0.0
        %368 = vmatprep.mubr.f32.mxu0 0.0
        %369 = vmatmul.mubr.f32.gmra.mrb[0].mxu0 %v302
        %v370 = vpop.f32.mrb[0].mxu0
        %v371 = vadd.f32 %v298, %v370
        %v372 = vpop.f32.mrb[0].mxu0
        %373 = vdwg.mxu0
        %374 = vst [vmem:[%s283] sm:$0xff] %v371
        %p375 = scmp.lt.s32.totalorder %s18, 0
        %s376 = scalar_select %p375, %s18, 0
        %p377 = scmp.lt.s32.totalorder %s19, 2
        %s378 = scalar_select %p377, %s19, 2
        %s379 = smul.addr %s376, 3
        %s380 = sadd.s32 %s378, %s379
        %s381 = smul.addr %s380, 8
        %s382 = scalar_lea.vmem %s3, %s381
        // Predicated region
        $region71: #{dqn_forward.10} parent=65 // pred_check
          %p383 = pneg %p124
        $region72: #{dqn_forward.10} parent=65 // pred_check_branch
          %385 = sbr.rel (%p383) target = $region74
        $region73: #{dqn_forward.10} parent=65 // pred_region
          _
        $region74: #{dqn_forward.10} parent=65 // pred_fallthru
          _
      $region66: #{dqn_forward.10} parent=5 // pred_fallthru
        _
      %p386 = scmp.le.s32.totalorder 2, %s9
      // Predicated region
      $region75: #{dqn_forward.10} parent=5 // pred_check
        %p387 = pneg %p386
      $region76: #{dqn_forward.10} parent=5 // pred_check_branch
        %389 = sbr.rel (%p387) target = $region78
      $region77: #{dqn_forward.10} parent=5 // pred_region
        %s390 = ssub.s32 %s9, 2
        // Predicated region
        $region79: #{dqn_forward.10} parent=77 // pred_check
          %p391 = pneg %p130
        $region80: #{dqn_forward.10} parent=77 // pred_check_branch
          %393 = sbr.rel (%p391) target = $region82
        $region81: #{dqn_forward.10} parent=77 // pred_region
          %p394 = scmp.lt.s32.totalorder %s20, 0
          %s395 = scalar_select %p394, %s20, 0
          %p396 = scmp.lt.s32.totalorder %s21, 2
          %s397 = scalar_select %p396, %s21, 2
          %s398 = smul.addr %s395, 3
          %s399 = sadd.s32 %s397, %s398
          %s400 = smul.addr %s399, 8
          %s401 = scalar_lea.vmem %s3, %s400
        $region82: #{dqn_forward.10} parent=77 // pred_fallthru
          _
      $region78: #{dqn_forward.10} parent=5 // pred_fallthru
        _
    $region6: #{dqn_forward.10} parent=1 // loop_footer
      %s13 = sadd.s32 1, %s9
    $region7: #{dqn_forward.10} parent=1 // loop_footer_branch
      %8 = sbr.rel target = $region3
    $region8: #{dqn_forward.10} parent=1 // loop_exit
      _

// kernel: dqn_forward.9
$region0: #{dqn_forward.9}
  #allocation0 [shape = 'u32[]', space=smem, size = 0x4, offset = 0x4, fixed_abs, tag = 'smem constant byte address 0x4 - core index']
  #allocation1 [shape = 'u32[144,128]{1,0:T(1,128)}', space=vmem, size = 0x12000, scoped, tag = 'internal scratch']
  %s0 = inlined_call_operand.vmem [shape: f32[8,3136], index: 0, kind: input, shape index: {}]
  %s1 = inlined_call_operand.vmem [shape: f32[3136,128], index: 1, kind: input, shape index: {}]
  %s2 = inlined_call_operand.vmem [shape: f32[1,128], index: 2, kind: input, shape index: {}]
  %s3 = inlined_call_operand.vmem [shape: f32[8,128], index: 3, kind: output, shape index: {}]
  %s4 = sld [smem:[#allocation0]]
  $region22: #{dqn_forward.9} parent=0
    _
  %s6 = ssub.s32 1, %s4
  %s7 = scalar_select 0, %s6, %s4
  // Predicated region
  $region2: #{dqn_forward.9} parent=0 // pred_check
    _
  $region3: #{dqn_forward.9} parent=0 // pred_check_branch
    %9 = sbr.rel (0) target = $region5
  $region4: #{dqn_forward.9} parent=0 // pred_region
    _
  $region5: #{dqn_forward.9} parent=0 // pred_fallthru
    _
  // Predicated region
  $region6: #{dqn_forward.9} parent=0 // pred_check
    _
  $region7: #{dqn_forward.9} parent=0 // pred_check_branch
    %11 = sbr.rel (0) target = $region9
  $region8: #{dqn_forward.9} parent=0 // pred_region
    _
  $region9: #{dqn_forward.9} parent=0 // pred_fallthru
    _
  // Predicated region
  $region10: #{dqn_forward.9} parent=0 // pred_check
    _
  $region11: #{dqn_forward.9} parent=0 // pred_check_branch
    %13 = sbr.rel (0) target = $region13
  $region12: #{dqn_forward.9} parent=0 // pred_region
    _
  $region13: #{dqn_forward.9} parent=0 // pred_fallthru
    _
  %v14 = vld [vmem:[%s0] sm:$0xff]
  %v15 = vld [vmem:[%s0 + $0x8] sm:$0xff]
  %v16 = vld [vmem:[%s0 + $0x10] sm:$0xff]
  %v17 = vld [vmem:[%s0 + $0x18] sm:$0xff]
  %v18 = vld [vmem:[%s0 + $0x20] sm:$0xff]
  %v19 = vld [vmem:[%s0 + $0x28] sm:$0xff]
  %v20 = vld [vmem:[%s0 + $0x30] sm:$0xff]
  %v21 = vld [vmem:[%s0 + $0x38] sm:$0xff]
  %v22 = vld [vmem:[%s0 + $0x40] sm:$0xff]
  %v23 = vld [vmem:[%s0 + $0x48] sm:$0xff]
  %v24 = vld [vmem:[%s0 + $0x50] sm:$0xff]
  %v25 = vld [vmem:[%s0 + $0x58] sm:$0xff]
  %v26 = vld [vmem:[%s0 + $0x60] sm:$0xff]
  %v27 = vld [vmem:[%s0 + $0x68] sm:$0xff]
  %v28 = vld [vmem:[%s0 + $0x70] sm:$0xff]
  %v29 = vld [vmem:[%s0 + $0x78] sm:$0xff]
  %v30 = vld [vmem:[%s0 + $0x80] sm:$0xff]
  %v31 = vld [vmem:[%s0 + $0x88] sm:$0xff]
  %v32 = vld [vmem:[%s0 + $0x90] sm:$0xff]
  %v33 = vld [vmem:[%s0 + $0x98] sm:$0xff]
  %v34 = vld [vmem:[%s0 + $0xa0] sm:$0xff]
  %v35 = vld [vmem:[%s0 + $0xa8] sm:$0xff]
  %v36 = vld [vmem:[%s0 + $0xb0] sm:$0xff]
  %v37 = vld [vmem:[%s0 + $0xb8] sm:$0xff]
  %v38 = vld [vmem:[%s0 + $0xc0] sm:$0xff]
  %v39 = vld [vmem:[%s1] sm:$0xff]
  %v40 = vld [vmem:[%s1 + $0x8] sm:$0xff]
  %v41 = vld [vmem:[%s1 + $0x10] sm:$0xff]
  %v42 = vld [vmem:[%s1 + $0x18] sm:$0xff]
  %v43 = vld [vmem:[%s1 + $0x20] sm:$0xff]
  %v44 = vld [vmem:[%s1 + $0x28] sm:$0xff]
  %v45 = vld [vmem:[%s1 + $0x30] sm:$0xff]
  %v46 = vld [vmem:[%s1 + $0x38] sm:$0xff]
  %v47 = vld [vmem:[%s1 + $0x40] sm:$0xff]
  %v48 = vld [vmem:[%s1 + $0x48] sm:$0xff]
  %v49 = vld [vmem:[%s1 + $0x50] sm:$0xff]
  %v50 = vld [vmem:[%s1 + $0x58] sm:$0xff]
  %v51 = vld [vmem:[%s1 + $0x60] sm:$0xff]
  %v52 = vld [vmem:[%s1 + $0x68] sm:$0xff]
  %v53 = vld [vmem:[%s1 + $0x70] sm:$0xff]
  %v54 = vld [vmem:[%s1 + $0x78] sm:$0xff]
  %v55 = vld [vmem:[%s1 + $0x80] sm:$0xff]
  %v56 = vld [vmem:[%s1 + $0x88] sm:$0xff]
  %v57 = vld [vmem:[%s1 + $0x90] sm:$0xff]
  %v58 = vld [vmem:[%s1 + $0x98] sm:$0xff]
  %v59 = vld [vmem:[%s1 + $0xa0] sm:$0xff]
  %v60 = vld [vmem:[%s1 + $0xa8] sm:$0xff]
  %v61 = vld [vmem:[%s1 + $0xb0] sm:$0xff]
  %v62 = vld [vmem:[%s1 + $0xb8] sm:$0xff]
  %v63 = vld [vmem:[%s1 + $0xc0] sm:$0xff]
  %v64 = vld [vmem:[%s1 + $0xc8] sm:$0xff]
  %v65 = vld [vmem:[%s1 + $0xd0] sm:$0xff]
  %v66 = vld [vmem:[%s1 + $0xd8] sm:$0xff]
  %v67 = vld [vmem:[%s1 + $0xe0] sm:$0xff]
  %v68 = vld [vmem:[%s1 + $0xe8] sm:$0xff]
  %v69 = vld [vmem:[%s1 + $0xf0] sm:$0xff]
  %v70 = vld [vmem:[%s1 + $0xf8] sm:$0xff]
  %v71 = vld [vmem:[%s1 + $0x100] sm:$0xff]
  %v72 = vld [vmem:[%s1 + $0x108] sm:$0xff]
  %v73 = vld [vmem:[%s1 + $0x110] sm:$0xff]
  %v74 = vld [vmem:[%s1 + $0x118] sm:$0xff]
  %v75 = vld [vmem:[%s1 + $0x120] sm:$0xff]
  %v76 = vld [vmem:[%s1 + $0x128] sm:$0xff]
  %v77 = vld [vmem:[%s1 + $0x130] sm:$0xff]
  %v78 = vld [vmem:[%s1 + $0x138] sm:$0xff]
  %v79 = vld [vmem:[%s1 + $0x140] sm:$0xff]
  %v80 = vld [vmem:[%s1 + $0x148] sm:$0xff]
  %v81 = vld [vmem:[%s1 + $0x150] sm:$0xff]
  %v82 = vld [vmem:[%s1 + $0x158] sm:$0xff]
  %v83 = vld [vmem:[%s1 + $0x160] sm:$0xff]
  %v84 = vld [vmem:[%s1 + $0x168] sm:$0xff]
  %v85 = vld [vmem:[%s1 + $0x170] sm:$0xff]
  %v86 = vld [vmem:[%s1 + $0x178] sm:$0xff]
  %v87 = vld [vmem:[%s1 + $0x180] sm:$0xff]
  %v88 = vld [vmem:[%s1 + $0x188] sm:$0xff]
  %v89 = vld [vmem:[%s1 + $0x190] sm:$0xff]
  %v90 = vld [vmem:[%s1 + $0x198] sm:$0xff]
  %v91 = vld [vmem:[%s1 + $0x1a0] sm:$0xff]
  %v92 = vld [vmem:[%s1 + $0x1a8] sm:$0xff]
  %v93 = vld [vmem:[%s1 + $0x1b0] sm:$0xff]
  %v94 = vld [vmem:[%s1 + $0x1b8] sm:$0xff]
  %v95 = vld [vmem:[%s1 + $0x1c0] sm:$0xff]
  %v96 = vld [vmem:[%s1 + $0x1c8] sm:$0xff]
  %v97 = vld [vmem:[%s1 + $0x1d0] sm:$0xff]
  %v98 = vld [vmem:[%s1 + $0x1d8] sm:$0xff]
  %v99 = vld [vmem:[%s1 + $0x1e0] sm:$0xff]
  %v100 = vld [vmem:[%s1 + $0x1e8] sm:$0xff]
  %v101 = vld [vmem:[%s1 + $0x1f0] sm:$0xff]
  %v102 = vld [vmem:[%s1 + $0x1f8] sm:$0xff]
  %v103 = vld [vmem:[%s1 + $0x200] sm:$0xff]
  %v104 = vld [vmem:[%s1 + $0x208] sm:$0xff]
  %v105 = vld [vmem:[%s1 + $0x210] sm:$0xff]
  %v106 = vld [vmem:[%s1 + $0x218] sm:$0xff]
  %v107 = vld [vmem:[%s1 + $0x220] sm:$0xff]
  %v108 = vld [vmem:[%s1 + $0x228] sm:$0xff]
  %v109 = vld [vmem:[%s1 + $0x230] sm:$0xff]
  %v110 = vld [vmem:[%s1 + $0x238] sm:$0xff]
  %v111 = vld [vmem:[%s1 + $0x240] sm:$0xff]
  %v112 = vld [vmem:[%s1 + $0x248] sm:$0xff]
  %v113 = vld [vmem:[%s1 + $0x250] sm:$0xff]
  %v114 = vld [vmem:[%s1 + $0x258] sm:$0xff]
  %v115 = vld [vmem:[%s1 + $0x260] sm:$0xff]
  %v116 = vld [vmem:[%s1 + $0x268] sm:$0xff]
  %v117 = vld [vmem:[%s1 + $0x270] sm:$0xff]
  %v118 = vld [vmem:[%s1 + $0x278] sm:$0xff]
  %v119 = vld [vmem:[%s1 + $0x280] sm:$0xff]
  %v120 = vld [vmem:[%s1 + $0x288] sm:$0xff]
  %v121 = vld [vmem:[%s1 + $0x290] sm:$0xff]
  %v122 = vld [vmem:[%s1 + $0x298] sm:$0xff]
  %v123 = vld [vmem:[%s1 + $0x2a0] sm:$0xff]
  %v124 = vld [vmem:[%s1 + $0x2a8] sm:$0xff]
  %v125 = vld [vmem:[%s1 + $0x2b0] sm:$0xff]
  %v126 = vld [vmem:[%s1 + $0x2b8] sm:$0xff]
  %v127 = vld [vmem:[%s1 + $0x2c0] sm:$0xff]
  %v128 = vld [vmem:[%s1 + $0x2c8] sm:$0xff]
  %v129 = vld [vmem:[%s1 + $0x2d0] sm:$0xff]
  %v130 = vld [vmem:[%s1 + $0x2d8] sm:$0xff]
  %v131 = vld [vmem:[%s1 + $0x2e0] sm:$0xff]
  %v132 = vld [vmem:[%s1 + $0x2e8] sm:$0xff]
  %v133 = vld [vmem:[%s1 + $0x2f0] sm:$0xff]
  %v134 = vld [vmem:[%s1 + $0x2f8] sm:$0xff]
  %v135 = vld [vmem:[%s1 + $0x300] sm:$0xff]
  %v136 = vld [vmem:[%s1 + $0x308] sm:$0xff]
  %v137 = vld [vmem:[%s1 + $0x310] sm:$0xff]
  %v138 = vld [vmem:[%s1 + $0x318] sm:$0xff]
  %v139 = vld [vmem:[%s1 + $0x320] sm:$0xff]
  %v140 = vld [vmem:[%s1 + $0x328] sm:$0xff]
  %v141 = vld [vmem:[%s1 + $0x330] sm:$0xff]
  %v142 = vld [vmem:[%s1 + $0x338] sm:$0xff]
  %v143 = vld [vmem:[%s1 + $0x340] sm:$0xff]
  %v144 = vld [vmem:[%s1 + $0x348] sm:$0xff]
  %v145 = vld [vmem:[%s1 + $0x350] sm:$0xff]
  %v146 = vld [vmem:[%s1 + $0x358] sm:$0xff]
  %v147 = vld [vmem:[%s1 + $0x360] sm:$0xff]
  %v148 = vld [vmem:[%s1 + $0x368] sm:$0xff]
  %v149 = vld [vmem:[%s1 + $0x370] sm:$0xff]
  %v150 = vld [vmem:[%s1 + $0x378] sm:$0xff]
  %v151 = vld [vmem:[%s1 + $0x380] sm:$0xff]
  %v152 = vld [vmem:[%s1 + $0x388] sm:$0xff]
  %v153 = vld [vmem:[%s1 + $0x390] sm:$0xff]
  %v154 = vld [vmem:[%s1 + $0x398] sm:$0xff]
  %v155 = vld [vmem:[%s1 + $0x3a0] sm:$0xff]
  %v156 = vld [vmem:[%s1 + $0x3a8] sm:$0xff]
  %v157 = vld [vmem:[%s1 + $0x3b0] sm:$0xff]
  %v158 = vld [vmem:[%s1 + $0x3b8] sm:$0xff]
  %v159 = vld [vmem:[%s1 + $0x3c0] sm:$0xff]
  %v160 = vld [vmem:[%s1 + $0x3c8] sm:$0xff]
  %v161 = vld [vmem:[%s1 + $0x3d0] sm:$0xff]
  %v162 = vld [vmem:[%s1 + $0x3d8] sm:$0xff]
  %v163 = vld [vmem:[%s1 + $0x3e0] sm:$0xff]
  %v164 = vld [vmem:[%s1 + $0x3e8] sm:$0xff]
  %v165 = vld [vmem:[%s1 + $0x3f0] sm:$0xff]
  %v166 = vld [vmem:[%s1 + $0x3f8] sm:$0xff]
  %v167 = vld [vmem:[%s1 + $0x400] sm:$0xff]
  %v168 = vld [vmem:[%s1 + $0x408] sm:$0xff]
  %v169 = vld [vmem:[%s1 + $0x410] sm:$0xff]
  %v170 = vld [vmem:[%s1 + $0x418] sm:$0xff]
  %v171 = vld [vmem:[%s1 + $0x420] sm:$0xff]
  %v172 = vld [vmem:[%s1 + $0x428] sm:$0xff]
  %v173 = vld [vmem:[%s1 + $0x430] sm:$0xff]
  %v174 = vld [vmem:[%s1 + $0x438] sm:$0xff]
  %v175 = vld [vmem:[%s1 + $0x440] sm:$0xff]
  %v176 = vld [vmem:[%s1 + $0x448] sm:$0xff]
  %v177 = vld [vmem:[%s1 + $0x450] sm:$0xff]
  %v178 = vld [vmem:[%s1 + $0x458] sm:$0xff]
  %v179 = vld [vmem:[%s1 + $0x460] sm:$0xff]
  %v180 = vld [vmem:[%s1 + $0x468] sm:$0xff]
  %v181 = vld [vmem:[%s1 + $0x470] sm:$0xff]
  %v182 = vld [vmem:[%s1 + $0x478] sm:$0xff]
  %v183 = vld [vmem:[%s1 + $0x480] sm:$0xff]
  %v184 = vld [vmem:[%s1 + $0x488] sm:$0xff]
  %v185 = vld [vmem:[%s1 + $0x490] sm:$0xff]
  %v186 = vld [vmem:[%s1 + $0x498] sm:$0xff]
  %v187 = vld [vmem:[%s1 + $0x4a0] sm:$0xff]
  %v188 = vld [vmem:[%s1 + $0x4a8] sm:$0xff]
  %v189 = vld [vmem:[%s1 + $0x4b0] sm:$0xff]
  %v190 = vld [vmem:[%s1 + $0x4b8] sm:$0xff]
  %v191 = vld [vmem:[%s1 + $0x4c0] sm:$0xff]
  %v192 = vld [vmem:[%s1 + $0x4c8] sm:$0xff]
  %v193 = vld [vmem:[%s1 + $0x4d0] sm:$0xff]
  %v194 = vld [vmem:[%s1 + $0x4d8] sm:$0xff]
  %v195 = vld [vmem:[%s1 + $0x4e0] sm:$0xff]
  %v196 = vld [vmem:[%s1 + $0x4e8] sm:$0xff]
  %v197 = vld [vmem:[%s1 + $0x4f0] sm:$0xff]
  %v198 = vld [vmem:[%s1 + $0x4f8] sm:$0xff]
  %v199 = vld [vmem:[%s1 + $0x500] sm:$0xff]
  %v200 = vld [vmem:[%s1 + $0x508] sm:$0xff]
  %v201 = vld [vmem:[%s1 + $0x510] sm:$0xff]
  %v202 = vld [vmem:[%s1 + $0x518] sm:$0xff]
  %v203 = vld [vmem:[%s1 + $0x520] sm:$0xff]
  %v204 = vld [vmem:[%s1 + $0x528] sm:$0xff]
  %v205 = vld [vmem:[%s1 + $0x530] sm:$0xff]
  %v206 = vld [vmem:[%s1 + $0x538] sm:$0xff]
  %v207 = vld [vmem:[%s1 + $0x540] sm:$0xff]
  %v208 = vld [vmem:[%s1 + $0x548] sm:$0xff]
  %v209 = vld [vmem:[%s1 + $0x550] sm:$0xff]
  %v210 = vld [vmem:[%s1 + $0x558] sm:$0xff]
  %v211 = vld [vmem:[%s1 + $0x560] sm:$0xff]
  %v212 = vld [vmem:[%s1 + $0x568] sm:$0xff]
  %v213 = vld [vmem:[%s1 + $0x570] sm:$0xff]
  %v214 = vld [vmem:[%s1 + $0x578] sm:$0xff]
  %v215 = vld [vmem:[%s1 + $0x580] sm:$0xff]
  %v216 = vld [vmem:[%s1 + $0x588] sm:$0xff]
  %v217 = vld [vmem:[%s1 + $0x590] sm:$0xff]
  %v218 = vld [vmem:[%s1 + $0x598] sm:$0xff]
  %v219 = vld [vmem:[%s1 + $0x5a0] sm:$0xff]
  %v220 = vld [vmem:[%s1 + $0x5a8] sm:$0xff]
  %v221 = vld [vmem:[%s1 + $0x5b0] sm:$0xff]
  %v222 = vld [vmem:[%s1 + $0x5b8] sm:$0xff]
  %v223 = vld [vmem:[%s1 + $0x5c0] sm:$0xff]
  %v224 = vld [vmem:[%s1 + $0x5c8] sm:$0xff]
  %v225 = vld [vmem:[%s1 + $0x5d0] sm:$0xff]
  %v226 = vld [vmem:[%s1 + $0x5d8] sm:$0xff]
  %v227 = vld [vmem:[%s1 + $0x5e0] sm:$0xff]
  %v228 = vld [vmem:[%s1 + $0x5e8] sm:$0xff]
  %v229 = vld [vmem:[%s1 + $0x5f0] sm:$0xff]
  %v230 = vld [vmem:[%s1 + $0x5f8] sm:$0xff]
  %v231 = vld [vmem:[%s1 + $0x600] sm:$0xff]
  %v232 = vld [vmem:[%s1 + $0x608] sm:$0xff]
  %v233 = vld [vmem:[%s1 + $0x610] sm:$0xff]
  %v234 = vld [vmem:[%s1 + $0x618] sm:$0xff]
  %v235 = vld [vmem:[%s1 + $0x620] sm:$0xff]
  %v236 = vld [vmem:[%s1 + $0x628] sm:$0xff]
  %v237 = vld [vmem:[%s1 + $0x630] sm:$0xff]
  %v238 = vld [vmem:[%s1 + $0x638] sm:$0xff]
  %v239 = vld [vmem:[%s1 + $0x640] sm:$0xff]
  %v240 = vld [vmem:[%s1 + $0x648] sm:$0xff]
  %v241 = vld [vmem:[%s1 + $0x650] sm:$0xff]
  %v242 = vld [vmem:[%s1 + $0x658] sm:$0xff]
  %v243 = vld [vmem:[%s1 + $0x660] sm:$0xff]
  %v244 = vld [vmem:[%s1 + $0x668] sm:$0xff]
  %v245 = vld [vmem:[%s1 + $0x670] sm:$0xff]
  %v246 = vld [vmem:[%s1 + $0x678] sm:$0xff]
  %v247 = vld [vmem:[%s1 + $0x680] sm:$0xff]
  %v248 = vld [vmem:[%s1 + $0x688] sm:$0xff]
  %v249 = vld [vmem:[%s1 + $0x690] sm:$0xff]
  %v250 = vld [vmem:[%s1 + $0x698] sm:$0xff]
  %v251 = vld [vmem:[%s1 + $0x6a0] sm:$0xff]
  %v252 = vld [vmem:[%s1 + $0x6a8] sm:$0xff]
  %v253 = vld [vmem:[%s1 + $0x6b0] sm:$0xff]
  %v254 = vld [vmem:[%s1 + $0x6b8] sm:$0xff]
  %v255 = vld [vmem:[%s1 + $0x6c0] sm:$0xff]
  %v256 = vld [vmem:[%s1 + $0x6c8] sm:$0xff]
  %v257 = vld [vmem:[%s1 + $0x6d0] sm:$0xff]
  %v258 = vld [vmem:[%s1 + $0x6d8] sm:$0xff]
  %v259 = vld [vmem:[%s1 + $0x6e0] sm:$0xff]
  %v260 = vld [vmem:[%s1 + $0x6e8] sm:$0xff]
  %v261 = vld [vmem:[%s1 + $0x6f0] sm:$0xff]
  %v262 = vld [vmem:[%s1 + $0x6f8] sm:$0xff]
  %v263 = vld [vmem:[%s1 + $0x700] sm:$0xff]
  %v264 = vld [vmem:[%s1 + $0x708] sm:$0xff]
  %v265 = vld [vmem:[%s1 + $0x710] sm:$0xff]
  %v266 = vld [vmem:[%s1 + $0x718] sm:$0xff]
  %v267 = vld [vmem:[%s1 + $0x720] sm:$0xff]
  %v268 = vld [vmem:[%s1 + $0x728] sm:$0xff]
  %v269 = vld [vmem:[%s1 + $0x730] sm:$0xff]
  %v270 = vld [vmem:[%s1 + $0x738] sm:$0xff]
  %v271 = vld [vmem:[%s1 + $0x740] sm:$0xff]
  %v272 = vld [vmem:[%s1 + $0x748] sm:$0xff]
  %v273 = vld [vmem:[%s1 + $0x750] sm:$0xff]
  %v274 = vld [vmem:[%s1 + $0x758] sm:$0xff]
  %v275 = vld [vmem:[%s1 + $0x760] sm:$0xff]
  %v276 = vld [vmem:[%s1 + $0x768] sm:$0xff]
  %v277 = vld [vmem:[%s1 + $0x770] sm:$0xff]
  %v278 = vld [vmem:[%s1 + $0x778] sm:$0xff]
  %v279 = vld [vmem:[%s1 + $0x780] sm:$0xff]
  %v280 = vld [vmem:[%s1 + $0x788] sm:$0xff]
  %v281 = vld [vmem:[%s1 + $0x790] sm:$0xff]
  %v282 = vld [vmem:[%s1 + $0x798] sm:$0xff]
  %v283 = vld [vmem:[%s1 + $0x7a0] sm:$0xff]
  %v284 = vld [vmem:[%s1 + $0x7a8] sm:$0xff]
  %v285 = vld [vmem:[%s1 + $0x7b0] sm:$0xff]
  %v286 = vld [vmem:[%s1 + $0x7b8] sm:$0xff]
  %v287 = vld [vmem:[%s1 + $0x7c0] sm:$0xff]
  %v288 = vld [vmem:[%s1 + $0x7c8] sm:$0xff]
  %v289 = vld [vmem:[%s1 + $0x7d0] sm:$0xff]
  %v290 = vld [vmem:[%s1 + $0x7d8] sm:$0xff]
  %v291 = vld [vmem:[%s1 + $0x7e0] sm:$0xff]
  %v292 = vld [vmem:[%s1 + $0x7e8] sm:$0xff]
  %v293 = vld [vmem:[%s1 + $0x7f0] sm:$0xff]
  %v294 = vld [vmem:[%s1 + $0x7f8] sm:$0xff]
  %v295 = vld [vmem:[%s1 + $0x800] sm:$0xff]
  %v296 = vld [vmem:[%s1 + $0x808] sm:$0xff]
  %v297 = vld [vmem:[%s1 + $0x810] sm:$0xff]
  %v298 = vld [vmem:[%s1 + $0x818] sm:$0xff]
  %v299 = vld [vmem:[%s1 + $0x820] sm:$0xff]
  %v300 = vld [vmem:[%s1 + $0x828] sm:$0xff]
  %v301 = vld [vmem:[%s1 + $0x830] sm:$0xff]
  %v302 = vld [vmem:[%s1 + $0x838] sm:$0xff]
  %v303 = vld [vmem:[%s1 + $0x840] sm:$0xff]
  %v304 = vld [vmem:[%s1 + $0x848] sm:$0xff]
  %v305 = vld [vmem:[%s1 + $0x850] sm:$0xff]
  %v306 = vld [vmem:[%s1 + $0x858] sm:$0xff]
  %v307 = vld [vmem:[%s1 + $0x860] sm:$0xff]
  %v308 = vld [vmem:[%s1 + $0x868] sm:$0xff]
  %v309 = vld [vmem:[%s1 + $0x870] sm:$0xff]
  %v310 = vld [vmem:[%s1 + $0x878] sm:$0xff]
  %v311 = vld [vmem:[%s1 + $0x880] sm:$0xff]
  %v312 = vld [vmem:[%s1 + $0x888] sm:$0xff]
  %v313 = vld [vmem:[%s1 + $0x890] sm:$0xff]
  %v314 = vld [vmem:[%s1 + $0x898] sm:$0xff]
  %v315 = vld [vmem:[%s1 + $0x8a0] sm:$0xff]
  %v316 = vld [vmem:[%s1 + $0x8a8] sm:$0xff]
  %v317 = vld [vmem:[%s1 + $0x8b0] sm:$0xff]
  %v318 = vld [vmem:[%s1 + $0x8b8] sm:$0xff]
  %v319 = vld [vmem:[%s1 + $0x8c0] sm:$0xff]
  %v320 = vld [vmem:[%s1 + $0x8c8] sm:$0xff]
  %v321 = vld [vmem:[%s1 + $0x8d0] sm:$0xff]
  %v322 = vld [vmem:[%s1 + $0x8d8] sm:$0xff]
  %v323 = vld [vmem:[%s1 + $0x8e0] sm:$0xff]
  %v324 = vld [vmem:[%s1 + $0x8e8] sm:$0xff]
  %v325 = vld [vmem:[%s1 + $0x8f0] sm:$0xff]
  %v326 = vld [vmem:[%s1 + $0x8f8] sm:$0xff]
  %v327 = vld [vmem:[%s1 + $0x900] sm:$0xff]
  %v328 = vld [vmem:[%s1 + $0x908] sm:$0xff]
  %v329 = vld [vmem:[%s1 + $0x910] sm:$0xff]
  %v330 = vld [vmem:[%s1 + $0x918] sm:$0xff]
  %v331 = vld [vmem:[%s1 + $0x920] sm:$0xff]
  %v332 = vld [vmem:[%s1 + $0x928] sm:$0xff]
  %v333 = vld [vmem:[%s1 + $0x930] sm:$0xff]
  %v334 = vld [vmem:[%s1 + $0x938] sm:$0xff]
  %v335 = vld [vmem:[%s1 + $0x940] sm:$0xff]
  %v336 = vld [vmem:[%s1 + $0x948] sm:$0xff]
  %v337 = vld [vmem:[%s1 + $0x950] sm:$0xff]
  %v338 = vld [vmem:[%s1 + $0x958] sm:$0xff]
  %v339 = vld [vmem:[%s1 + $0x960] sm:$0xff]
  %v340 = vld [vmem:[%s1 + $0x968] sm:$0xff]
  %v341 = vld [vmem:[%s1 + $0x970] sm:$0xff]
  %v342 = vld [vmem:[%s1 + $0x978] sm:$0xff]
  %v343 = vld [vmem:[%s1 + $0x980] sm:$0xff]
  %v344 = vld [vmem:[%s1 + $0x988] sm:$0xff]
  %v345 = vld [vmem:[%s1 + $0x990] sm:$0xff]
  %v346 = vld [vmem:[%s1 + $0x998] sm:$0xff]
  %v347 = vld [vmem:[%s1 + $0x9a0] sm:$0xff]
  %v348 = vld [vmem:[%s1 + $0x9a8] sm:$0xff]
  %v349 = vld [vmem:[%s1 + $0x9b0] sm:$0xff]
  %v350 = vld [vmem:[%s1 + $0x9b8] sm:$0xff]
  %v351 = vld [vmem:[%s1 + $0x9c0] sm:$0xff]
  %v352 = vld [vmem:[%s1 + $0x9c8] sm:$0xff]
  %v353 = vld [vmem:[%s1 + $0x9d0] sm:$0xff]
  %v354 = vld [vmem:[%s1 + $0x9d8] sm:$0xff]
  %v355 = vld [vmem:[%s1 + $0x9e0] sm:$0xff]
  %v356 = vld [vmem:[%s1 + $0x9e8] sm:$0xff]
  %v357 = vld [vmem:[%s1 + $0x9f0] sm:$0xff]
  %v358 = vld [vmem:[%s1 + $0x9f8] sm:$0xff]
  %v359 = vld [vmem:[%s1 + $0xa00] sm:$0xff]
  %v360 = vld [vmem:[%s1 + $0xa08] sm:$0xff]
  %v361 = vld [vmem:[%s1 + $0xa10] sm:$0xff]
  %v362 = vld [vmem:[%s1 + $0xa18] sm:$0xff]
  %v363 = vld [vmem:[%s1 + $0xa20] sm:$0xff]
  %v364 = vld [vmem:[%s1 + $0xa28] sm:$0xff]
  %v365 = vld [vmem:[%s1 + $0xa30] sm:$0xff]
  %v366 = vld [vmem:[%s1 + $0xa38] sm:$0xff]
  %v367 = vld [vmem:[%s1 + $0xa40] sm:$0xff]
  %v368 = vld [vmem:[%s1 + $0xa48] sm:$0xff]
  %v369 = vld [vmem:[%s1 + $0xa50] sm:$0xff]
  %v370 = vld [vmem:[%s1 + $0xa58] sm:$0xff]
  %v371 = vld [vmem:[%s1 + $0xa60] sm:$0xff]
  %v372 = vld [vmem:[%s1 + $0xa68] sm:$0xff]
  %v373 = vld [vmem:[%s1 + $0xa70] sm:$0xff]
  %v374 = vld [vmem:[%s1 + $0xa78] sm:$0xff]
  %v375 = vld [vmem:[%s1 + $0xa80] sm:$0xff]
  %v376 = vld [vmem:[%s1 + $0xa88] sm:$0xff]
  %v377 = vld [vmem:[%s1 + $0xa90] sm:$0xff]
  %v378 = vld [vmem:[%s1 + $0xa98] sm:$0xff]
  %v379 = vld [vmem:[%s1 + $0xaa0] sm:$0xff]
  %v380 = vld [vmem:[%s1 + $0xaa8] sm:$0xff]
  %v381 = vld [vmem:[%s1 + $0xab0] sm:$0xff]
  %v382 = vld [vmem:[%s1 + $0xab8] sm:$0xff]
  %v383 = vld [vmem:[%s1 + $0xac0] sm:$0xff]
  %v384 = vld [vmem:[%s1 + $0xac8] sm:$0xff]
  %v385 = vld [vmem:[%s1 + $0xad0] sm:$0xff]
  %v386 = vld [vmem:[%s1 + $0xad8] sm:$0xff]
  %v387 = vld [vmem:[%s1 + $0xae0] sm:$0xff]
  %v388 = vld [vmem:[%s1 + $0xae8] sm:$0xff]
  %v389 = vld [vmem:[%s1 + $0xaf0] sm:$0xff]
  %v390 = vld [vmem:[%s1 + $0xaf8] sm:$0xff]
  %v391 = vld [vmem:[%s1 + $0xb00] sm:$0xff]
  %v392 = vld [vmem:[%s1 + $0xb08] sm:$0xff]
  %v393 = vld [vmem:[%s1 + $0xb10] sm:$0xff]
  %v394 = vld [vmem:[%s1 + $0xb18] sm:$0xff]
  %v395 = vld [vmem:[%s1 + $0xb20] sm:$0xff]
  %v396 = vld [vmem:[%s1 + $0xb28] sm:$0xff]
  %v397 = vld [vmem:[%s1 + $0xb30] sm:$0xff]
  %v398 = vld [vmem:[%s1 + $0xb38] sm:$0xff]
  %v399 = vld [vmem:[%s1 + $0xb40] sm:$0xff]
  %v400 = vld [vmem:[%s1 + $0xb48] sm:$0xff]
  %v401 = vld [vmem:[%s1 + $0xb50] sm:$0xff]
  %v402 = vld [vmem:[%s1 + $0xb58] sm:$0xff]
  %v403 = vld [vmem:[%s1 + $0xb60] sm:$0xff]
  %v404 = vld [vmem:[%s1 + $0xb68] sm:$0xff]
  %v405 = vld [vmem:[%s1 + $0xb70] sm:$0xff]
  %v406 = vld [vmem:[%s1 + $0xb78] sm:$0xff]
  %v407 = vld [vmem:[%s1 + $0xb80] sm:$0xff]
  %v408 = vld [vmem:[%s1 + $0xb88] sm:$0xff]
  %v409 = vld [vmem:[%s1 + $0xb90] sm:$0xff]
  %v410 = vld [vmem:[%s1 + $0xb98] sm:$0xff]
  %v411 = vld [vmem:[%s1 + $0xba0] sm:$0xff]
  %v412 = vld [vmem:[%s1 + $0xba8] sm:$0xff]
  %v413 = vld [vmem:[%s1 + $0xbb0] sm:$0xff]
  %v414 = vld [vmem:[%s1 + $0xbb8] sm:$0xff]
  %v415 = vld [vmem:[%s1 + $0xbc0] sm:$0xff]
  %v416 = vld [vmem:[%s1 + $0xbc8] sm:$0xff]
  %v417 = vld [vmem:[%s1 + $0xbd0] sm:$0xff]
  %v418 = vld [vmem:[%s1 + $0xbd8] sm:$0xff]
  %v419 = vld [vmem:[%s1 + $0xbe0] sm:$0xff]
  %v420 = vld [vmem:[%s1 + $0xbe8] sm:$0xff]
  %v421 = vld [vmem:[%s1 + $0xbf0] sm:$0xff]
  %v422 = vld [vmem:[%s1 + $0xbf8] sm:$0xff]
  %v423 = vld [vmem:[%s1 + $0xc00] sm:$0xff]
  %v424 = vld [vmem:[%s1 + $0xc08] sm:$0xff]
  %v425 = vld [vmem:[%s1 + $0xc10] sm:$0xff]
  %v426 = vld [vmem:[%s1 + $0xc18] sm:$0xff]
  %v427 = vld [vmem:[%s1 + $0xc20] sm:$0xff]
  %v428 = vld [vmem:[%s1 + $0xc28] sm:$0xff]
  %v429 = vld [vmem:[%s1 + $0xc30] sm:$0xff]
  %v430 = vld [vmem:[%s1 + $0xc38] sm:$0xff]
  %v431 = vld [vmem:[%s2] sm:$0x1]
  %v433 = vlaneseq
  %v434 = vshrl.u32 %v433, 7
  %v435 = vsub.s32 0, %v434
  %v436 = vrot.slane %v431, %v435
  %vm438 = vcmask 523264
  %v440 = vsel %vm438, %v38, 0
  %442 = vmatprep.subr.mxu0 0.0
  %443 = vmatpush1.msra.mxu0 %v39
  %444 = vmatprep.subr.mxu0 0.0
  %445 = vmatpush1.msra.mxu0 %v40
  %446 = vmatprep.subr.mxu0 0.0
  %447 = vmatpush1.msra.mxu0 %v41
  %448 = vmatprep.subr.mxu0 0.0
  %449 = vmatpush1.msra.mxu0 %v42
  %450 = vmatprep.subr.mxu0 0.0
  %451 = vmatpush1.msra.mxu0 %v43
  %452 = vmatprep.subr.mxu0 0.0
  %453 = vmatpush1.msra.mxu0 %v44
  %454 = vmatprep.subr.mxu0 0.0
  %455 = vmatpush1.msra.mxu0 %v45
  %456 = vmatprep.subr.mxu0 0.0
  %457 = vmatpush1.msra.mxu0 %v46
  %458 = vmatprep.subr.mxu0 0.0
  %459 = vmatpush1.msra.mxu0 %v47
  %460 = vmatprep.subr.mxu0 0.0
  %461 = vmatpush1.msra.mxu0 %v48
  %462 = vmatprep.subr.mxu0 0.0
  %463 = vmatpush1.msra.mxu0 %v49
  %464 = vmatprep.subr.mxu0 0.0
  %465 = vmatpush1.msra.mxu0 %v50
  %466 = vmatprep.subr.mxu0 0.0
  %467 = vmatpush1.msra.mxu0 %v51
  %468 = vmatprep.subr.mxu0 0.0
  %469 = vmatpush1.msra.mxu0 %v52
  %470 = vmatprep.subr.mxu0 0.0
  %471 = vmatpush1.msra.mxu0 %v53
  %472 = vmatprep.subr.mxu0 0.0
  %473 = vmatpush1.msra.mxu0 %v54
  %474 = vmatprep.subr.mxu0 0.0
  %475 = vmatpush1.msra.mxu0 %v55
  %476 = vmatprep.subr.mxu0 0.0
  %477 = vmatpush1.msra.mxu0 %v56
  %478 = vmatprep.subr.mxu0 0.0
  %479 = vmatpush1.msra.mxu0 %v57
  %480 = vmatprep.subr.mxu0 0.0
  %481 = vmatpush1.msra.mxu0 %v58
  %482 = vmatprep.subr.mxu0 0.0
  %483 = vmatpush1.msra.mxu0 %v59
  %484 = vmatprep.subr.mxu0 0.0
  %485 = vmatpush1.msra.mxu0 %v60
  %486 = vmatprep.subr.mxu0 0.0
  %487 = vmatpush1.msra.mxu0 %v61
  %488 = vmatprep.subr.mxu0 0.0
  %489 = vmatpush1.msra.mxu0 %v62
  %490 = vmatprep.subr.mxu0 0.0
  %491 = vmatpush1.msra.mxu0 %v63
  %492 = vmatprep.subr.mxu0 0.0
  %493 = vmatpush1.msra.mxu0 %v64
  %494 = vmatprep.subr.mxu0 0.0
  %495 = vmatpush1.msra.mxu0 %v65
  %496 = vmatprep.subr.mxu0 0.0
  %497 = vmatpush1.msra.mxu0 %v66
  %498 = vmatprep.subr.mxu0 0.0
  %499 = vmatpush1.msra.mxu0 %v67
  %500 = vmatprep.subr.mxu0 0.0
  %501 = vmatpush1.msra.mxu0 %v68
  %502 = vmatprep.subr.mxu0 0.0
  %503 = vmatpush1.msra.mxu0 %v69
  %504 = vmatprep.subr.mxu0 0.0
  %505 = vmatpush1.msra.mxu0 %v70
  %506 = vmatprep.mubr.f32.mxu0 %v15
  %507 = vmatmul.mubr.f32.gmra.mrb[0].mxu0 %v14
  %v508 = vpop.f32.mrb[0].mxu0
  %v509 = vadd.f32 %v436, %v508
  %v510 = vpop.f32.mrb[0].mxu0
  %511 = vdwg.mxu0
  %512 = vmatprep.subr.mxu0 0.0
  %513 = vmatpush1.msra.mxu0 %v71
  %514 = vmatprep.subr.mxu0 0.0
  %515 = vmatpush1.msra.mxu0 %v72
  %516 = vmatprep.subr.mxu0 0.0
  %517 = vmatpush1.msra.mxu0 %v73
  %518 = vmatprep.subr.mxu0 0.0
  %519 = vmatpush1.msra.mxu0 %v74
  %520 = vmatprep.subr.mxu0 0.0
  %521 = vmatpush1.msra.mxu0 %v75
  %522 = vmatprep.subr.mxu0 0.0
  %523 = vmatpush1.msra.mxu0 %v76
  %524 = vmatprep.subr.mxu0 0.0
  %525 = vmatpush1.msra.mxu0 %v77
  %526 = vmatprep.subr.mxu0 0.0
  %527 = vmatpush1.msra.mxu0 %v78
  %528 = vmatprep.subr.mxu0 0.0
  %529 = vmatpush1.msra.mxu0 %v79
  %530 = vmatprep.subr.mxu0 0.0
  %531 = vmatpush1.msra.mxu0 %v80
  %532 = vmatprep.subr.mxu0 0.0
  %533 = vmatpush1.msra.mxu0 %v81
  %534 = vmatprep.subr.mxu0 0.0
  %535 = vmatpush1.msra.mxu0 %v82
  %536 = vmatprep.subr.mxu0 0.0
  %537 = vmatpush1.msra.mxu0 %v83
  %538 = vmatprep.subr.mxu0 0.0
  %539 = vmatpush1.msra.mxu0 %v84
  %540 = vmatprep.subr.mxu0 0.0
  %541 = vmatpush1.msra.mxu0 %v85
  %542 = vmatprep.subr.mxu0 0.0
  %543 = vmatpush1.msra.mxu0 %v86
  %544 = vmatprep.subr.mxu0 0.0
  %545 = vmatpush1.msra.mxu0 %v87
  %546 = vmatprep.subr.mxu0 0.0
  %547 = vmatpush1.msra.mxu0 %v88
  %548 = vmatprep.subr.mxu0 0.0
  %549 = vmatpush1.msra.mxu0 %v89
  %550 = vmatprep.subr.mxu0 0.0
  %551 = vmatpush1.msra.mxu0 %v90
  %552 = vmatprep.subr.mxu0 0.0
  %553 = vmatpush1.msra.mxu0 %v91
  %554 = vmatprep.subr.mxu0 0.0
  %555 = vmatpush1.msra.mxu0 %v92
  %556 = vmatprep.subr.mxu0 0.0
  %557 = vmatpush1.msra.mxu0 %v93
  %558 = vmatprep.subr.mxu0 0.0
  %559 = vmatpush1.msra.mxu0 %v94
  %560 = vmatprep.subr.mxu0 0.0
  %561 = vmatpush1.msra.mxu0 %v95
  %562 = vmatprep.subr.mxu0 0.0
  %563 = vmatpush1.msra.mxu0 %v96
  %564 = vmatprep.subr.mxu0 0.0
  %565 = vmatpush1.msra.mxu0 %v97
  %566 = vmatprep.subr.mxu0 0.0
  %567 = vmatpush1.msra.mxu0 %v98
  %568 = vmatprep.subr.mxu0 0.0
  %569 = vmatpush1.msra.mxu0 %v99
  %570 = vmatprep.subr.mxu0 0.0
  %571 = vmatpush1.msra.mxu0 %v100
  %572 = vmatprep.subr.mxu0 0.0
  %573 = vmatpush1.msra.mxu0 %v101
  %574 = vmatprep.subr.mxu0 0.0
  %575 = vmatpush1.msra.mxu0 %v102
  %576 = vmatprep.mubr.f32.mxu0 %v17
  %577 = vmatmul.mubr.f32.gmra.mrb[0].mxu0 %v16
  %v578 = vpop.f32.mrb[0].mxu0
  %v579 = vadd.f32 %v509, %v578
  %v580 = vpop.f32.mrb[0].mxu0
  %581 = vdwg.mxu0
  %582 = vmatprep.subr.mxu0 0.0
  %583 = vmatpush1.msra.mxu0 %v103
  %584 = vmatprep.subr.mxu0 0.0
  %585 = vmatpush1.msra.mxu0 %v104
  %586 = vmatprep.subr.mxu0 0.0
  %587 = vmatpush1.msra.mxu0 %v105
  %588 = vmatprep.subr.mxu0 0.0
  %589 = vmatpush1.msra.mxu0 %v106
  %590 = vmatprep.subr.mxu0 0.0
  %591 = vmatpush1.msra.mxu0 %v107
  %592 = vmatprep.subr.mxu0 0.0
  %593 = vmatpush1.msra.mxu0 %v108
  %594 = vmatprep.subr.mxu0 0.0
  %595 = vmatpush1.msra.mxu0 %v109
  %596 = vmatprep.subr.mxu0 0.0
  %597 = vmatpush1.msra.mxu0 %v110
  %598 = vmatprep.subr.mxu0 0.0
  %599 = vmatpush1.msra.mxu0 %v111
  %600 = vmatprep.subr.mxu0 0.0
  %601 = vmatpush1.msra.mxu0 %v112
  %602 = vmatprep.subr.mxu0 0.0
  %603 = vmatpush1.msra.mxu0 %v113
  %604 = vmatprep.subr.mxu0 0.0
  %605 = vmatpush1.msra.mxu0 %v114
  %606 = vmatprep.subr.mxu0 0.0
  %607 = vmatpush1.msra.mxu0 %v115
  %608 = vmatprep.subr.mxu0 0.0
  %609 = vmatpush1.msra.mxu0 %v116
  %610 = vmatprep.subr.mxu0 0.0
  %611 = vmatpush1.msra.mxu0 %v117
  %612 = vmatprep.subr.mxu0 0.0
  %613 = vmatpush1.msra.mxu0 %v118
  %614 = vmatprep.subr.mxu0 0.0
  %615 = vmatpush1.msra.mxu0 %v119
  %616 = vmatprep.subr.mxu0 0.0
  %617 = vmatpush1.msra.mxu0 %v120
  %618 = vmatprep.subr.mxu0 0.0
  %619 = vmatpush1.msra.mxu0 %v121
  %620 = vmatprep.subr.mxu0 0.0
  %621 = vmatpush1.msra.mxu0 %v122
  %622 = vmatprep.subr.mxu0 0.0
  %623 = vmatpush1.msra.mxu0 %v123
  %624 = vmatprep.subr.mxu0 0.0
  %625 = vmatpush1.msra.mxu0 %v124
  %626 = vmatprep.subr.mxu0 0.0
  %627 = vmatpush1.msra.mxu0 %v125
  %628 = vmatprep.subr.mxu0 0.0
  %629 = vmatpush1.msra.mxu0 %v126
  %630 = vmatprep.subr.mxu0 0.0
  %631 = vmatpush1.msra.mxu0 %v127
  %632 = vmatprep.subr.mxu0 0.0
  %633 = vmatpush1.msra.mxu0 %v128
  %634 = vmatprep.subr.mxu0 0.0
  %635 = vmatpush1.msra.mxu0 %v129
  %636 = vmatprep.subr.mxu0 0.0
  %637 = vmatpush1.msra.mxu0 %v130
  %638 = vmatprep.subr.mxu0 0.0
  %639 = vmatpush1.msra.mxu0 %v131
  %640 = vmatprep.subr.mxu0 0.0
  %641 = vmatpush1.msra.mxu0 %v132
  %642 = vmatprep.subr.mxu0 0.0
  %643 = vmatpush1.msra.mxu0 %v133
  %644 = vmatprep.subr.mxu0 0.0
  %645 = vmatpush1.msra.mxu0 %v134
  %646 = vmatprep.mubr.f32.mxu0 %v19
  %647 = vmatmul.mubr.f32.gmra.mrb[0].mxu0 %v18
  %v648 = vpop.f32.mrb[0].mxu0
  %v649 = vadd.f32 %v579, %v648
  %v650 = vpop.f32.mrb[0].mxu0
  %651 = vdwg.mxu0
  %652 = vmatprep.subr.mxu0 0.0
  %653 = vmatpush1.msra.mxu0 %v135
  %654 = vmatprep.subr.mxu0 0.0
  %655 = vmatpush1.msra.mxu0 %v136
  %656 = vmatprep.subr.mxu0 0.0
  %657 = vmatpush1.msra.mxu0 %v137
  %658 = vmatprep.subr.mxu0 0.0
  %659 = vmatpush1.msra.mxu0 %v138
  %660 = vmatprep.subr.mxu0 0.0
  %661 = vmatpush1.msra.mxu0 %v139
  %662 = vmatprep.subr.mxu0 0.0
  %663 = vmatpush1.msra.mxu0 %v140
  %664 = vmatprep.subr.mxu0 0.0
  %665 = vmatpush1.msra.mxu0 %v141
  %666 = vmatprep.subr.mxu0 0.0
  %667 = vmatpush1.msra.mxu0 %v142
  %668 = vmatprep.subr.mxu0 0.0
  %669 = vmatpush1.msra.mxu0 %v143
  %670 = vmatprep.subr.mxu0 0.0
  %671 = vmatpush1.msra.mxu0 %v144
  %672 = vmatprep.subr.mxu0 0.0
  %673 = vmatpush1.msra.mxu0 %v145
  %674 = vmatprep.subr.mxu0 0.0
  %675 = vmatpush1.msra.mxu0 %v146
  %676 = vmatprep.subr.mxu0 0.0
  %677 = vmatpush1.msra.mxu0 %v147
  %678 = vmatprep.subr.mxu0 0.0
  %679 = vmatpush1.msra.mxu0 %v148
  %680 = vmatprep.subr.mxu0 0.0
  %681 = vmatpush1.msra.mxu0 %v149
  %682 = vmatprep.subr.mxu0 0.0
  %683 = vmatpush1.msra.mxu0 %v150
  %684 = vmatprep.subr.mxu0 0.0
  %685 = vmatpush1.msra.mxu0 %v151
  %686 = vmatprep.subr.mxu0 0.0
  %687 = vmatpush1.msra.mxu0 %v152
  %688 = vmatprep.subr.mxu0 0.0
  %689 = vmatpush1.msra.mxu0 %v153
  %690 = vmatprep.subr.mxu0 0.0
  %691 = vmatpush1.msra.mxu0 %v154
  %692 = vmatprep.subr.mxu0 0.0
  %693 = vmatpush1.msra.mxu0 %v155
  %694 = vmatprep.subr.mxu0 0.0
  %695 = vmatpush1.msra.mxu0 %v156
  %696 = vmatprep.subr.mxu0 0.0
  %697 = vmatpush1.msra.mxu0 %v157
  %698 = vmatprep.subr.mxu0 0.0
  %699 = vmatpush1.msra.mxu0 %v158
  %700 = vmatprep.subr.mxu0 0.0
  %701 = vmatpush1.msra.mxu0 %v159
  %702 = vmatprep.subr.mxu0 0.0
  %703 = vmatpush1.msra.mxu0 %v160
  %704 = vmatprep.subr.mxu0 0.0
  %705 = vmatpush1.msra.mxu0 %v161
  %706 = vmatprep.subr.mxu0 0.0
  %707 = vmatpush1.msra.mxu0 %v162
  %708 = vmatprep.subr.mxu0 0.0
  %709 = vmatpush1.msra.mxu0 %v163
  %710 = vmatprep.subr.mxu0 0.0
  %711 = vmatpush1.msra.mxu0 %v164
  %712 = vmatprep.subr.mxu0 0.0
  %713 = vmatpush1.msra.mxu0 %v165
  %714 = vmatprep.subr.mxu0 0.0
  %715 = vmatpush1.msra.mxu0 %v166
  %716 = vmatprep.mubr.f32.mxu0 %v21
  %717 = vmatmul.mubr.f32.gmra.mrb[0].mxu0 %v20
  %v718 = vpop.f32.mrb[0].mxu0
  %v719 = vadd.f32 %v649, %v718
  %v720 = vpop.f32.mrb[0].mxu0
  %721 = vdwg.mxu0
  %722 = vmatprep.subr.mxu0 0.0
  %723 = vmatpush1.msra.mxu0 %v167
  %724 = vmatprep.subr.mxu0 0.0
  %725 = vmatpush1.msra.mxu0 %v168
  %726 = vmatprep.subr.mxu0 0.0
  %727 = vmatpush1.msra.mxu0 %v169
  %728 = vmatprep.subr.mxu0 0.0
  %729 = vmatpush1.msra.mxu0 %v170
  %730 = vmatprep.subr.mxu0 0.0
  %731 = vmatpush1.msra.mxu0 %v171
  %732 = vmatprep.subr.mxu0 0.0
  %733 = vmatpush1.msra.mxu0 %v172
  %734 = vmatprep.subr.mxu0 0.0
  %735 = vmatpush1.msra.mxu0 %v173
  %736 = vmatprep.subr.mxu0 0.0
  %737 = vmatpush1.msra.mxu0 %v174
  %738 = vmatprep.subr.mxu0 0.0
  %739 = vmatpush1.msra.mxu0 %v175
  %740 = vmatprep.subr.mxu0 0.0
  %741 = vmatpush1.msra.mxu0 %v176
  %742 = vmatprep.subr.mxu0 0.0
  %743 = vmatpush1.msra.mxu0 %v177
  %744 = vmatprep.subr.mxu0 0.0
  %745 = vmatpush1.msra.mxu0 %v178
  %746 = vmatprep.subr.mxu0 0.0
  %747 = vmatpush1.msra.mxu0 %v179
  %748 = vmatprep.subr.mxu0 0.0
  %749 = vmatpush1.msra.mxu0 %v180
  %750 = vmatprep.subr.mxu0 0.0
  %751 = vmatpush1.msra.mxu0 %v181
  %752 = vmatprep.subr.mxu0 0.0
  %753 = vmatpush1.msra.mxu0 %v182
  %754 = vmatprep.subr.mxu0 0.0
  %755 = vmatpush1.msra.mxu0 %v183
  %756 = vmatprep.subr.mxu0 0.0
  %757 = vmatpush1.msra.mxu0 %v184
  %758 = vmatprep.subr.mxu0 0.0
  %759 = vmatpush1.msra.mxu0 %v185
  %760 = vmatprep.subr.mxu0 0.0
  %761 = vmatpush1.msra.mxu0 %v186
  %762 = vmatprep.subr.mxu0 0.0
  %763 = vmatpush1.msra.mxu0 %v187
  %764 = vmatprep.subr.mxu0 0.0
  %765 = vmatpush1.msra.mxu0 %v188
  %766 = vmatprep.subr.mxu0 0.0
  %767 = vmatpush1.msra.mxu0 %v189
  %768 = vmatprep.subr.mxu0 0.0
  %769 = vmatpush1.msra.mxu0 %v190
  %770 = vmatprep.subr.mxu0 0.0
  %771 = vmatpush1.msra.mxu0 %v191
  %772 = vmatprep.subr.mxu0 0.0
  %773 = vmatpush1.msra.mxu0 %v192
  %774 = vmatprep.subr.mxu0 0.0
  %775 = vmatpush1.msra.mxu0 %v193
  %776 = vmatprep.subr.mxu0 0.0
  %777 = vmatpush1.msra.mxu0 %v194
  %778 = vmatprep.subr.mxu0 0.0
  %779 = vmatpush1.msra.mxu0 %v195
  %780 = vmatprep.subr.mxu0 0.0
  %781 = vmatpush1.msra.mxu0 %v196
  %782 = vmatprep.subr.mxu0 0.0
  %783 = vmatpush1.msra.mxu0 %v197
  %784 = vmatprep.subr.mxu0 0.0
  %785 = vmatpush1.msra.mxu0 %v198
  %786 = vmatprep.mubr.f32.mxu0 %v23
  %787 = vmatmul.mubr.f32.gmra.mrb[0].mxu0 %v22
  %v788 = vpop.f32.mrb[0].mxu0
  %v789 = vadd.f32 %v719, %v788
  %v790 = vpop.f32.mrb[0].mxu0
  %791 = vdwg.mxu0
  %792 = vmatprep.subr.mxu0 0.0
  %793 = vmatpush1.msra.mxu0 %v199
  %794 = vmatprep.subr.mxu0 0.0
  %795 = vmatpush1.msra.mxu0 %v200
  %796 = vmatprep.subr.mxu0 0.0
  %797 = vmatpush1.msra.mxu0 %v201
  %798 = vmatprep.subr.mxu0 0.0
  %799 = vmatpush1.msra.mxu0 %v202
  %800 = vmatprep.subr.mxu0 0.0
  %801 = vmatpush1.msra.mxu0 %v203
  %802 = vmatprep.subr.mxu0 0.0
  %803 = vmatpush1.msra.mxu0 %v204
  %804 = vmatprep.subr.mxu0 0.0
  %805 = vmatpush1.msra.mxu0 %v205
  %806 = vmatprep.subr.mxu0 0.0
  %807 = vmatpush1.msra.mxu0 %v206
  %808 = vmatprep.subr.mxu0 0.0
  %809 = vmatpush1.msra.mxu0 %v207
  %810 = vmatprep.subr.mxu0 0.0
  %811 = vmatpush1.msra.mxu0 %v208
  %812 = vmatprep.subr.mxu0 0.0
  %813 = vmatpush1.msra.mxu0 %v209
  %814 = vmatprep.subr.mxu0 0.0
  %815 = vmatpush1.msra.mxu0 %v210
  %816 = vmatprep.subr.mxu0 0.0
  %817 = vmatpush1.msra.mxu0 %v211
  %818 = vmatprep.subr.mxu0 0.0
  %819 = vmatpush1.msra.mxu0 %v212
  %820 = vmatprep.subr.mxu0 0.0
  %821 = vmatpush1.msra.mxu0 %v213
  %822 = vmatprep.subr.mxu0 0.0
  %823 = vmatpush1.msra.mxu0 %v214
  %824 = vmatprep.subr.mxu0 0.0
  %825 = vmatpush1.msra.mxu0 %v215
  %826 = vmatprep.subr.mxu0 0.0
  %827 = vmatpush1.msra.mxu0 %v216
  %828 = vmatprep.subr.mxu0 0.0
  %829 = vmatpush1.msra.mxu0 %v217
  %830 = vmatprep.subr.mxu0 0.0
  %831 = vmatpush1.msra.mxu0 %v218
  %832 = vmatprep.subr.mxu0 0.0
  %833 = vmatpush1.msra.mxu0 %v219
  %834 = vmatprep.subr.mxu0 0.0
  %835 = vmatpush1.msra.mxu0 %v220
  %836 = vmatprep.subr.mxu0 0.0
  %837 = vmatpush1.msra.mxu0 %v221
  %838 = vmatprep.subr.mxu0 0.0
  %839 = vmatpush1.msra.mxu0 %v222
  %840 = vmatprep.subr.mxu0 0.0
  %841 = vmatpush1.msra.mxu0 %v223
  %842 = vmatprep.subr.mxu0 0.0
  %843 = vmatpush1.msra.mxu0 %v224
  %844 = vmatprep.subr.mxu0 0.0
  %845 = vmatpush1.msra.mxu0 %v225
  %846 = vmatprep.subr.mxu0 0.0
  %847 = vmatpush1.msra.mxu0 %v226
  %848 = vmatprep.subr.mxu0 0.0
  %849 = vmatpush1.msra.mxu0 %v227
  %850 = vmatprep.subr.mxu0 0.0
  %851 = vmatpush1.msra.mxu0 %v228
  %852 = vmatprep.subr.mxu0 0.0
  %853 = vmatpush1.msra.mxu0 %v229
  %854 = vmatprep.subr.mxu0 0.0
  %855 = vmatpush1.msra.mxu0 %v230
  %856 = vmatprep.mubr.f32.mxu0 %v25
  %857 = vmatmul.mubr.f32.gmra.mrb[0].mxu0 %v24
  %v858 = vpop.f32.mrb[0].mxu0
  %v859 = vadd.f32 %v789, %v858
  %v860 = vpop.f32.mrb[0].mxu0
  %861 = vdwg.mxu0
  %862 = vmatprep.subr.mxu0 0.0
  %863 = vmatpush1.msra.mxu0 %v231
  %864 = vmatprep.subr.mxu0 0.0
  %865 = vmatpush1.msra.mxu0 %v232
  %866 = vmatprep.subr.mxu0 0.0
  %867 = vmatpush1.msra.mxu0 %v233
  %868 = vmatprep.subr.mxu0 0.0
  %869 = vmatpush1.msra.mxu0 %v234
  %870 = vmatprep.subr.mxu0 0.0
  %871 = vmatpush1.msra.mxu0 %v235
  %872 = vmatprep.subr.mxu0 0.0
  %873 = vmatpush1.msra.mxu0 %v236
  %874 = vmatprep.subr.mxu0 0.0
  %875 = vmatpush1.msra.mxu0 %v237
  %876 = vmatprep.subr.mxu0 0.0
  %877 = vmatpush1.msra.mxu0 %v238
  %878 = vmatprep.subr.mxu0 0.0
  %879 = vmatpush1.msra.mxu0 %v239
  %880 = vmatprep.subr.mxu0 0.0
  %881 = vmatpush1.msra.mxu0 %v240
  %882 = vmatprep.subr.mxu0 0.0
  %883 = vmatpush1.msra.mxu0 %v241
  %884 = vmatprep.subr.mxu0 0.0
  %885 = vmatpush1.msra.mxu0 %v242
  %886 = vmatprep.subr.mxu0 0.0
  %887 = vmatpush1.msra.mxu0 %v243
  %888 = vmatprep.subr.mxu0 0.0
  %889 = vmatpush1.msra.mxu0 %v244
  %890 = vmatprep.subr.mxu0 0.0
  %891 = vmatpush1.msra.mxu0 %v245
  %892 = vmatprep.subr.mxu0 0.0
  %893 = vmatpush1.msra.mxu0 %v246
  %894 = vmatprep.subr.mxu0 0.0
  %895 = vmatpush1.msra.mxu0 %v247
  %896 = vmatprep.subr.mxu0 0.0
  %897 = vmatpush1.msra.mxu0 %v248
  %898 = vmatprep.subr.mxu0 0.0
  %899 = vmatpush1.msra.mxu0 %v249
  %900 = vmatprep.subr.mxu0 0.0
  %901 = vmatpush1.msra.mxu0 %v250
  %902 = vmatprep.subr.mxu0 0.0
  %903 = vmatpush1.msra.mxu0 %v251
  %904 = vmatprep.subr.mxu0 0.0
  %905 = vmatpush1.msra.mxu0 %v252
  %906 = vmatprep.subr.mxu0 0.0
  %907 = vmatpush1.msra.mxu0 %v253
  %908 = vmatprep.subr.mxu0 0.0
  %909 = vmatpush1.msra.mxu0 %v254
  %910 = vmatprep.subr.mxu0 0.0
  %911 = vmatpush1.msra.mxu0 %v255
  %912 = vmatprep.subr.mxu0 0.0
  %913 = vmatpush1.msra.mxu0 %v256
  %914 = vmatprep.subr.mxu0 0.0
  %915 = vmatpush1.msra.mxu0 %v257
  %916 = vmatprep.subr.mxu0 0.0
  %917 = vmatpush1.msra.mxu0 %v258
  %918 = vmatprep.subr.mxu0 0.0
  %919 = vmatpush1.msra.mxu0 %v259
  %920 = vmatprep.subr.mxu0 0.0
  %921 = vmatpush1.msra.mxu0 %v260
  %922 = vmatprep.subr.mxu0 0.0
  %923 = vmatpush1.msra.mxu0 %v261
  %924 = vmatprep.subr.mxu0 0.0
  %925 = vmatpush1.msra.mxu0 %v262
  %926 = vmatprep.mubr.f32.mxu0 %v27
  %927 = vmatmul.mubr.f32.gmra.mrb[0].mxu0 %v26
  %v928 = vpop.f32.mrb[0].mxu0
  %v929 = vadd.f32 %v859, %v928
  %v930 = vpop.f32.mrb[0].mxu0
  %931 = vdwg.mxu0
  %932 = vmatprep.subr.mxu0 0.0
  %933 = vmatpush1.msra.mxu0 %v263
  %934 = vmatprep.subr.mxu0 0.0
  %935 = vmatpush1.msra.mxu0 %v264
  %936 = vmatprep.subr.mxu0 0.0
  %937 = vmatpush1.msra.mxu0 %v265
  %938 = vmatprep.subr.mxu0 0.0
  %939 = vmatpush1.msra.mxu0 %v266
  %940 = vmatprep.subr.mxu0 0.0
  %941 = vmatpush1.msra.mxu0 %v267
  %942 = vmatprep.subr.mxu0 0.0
  %943 = vmatpush1.msra.mxu0 %v268
  %944 = vmatprep.subr.mxu0 0.0
  %945 = vmatpush1.msra.mxu0 %v269
  %946 = vmatprep.subr.mxu0 0.0
  %947 = vmatpush1.msra.mxu0 %v270
  %948 = vmatprep.subr.mxu0 0.0
  %949 = vmatpush1.msra.mxu0 %v271
  %950 = vmatprep.subr.mxu0 0.0
  %951 = vmatpush1.msra.mxu0 %v272
  %952 = vmatprep.subr.mxu0 0.0
  %953 = vmatpush1.msra.mxu0 %v273
  %954 = vmatprep.subr.mxu0 0.0
  %955 = vmatpush1.msra.mxu0 %v274
  %956 = vmatprep.subr.mxu0 0.0
  %957 = vmatpush1.msra.mxu0 %v275
  %958 = vmatprep.subr.mxu0 0.0
  %959 = vmatpush1.msra.mxu0 %v276
  %960 = vmatprep.subr.mxu0 0.0
  %961 = vmatpush1.msra.mxu0 %v277
  %962 = vmatprep.subr.mxu0 0.0
  %963 = vmatpush1.msra.mxu0 %v278
  %964 = vmatprep.subr.mxu0 0.0
  %965 = vmatpush1.msra.mxu0 %v279
  %966 = vmatprep.subr.mxu0 0.0
  %967 = vmatpush1.msra.mxu0 %v280
  %968 = vmatprep.subr.mxu0 0.0
  %969 = vmatpush1.msra.mxu0 %v281
  %970 = vmatprep.subr.mxu0 0.0
  %971 = vmatpush1.msra.mxu0 %v282
  %972 = vmatprep.subr.mxu0 0.0
  %973 = vmatpush1.msra.mxu0 %v283
  %974 = vmatprep.subr.mxu0 0.0
  %975 = vmatpush1.msra.mxu0 %v284
  %976 = vmatprep.subr.mxu0 0.0
  %977 = vmatpush1.msra.mxu0 %v285
  %978 = vmatprep.subr.mxu0 0.0
  %979 = vmatpush1.msra.mxu0 %v286
  %980 = vmatprep.subr.mxu0 0.0
  %981 = vmatpush1.msra.mxu0 %v287
  %982 = vmatprep.subr.mxu0 0.0
  %983 = vmatpush1.msra.mxu0 %v288
  %984 = vmatprep.subr.mxu0 0.0
  %985 = vmatpush1.msra.mxu0 %v289
  %986 = vmatprep.subr.mxu0 0.0
  %987 = vmatpush1.msra.mxu0 %v290
  %988 = vmatprep.subr.mxu0 0.0
  %989 = vmatpush1.msra.mxu0 %v291
  %990 = vmatprep.subr.mxu0 0.0
  %991 = vmatpush1.msra.mxu0 %v292
  %992 = vmatprep.subr.mxu0 0.0
  %993 = vmatpush1.msra.mxu0 %v293
  %994 = vmatprep.subr.mxu0 0.0
  %995 = vmatpush1.msra.mxu0 %v294
  %996 = vmatprep.mubr.f32.mxu0 %v29
  %997 = vmatmul.mubr.f32.gmra.mrb[0].mxu0 %v28
  %v998 = vpop.f32.mrb[0].mxu0
  %v999 = vadd.f32 %v929, %v998
  %v1000 = vpop.f32.mrb[0].mxu0
  %1001 = vdwg.mxu0
  %1002 = vmatprep.subr.mxu0 0.0
  %1003 = vmatpush1.msra.mxu0 %v295
  %1004 = vmatprep.subr.mxu0 0.0
  %1005 = vmatpush1.msra.mxu0 %v296
  %1006 = vmatprep.subr.mxu0 0.0
  %1007 = vmatpush1.msra.mxu0 %v297
  %1008 = vmatprep.subr.mxu0 0.0
  %1009 = vmatpush1.msra.mxu0 %v298
  %1010 = vmatprep.subr.mxu0 0.0
  %1011 = vmatpush1.msra.mxu0 %v299
  %1012 = vmatprep.subr.mxu0 0.0
  %1013 = vmatpush1.msra.mxu0 %v300
  %1014 = vmatprep.subr.mxu0 0.0
  %1015 = vmatpush1.msra.mxu0 %v301
  %1016 = vmatprep.subr.mxu0 0.0
  %1017 = vmatpush1.msra.mxu0 %v302
  %1018 = vmatprep.subr.mxu0 0.0
  %1019 = vmatpush1.msra.mxu0 %v303
  %1020 = vmatprep.subr.mxu0 0.0
  %1021 = vmatpush1.msra.mxu0 %v304
  %1022 = vmatprep.subr.mxu0 0.0
  %1023 = vmatpush1.msra.mxu0 %v305
  %1024 = vmatprep.subr.mxu0 0.0
  %1025 = vmatpush1.msra.mxu0 %v306
  %1026 = vmatprep.subr.mxu0 0.0
  %1027 = vmatpush1.msra.mxu0 %v307
  %1028 = vmatprep.subr.mxu0 0.0
  %1029 = vmatpush1.msra.mxu0 %v308
  %1030 = vmatprep.subr.mxu0 0.0
  %1031 = vmatpush1.msra.mxu0 %v309
  %1032 = vmatprep.subr.mxu0 0.0
  %1033 = vmatpush1.msra.mxu0 %v310
  %1034 = vmatprep.subr.mxu0 0.0
  %1035 = vmatpush1.msra.mxu0 %v311
  %1036 = vmatprep.subr.mxu0 0.0
  %1037 = vmatpush1.msra.mxu0 %v312
  %1038 = vmatprep.subr.mxu0 0.0
  %1039 = vmatpush1.msra.mxu0 %v313
  %1040 = vmatprep.subr.mxu0 0.0
  %1041 = vmatpush1.msra.mxu0 %v314
  %1042 = vmatprep.subr.mxu0 0.0
  %1043 = vmatpush1.msra.mxu0 %v315
  %1044 = vmatprep.subr.mxu0 0.0
  %1045 = vmatpush1.msra.mxu0 %v316
  %1046 = vmatprep.subr.mxu0 0.0
  %1047 = vmatpush1.msra.mxu0 %v317
  %1048 = vmatprep.subr.mxu0 0.0
  %1049 = vmatpush1.msra.mxu0 %v318
  %1050 = vmatprep.subr.mxu0 0.0
  %1051 = vmatpush1.msra.mxu0 %v319
  %1052 = vmatprep.subr.mxu0 0.0
  %1053 = vmatpush1.msra.mxu0 %v320
  %1054 = vmatprep.subr.mxu0 0.0
  %1055 = vmatpush1.msra.mxu0 %v321
  %1056 = vmatprep.subr.mxu0 0.0
  %1057 = vmatpush1.msra.mxu0 %v322
  %1058 = vmatprep.subr.mxu0 0.0
  %1059 = vmatpush1.msra.mxu0 %v323
  %1060 = vmatprep.subr.mxu0 0.0
  %1061 = vmatpush1.msra.mxu0 %v324
  %1062 = vmatprep.subr.mxu0 0.0
  %1063 = vmatpush1.msra.mxu0 %v325
  %1064 = vmatprep.subr.mxu0 0.0
  %1065 = vmatpush1.msra.mxu0 %v326
  %1066 = vmatprep.mubr.f32.mxu0 %v31
  %1067 = vmatmul.mubr.f32.gmra.mrb[0].mxu0 %v30
  %v1068 = vpop.f32.mrb[0].mxu0
  %v1069 = vadd.f32 %v999, %v1068
  %v1070 = vpop.f32.mrb[0].mxu0
  %1071 = vdwg.mxu0
  %1072 = vmatprep.subr.mxu0 0.0
  %1073 = vmatpush1.msra.mxu0 %v327
  %1074 = vmatprep.subr.mxu0 0.0
  %1075 = vmatpush1.msra.mxu0 %v328
  %1076 = vmatprep.subr.mxu0 0.0
  %1077 = vmatpush1.msra.mxu0 %v329
  %1078 = vmatprep.subr.mxu0 0.0
  %1079 = vmatpush1.msra.mxu0 %v330
  %1080 = vmatprep.subr.mxu0 0.0
  %1081 = vmatpush1.msra.mxu0 %v331
  %1082 = vmatprep.subr.mxu0 0.0
  %1083 = vmatpush1.msra.mxu0 %v332
  %1084 = vmatprep.subr.mxu0 0.0
  %1085 = vmatpush1.msra.mxu0 %v333
  %1086 = vmatprep.subr.mxu0 0.0
  %1087 = vmatpush1.msra.mxu0 %v334
  %1088 = vmatprep.subr.mxu0 0.0
  %1089 = vmatpush1.msra.mxu0 %v335
  %1090 = vmatprep.subr.mxu0 0.0
  %1091 = vmatpush1.msra.mxu0 %v336
  %1092 = vmatprep.subr.mxu0 0.0
  %1093 = vmatpush1.msra.mxu0 %v337
  %1094 = vmatprep.subr.mxu0 0.0
  %1095 = vmatpush1.msra.mxu0 %v338
  %1096 = vmatprep.subr.mxu0 0.0
  %1097 = vmatpush1.msra.mxu0 %v339
  %1098 = vmatprep.subr.mxu0 0.0
  %1099 = vmatpush1.msra.mxu0 %v340
  %1100 = vmatprep.subr.mxu0 0.0
  %1101 = vmatpush1.msra.mxu0 %v341
  %1102 = vmatprep.subr.mxu0 0.0
  %1103 = vmatpush1.msra.mxu0 %v342
  %1104 = vmatprep.subr.mxu0 0.0
  %1105 = vmatpush1.msra.mxu0 %v343
  %1106 = vmatprep.subr.mxu0 0.0
  %1107 = vmatpush1.msra.mxu0 %v344
  %1108 = vmatprep.subr.mxu0 0.0
  %1109 = vmatpush1.msra.mxu0 %v345
  %1110 = vmatprep.subr.mxu0 0.0
  %1111 = vmatpush1.msra.mxu0 %v346
  %1112 = vmatprep.subr.mxu0 0.0
  %1113 = vmatpush1.msra.mxu0 %v347
  %1114 = vmatprep.subr.mxu0 0.0
  %1115 = vmatpush1.msra.mxu0 %v348
  %1116 = vmatprep.subr.mxu0 0.0
  %1117 = vmatpush1.msra.mxu0 %v349
  %1118 = vmatprep.subr.mxu0 0.0
  %1119 = vmatpush1.msra.mxu0 %v350
  %1120 = vmatprep.subr.mxu0 0.0
  %1121 = vmatpush1.msra.mxu0 %v351
  %1122 = vmatprep.subr.mxu0 0.0
  %1123 = vmatpush1.msra.mxu0 %v352
  %1124 = vmatprep.subr.mxu0 0.0
  %1125 = vmatpush1.msra.mxu0 %v353
  %1126 = vmatprep.subr.mxu0 0.0
  %1127 = vmatpush1.msra.mxu0 %v354
  %1128 = vmatprep.subr.mxu0 0.0
  %1129 = vmatpush1.msra.mxu0 %v355
  %1130 = vmatprep.subr.mxu0 0.0
  %1131 = vmatpush1.msra.mxu0 %v356
  %1132 = vmatprep.subr.mxu0 0.0
  %1133 = vmatpush1.msra.mxu0 %v357
  %1134 = vmatprep.subr.mxu0 0.0
  %1135 = vmatpush1.msra.mxu0 %v358
  %1136 = vmatprep.mubr.f32.mxu0 %v33
  %1137 = vmatmul.mubr.f32.gmra.mrb[0].mxu0 %v32
  %v1138 = vpop.f32.mrb[0].mxu0
  %v1139 = vadd.f32 %v1069, %v1138
  %v1140 = vpop.f32.mrb[0].mxu0
  %1141 = vdwg.mxu0
  %1142 = vmatprep.subr.mxu0 0.0
  %1143 = vmatpush1.msra.mxu0 %v359
  %1144 = vmatprep.subr.mxu0 0.0
  %1145 = vmatpush1.msra.mxu0 %v360
  %1146 = vmatprep.subr.mxu0 0.0
  %1147 = vmatpush1.msra.mxu0 %v361
  %1148 = vmatprep.subr.mxu0 0.0
  %1149 = vmatpush1.msra.mxu0 %v362
  %1150 = vmatprep.subr.mxu0 0.0
  %1151 = vmatpush1.msra.mxu0 %v363
  %1152 = vmatprep.subr.mxu0 0.0
  %1153 = vmatpush1.msra.mxu0 %v364
  %1154 = vmatprep.subr.mxu0 0.0
  %1155 = vmatpush1.msra.mxu0 %v365
  %1156 = vmatprep.subr.mxu0 0.0
  %1157 = vmatpush1.msra.mxu0 %v366
  %1158 = vmatprep.subr.mxu0 0.0
  %1159 = vmatpush1.msra.mxu0 %v367
  %1160 = vmatprep.subr.mxu0 0.0
  %1161 = vmatpush1.msra.mxu0 %v368
  %1162 = vmatprep.subr.mxu0 0.0
  %1163 = vmatpush1.msra.mxu0 %v369
  %1164 = vmatprep.subr.mxu0 0.0
  %1165 = vmatpush1.msra.mxu0 %v370
  %1166 = vmatprep.subr.mxu0 0.0
  %1167 = vmatpush1.msra.mxu0 %v371
  %1168 = vmatprep.subr.mxu0 0.0
  %1169 = vmatpush1.msra.mxu0 %v372
  %1170 = vmatprep.subr.mxu0 0.0
  %1171 = vmatpush1.msra.mxu0 %v373
  %1172 = vmatprep.subr.mxu0 0.0
  %1173 = vmatpush1.msra.mxu0 %v374
  %1174 = vmatprep.subr.mxu0 0.0
  %1175 = vmatpush1.msra.mxu0 %v375
  %1176 = vmatprep.subr.mxu0 0.0
  %1177 = vmatpush1.msra.mxu0 %v376
  %1178 = vmatprep.subr.mxu0 0.0
  %1179 = vmatpush1.msra.mxu0 %v377
  %1180 = vmatprep.subr.mxu0 0.0
  %1181 = vmatpush1.msra.mxu0 %v378
  %1182 = vmatprep.subr.mxu0 0.0
  %1183 = vmatpush1.msra.mxu0 %v379
  %1184 = vmatprep.subr.mxu0 0.0
  %1185 = vmatpush1.msra.mxu0 %v380
  %1186 = vmatprep.subr.mxu0 0.0
  %1187 = vmatpush1.msra.mxu0 %v381
  %1188 = vmatprep.subr.mxu0 0.0
  %1189 = vmatpush1.msra.mxu0 %v382
  %1190 = vmatprep.subr.mxu0 0.0
  %1191 = vmatpush1.msra.mxu0 %v383
  %1192 = vmatprep.subr.mxu0 0.0
  %1193 = vmatpush1.msra.mxu0 %v384
  %1194 = vmatprep.subr.mxu0 0.0
  %1195 = vmatpush1.msra.mxu0 %v385
  %1196 = vmatprep.subr.mxu0 0.0
  %1197 = vmatpush1.msra.mxu0 %v386
  %1198 = vmatprep.subr.mxu0 0.0
  %1199 = vmatpush1.msra.mxu0 %v387
  %1200 = vmatprep.subr.mxu0 0.0
  %1201 = vmatpush1.msra.mxu0 %v388
  %1202 = vmatprep.subr.mxu0 0.0
  %1203 = vmatpush1.msra.mxu0 %v389
  %1204 = vmatprep.subr.mxu0 0.0
  %1205 = vmatpush1.msra.mxu0 %v390
  %1206 = vmatprep.mubr.f32.mxu0 %v35
  %1207 = vmatmul.mubr.f32.gmra.mrb[0].mxu0 %v34
  %v1208 = vpop.f32.mrb[0].mxu0
  %v1209 = vadd.f32 %v1139, %v1208
  %v1210 = vpop.f32.mrb[0].mxu0
  %1211 = vdwg.mxu0
  %1212 = vmatprep.subr.mxu0 0.0
  %1213 = vmatpush1.msra.mxu0 %v391
  %1214 = vmatprep.subr.mxu0 0.0
  %1215 = vmatpush1.msra.mxu0 %v392
  %1216 = vmatprep.subr.mxu0 0.0
  %1217 = vmatpush1.msra.mxu0 %v393
  %1218 = vmatprep.subr.mxu0 0.0
  %1219 = vmatpush1.msra.mxu0 %v394
  %1220 = vmatprep.subr.mxu0 0.0
  %1221 = vmatpush1.msra.mxu0 %v395
  %1222 = vmatprep.subr.mxu0 0.0
  %1223 = vmatpush1.msra.mxu0 %v396
  %1224 = vmatprep.subr.mxu0 0.0
  %1225 = vmatpush1.msra.mxu0 %v397
  %1226 = vmatprep.subr.mxu0 0.0
  %1227 = vmatpush1.msra.mxu0 %v398
  %1228 = vmatprep.subr.mxu0 0.0
  %1229 = vmatpush1.msra.mxu0 %v399
  %1230 = vmatprep.subr.mxu0 0.0
  %1231 = vmatpush1.msra.mxu0 %v400
  %1232 = vmatprep.subr.mxu0 0.0
  %1233 = vmatpush1.msra.mxu0 %v401
  %1234 = vmatprep.subr.mxu0 0.0
  %1235 = vmatpush1.msra.mxu0 %v402
  %1236 = vmatprep.subr.mxu0 0.0
  %1237 = vmatpush1.msra.mxu0 %v403
  %1238 = vmatprep.subr.mxu0 0.0
  %1239 = vmatpush1.msra.mxu0 %v404
  %1240 = vmatprep.subr.mxu0 0.0
  %1241 = vmatpush1.msra.mxu0 %v405
  %1242 = vmatprep.subr.mxu0 0.0
  %1243 = vmatpush1.msra.mxu0 %v406
  %1244 = vmatprep.subr.mxu0 0.0
  %1245 = vmatpush1.msra.mxu0 %v407
  %1246 = vmatprep.subr.mxu0 0.0
  %1247 = vmatpush1.msra.mxu0 %v408
  %1248 = vmatprep.subr.mxu0 0.0
  %1249 = vmatpush1.msra.mxu0 %v409
  %1250 = vmatprep.subr.mxu0 0.0
  %1251 = vmatpush1.msra.mxu0 %v410
  %1252 = vmatprep.subr.mxu0 0.0
  %1253 = vmatpush1.msra.mxu0 %v411
  %1254 = vmatprep.subr.mxu0 0.0
  %1255 = vmatpush1.msra.mxu0 %v412
  %1256 = vmatprep.subr.mxu0 0.0
  %1257 = vmatpush1.msra.mxu0 %v413
  %1258 = vmatprep.subr.mxu0 0.0
  %1259 = vmatpush1.msra.mxu0 %v414
  %1260 = vmatprep.subr.mxu0 0.0
  %1261 = vmatpush1.msra.mxu0 %v415
  %1262 = vmatprep.subr.mxu0 0.0
  %1263 = vmatpush1.msra.mxu0 %v416
  %1264 = vmatprep.subr.mxu0 0.0
  %1265 = vmatpush1.msra.mxu0 %v417
  %1266 = vmatprep.subr.mxu0 0.0
  %1267 = vmatpush1.msra.mxu0 %v418
  %1268 = vmatprep.subr.mxu0 0.0
  %1269 = vmatpush1.msra.mxu0 %v419
  %1270 = vmatprep.subr.mxu0 0.0
  %1271 = vmatpush1.msra.mxu0 %v420
  %1272 = vmatprep.subr.mxu0 0.0
  %1273 = vmatpush1.msra.mxu0 %v421
  %1274 = vmatprep.subr.mxu0 0.0
  %1275 = vmatpush1.msra.mxu0 %v422
  %1276 = vmatprep.mubr.f32.mxu0 %v37
  %1277 = vmatmul.mubr.f32.gmra.mrb[0].mxu0 %v36
  %v1278 = vpop.f32.mrb[0].mxu0
  %v1279 = vadd.f32 %v1209, %v1278
  %v1280 = vpop.f32.mrb[0].mxu0
  %1281 = vdwg.mxu0
  %1282 = vmatprep.subr.mxu0 0.0
  %1283 = vmatpush1.msra.mxu0 %v423
  %1284 = vmatprep.subr.mxu0 0.0
  %1285 = vmatpush1.msra.mxu0 %v424
  %1286 = vmatprep.subr.mxu0 0.0
  %1287 = vmatpush1.msra.mxu0 %v425
  %1288 = vmatprep.subr.mxu0 0.0
  %1289 = vmatpush1.msra.mxu0 %v426
  %1290 = vmatprep.subr.mxu0 0.0
  %1291 = vmatpush1.msra.mxu0 %v427
  %1292 = vmatprep.subr.mxu0 0.0
  %1293 = vmatpush1.msra.mxu0 %v428
  %1294 = vmatprep.subr.mxu0 0.0
  %1295 = vmatpush1.msra.mxu0 %v429
  %1296 = vmatprep.subr.mxu0 0.0
  %1297 = vmatpush1.msra.mxu0 %v430
  %1298 = vmatprep.subr.mxu0 0.0
  %1299 = vmatpush1.msra.mxu0 0.0
  %1300 = vmatprep.subr.mxu0 0.0
  %1301 = vmatpush1.msra.mxu0 0.0
  %1302 = vmatprep.subr.mxu0 0.0
  %1303 = vmatpush1.msra.mxu0 0.0
  %1304 = vmatprep.subr.mxu0 0.0
  %1305 = vmatpush1.msra.mxu0 0.0
  %1306 = vmatprep.subr.mxu0 0.0
  %1307 = vmatpush1.msra.mxu0 0.0
  %1308 = vmatprep.subr.mxu0 0.0
  %1309 = vmatpush1.msra.mxu0 0.0
  %1310 = vmatprep.subr.mxu0 0.0
  %1311 = vmatpush1.msra.mxu0 0.0
  %1312 = vmatprep.subr.mxu0 0.0
  %1313 = vmatpush1.msra.mxu0 0.0
  %1314 = vmatprep.subr.mxu0 0.0
  %1315 = vmatpush1.msra.mxu0 0.0
  %1316 = vmatprep.subr.mxu0 0.0
  %1317 = vmatpush1.msra.mxu0 0.0
  %1318 = vmatprep.subr.mxu0 0.0
  %1319 = vmatpush1.msra.mxu0 0.0
  %1320 = vmatprep.subr.mxu0 0.0
  %1321 = vmatpush1.msra.mxu0 0.0
  %1322 = vmatprep.subr.mxu0 0.0
  %1323 = vmatpush1.msra.mxu0 0.0
  %1324 = vmatprep.subr.mxu0 0.0
  %1325 = vmatpush1.msra.mxu0 0.0
  %1326 = vmatprep.subr.mxu0 0.0
  %1327 = vmatpush1.msra.mxu0 0.0
  %1328 = vmatprep.subr.mxu0 0.0
  %1329 = vmatpush1.msra.mxu0 0.0
  %1330 = vmatprep.subr.mxu0 0.0
  %1331 = vmatpush1.msra.mxu0 0.0
  %1332 = vmatprep.subr.mxu0 0.0
  %1333 = vmatpush1.msra.mxu0 0.0
  %1334 = vmatprep.subr.mxu0 0.0
  %1335 = vmatpush1.msra.mxu0 0.0
  %1336 = vmatprep.subr.mxu0 0.0
  %1337 = vmatpush1.msra.mxu0 0.0
  %1338 = vmatprep.subr.mxu0 0.0
  %1339 = vmatpush1.msra.mxu0 0.0
  %1340 = vmatprep.subr.mxu0 0.0
  %1341 = vmatpush1.msra.mxu0 0.0
  %1342 = vmatprep.subr.mxu0 0.0
  %1343 = vmatpush1.msra.mxu0 0.0
  %1344 = vmatprep.subr.mxu0 0.0
  %1345 = vmatpush1.msra.mxu0 0.0
  %1346 = vmatprep.mubr.f32.mxu0 0.0
  %1347 = vmatmul.mubr.f32.gmra.mrb[0].mxu0 %v440
  %v1348 = vpop.f32.mrb[0].mxu0
  %v1349 = vadd.f32 %v1279, %v1348
  %v1350 = vpop.f32.mrb[0].mxu0
  %1351 = vdwg.mxu0
  %v1352 = vmax.f32 %v1349, 0.0
  %1353 = vst [vmem:[%s3] sm:$0xff] %v1352
  // Predicated region
  $region14: #{dqn_forward.9} parent=0 // pred_check
    _
  $region15: #{dqn_forward.9} parent=0 // pred_check_branch
    %1355 = sbr.rel (0) target = $region17
  $region16: #{dqn_forward.9} parent=0 // pred_region
    _
  $region17: #{dqn_forward.9} parent=0 // pred_fallthru
    _
  // Predicated region
  $region18: #{dqn_forward.9} parent=0 // pred_check
    _
  $region19: #{dqn_forward.9} parent=0 // pred_check_branch
    %1357 = sbr.rel (0) target = $region21
  $region20: #{dqn_forward.9} parent=0 // pred_region
    _
  $region21: #{dqn_forward.9} parent=0 // pred_fallthru
    _

// kernel: dqn_forward.11
$region0: #{dqn_forward.11}
  #allocation0 [shape = 'u32[]', space=smem, size = 0x4, offset = 0x4, fixed_abs, tag = 'smem constant byte address 0x4 - core index']
  #allocation1 [shape = 'u32[144,128]{1,0:T(1,128)}', space=vmem, size = 0x12000, scoped, tag = 'internal scratch']
  %s0 = inlined_call_operand.vmem [shape: f32[2,1,128], index: 0, kind: input, shape index: {}]
  %s1 = inlined_call_operand.vmem [shape: f32[2,6,128], index: 1, kind: input, shape index: {}]
  %s2 = inlined_call_operand.vmem [shape: f32[2,6,128], index: 2, kind: output, shape index: {}]
  %s3 = sld [smem:[#allocation0]]
  $region18: #{dqn_forward.11} parent=0
    _
  %s5 = ssub.s32 1, %s3
  %s6 = scalar_select 0, %s5, %s3
  // Predicated region
  $region2: #{dqn_forward.11} parent=0 // pred_check
    _
  $region3: #{dqn_forward.11} parent=0 // pred_check_branch
    %8 = sbr.rel (0) target = $region5
  $region4: #{dqn_forward.11} parent=0 // pred_region
    _
  $region5: #{dqn_forward.11} parent=0 // pred_fallthru
    _
  // Predicated region
  $region6: #{dqn_forward.11} parent=0 // pred_check
    _
  $region7: #{dqn_forward.11} parent=0 // pred_check_branch
    %10 = sbr.rel (0) target = $region9
  $region8: #{dqn_forward.11} parent=0 // pred_region
    _
  $region9: #{dqn_forward.11} parent=0 // pred_fallthru
    _
  %v11 = vld [vmem:[%s0] sm:$0x1]
  %v12 = vld [vmem:[%s0 + $0x1] sm:$0x1]
  %v13 = vld [vmem:[%s1] sm:$0x3f]
  %v14 = vld [vmem:[%s1 + $0x8] sm:$0x3f]
  %v17 = vlaneseq
  %v18 = vshrl.u32 %v17, 7
  %v19 = vsub.s32 0, %v18
  %v20 = vrot.slane %v11, %v19
  %v21 = vlaneseq
  %v22 = vshrl.u32 %v21, 7
  %v23 = vsub.s32 0, %v22
  %v24 = vrot.slane %v12, %v23
  %v27 = vadd.f32 %v20, %v13
  %v28 = vadd.f32 %v24, %v14
  %vm29 = vcmask 1045504
  %v30 = vsel %vm29, %v13, 0.0
  %v31 = vrot.slane %v30, 4
  %v32 = vadd.f32 %v30, %v31
  %v33 = vrot.slane %v32, 2
  %v34 = vadd.f32 %v32, %v33
  %v35 = vrot.slane %v34, 1
  %v36 = vadd.f32 %v34, %v35
  %v37 = vsel %vm29, %v14, 0.0
  %v38 = vrot.slane %v37, 4
  %v39 = vadd.f32 %v37, %v38
  %v40 = vrot.slane %v39, 2
  %v41 = vadd.f32 %v39, %v40
  %v42 = vrot.slane %v41, 1
  %v43 = vadd.f32 %v41, %v42
  %v44 = vrcp.pop 6.0
  %v45 = vmul.f32 %v36, %v44
  %v46 = vmul.f32 %v43, %v44
  %v47 = vsub.f32 %v27, %v45
  %v48 = vsub.f32 %v28, %v46
  %v49 = vsel %vm29, %v47, -inf
  %50 = vmax.xlane.f32.xlu0 %v49
  %v51 = vpop.xlane.xlu0 %50
  %v52 = vsel %vm29, %v48, -inf
  %53 = vmax.xlane.f32.xlu0 %v52
  %v54 = vpop.xlane.xlu0 %53
  %v55 = vsub.f32 %v47, %v51
  %v56 = vsub.f32 %v48, %v54
  %v57 = vmul.f32 %v55, 1.442695
  %v58 = vpow.pop %v57
  %v59 = vmul.f32 %v56, 1.442695
  %v60 = vpow.pop %v59
  %v61 = vsel %vm29, %v58, 0.0
  %62 = vadd.xlane.f32.xlu0 %v61
  %v63 = vpop.xlane.xlu0 %62
  %v64 = vsel %vm29, %v60, 0.0
  %65 = vadd.xlane.f32.xlu0 %v64
  %v66 = vpop.xlane.xlu0 %65
  %v67 = vrcp.pop %v63
  %v68 = vrcp.pop %v66
  %v69 = vmul.f32 %v58, %v67
  %v70 = vmul.f32 %v60, %v68
  %71 = vst [vmem:[%s2] sm:$0x3f] %v69
  %72 = vst [vmem:[%s2 + $0x8] sm:$0x3f] %v70
  // Predicated region
  $region10: #{dqn_forward.11} parent=0 // pred_check
    _
  $region11: #{dqn_forward.11} parent=0 // pred_check_branch
    %74 = sbr.rel (0) target = $region13
  $region12: #{dqn_forward.11} parent=0 // pred_region
    _
  $region13: #{dqn_forward.11} parent=0 // pred_fallthru
    _
  // Predicated region
  $region14: #{dqn_forward.11} parent=0 // pred_check
    _
  $region15: #{dqn_forward.11} parent=0 // pred_check_branch
    %76 = sbr.rel (0) target = $region17
  $region16: #{dqn_forward.11} parent=0 // pred_region
    _
  $region17: #{dqn_forward.11} parent=0 // pred_fallthru
    _

</llo_original>
